<compile_context>
chip_gen: v7x
topology: tpu7x:2x2x1
jax: 0.10.0
libtpu: 0.0.40
codegen_flags: <defaults>
</compile_context>

<pallas_src>
import math
from functools import partial

import jax
import jax.numpy as jnp
from jax import lax
from jax.experimental import pallas as pl
from jax.experimental.pallas import tpu as pltpu

EPS = 1e-5  # torch.nn.LayerNorm default eps


def _layernorm(x, gamma, beta):
    mu = jnp.mean(x, axis=-1, keepdims=True)
    var = jnp.mean((x - mu) ** 2, axis=-1, keepdims=True)
    return (x - mu) * lax.rsqrt(var + EPS) * gamma + beta


# ---------------------------------------------------------------------------
# The fused kernel: grid = (batch, layer)
# ---------------------------------------------------------------------------
def fused_kernel(
    # batch-indexed inputs
    audio_ref, video_ref,
    # modality projections (audio / video): Linear, LayerNorm, positional emb
    wa_ref, ba_ref, ga_ref, bta_ref, posa_ref,
    wv_ref, bv_ref, gv_ref, btv_ref, posv_ref,
    # per-layer encoder weights, stacked along a leading num_layers axis
    wqkv_ref, bqkv_ref, wo_ref, bo_ref, g1_ref, be1_ref,
    wf1_ref, bf1_ref, wf2_ref, bf2_ref, g2_ref, be2_ref,
    # prediction heads
    hv1_ref, hbv1_ref, hv2_ref, hbv2_ref,
    ha1_ref, hba1_ref, ha2_ref, hba2_ref,
    # outputs
    val_ref, aro_ref,
    # VMEM scratch: activation resident across the layer axis
    x_sc,
    *, num_heads):
    layer = pl.program_id(1)
    num_layers = pl.num_programs(1)
    D = wqkv_ref.shape[1]
    head_dim = D // num_heads
    mm_dtype = wqkv_ref.dtype           # matmul operand dtype (bf16 by default)

    # ---- layer 0: modality projections -> concat -> resident activation ----
    @pl.when(layer == 0)
    def _project():
        a = audio_ref[0]                                            # (S, A_in)
        ha = jnp.dot(a.astype(mm_dtype), wa_ref[...],
                     preferred_element_type=jnp.float32) + ba_ref[...]
        ha = _layernorm(jnp.maximum(ha, 0.0), ga_ref[...], bta_ref[...])
        ha = ha + posa_ref[...]

        vd = video_ref[0]                                           # (S, V_in)
        hv = jnp.dot(vd.astype(mm_dtype), wv_ref[...],
                     preferred_element_type=jnp.float32) + bv_ref[...]
        hv = _layernorm(jnp.maximum(hv, 0.0), gv_ref[...], btv_ref[...])
        hv = hv + posv_ref[...]

        x_sc[...] = jnp.concatenate([ha, hv], axis=-1)              # (S, D) f32

    # ---- encoder layer `layer` (activation stays resident in VMEM) ----
    x = x_sc[...]                                                   # (S, D) f32
    qkv = jnp.dot(x.astype(mm_dtype), wqkv_ref[0],                  # fused Q|K|V
                  preferred_element_type=jnp.float32) + bqkv_ref[0]
    inv_scale = 1.0 / math.sqrt(head_dim)

    head_outs = []
    for h in range(num_heads):          # static unroll; head_dim-deep matmuls
        lo = h * head_dim
        q_h = qkv[:, lo:lo + head_dim]
        k_h = qkv[:, D + lo:D + lo + head_dim]
        v_h = qkv[:, 2 * D + lo:2 * D + lo + head_dim]
        # scores = q @ k^T : contract last dims directly (no explicit transpose)
        s = lax.dot_general(q_h, k_h, (((1,), (1,)), ((), ())),
                            preferred_element_type=jnp.float32) * inv_scale
        s = s - jnp.max(s, axis=-1, keepdims=True)
        p = jnp.exp(s)
        p = p * pl.reciprocal(jnp.sum(p, axis=-1, keepdims=True), approx=True)
        head_outs.append(jnp.dot(p, v_h, preferred_element_type=jnp.float32))

    # concat heads -> ONE full-depth (S,D)@(D,D) output projection
    attn = jnp.concatenate(head_outs, axis=-1)
    attn = jnp.dot(attn.astype(mm_dtype), wo_ref[0],
                   preferred_element_type=jnp.float32) + bo_ref[0]

    x1 = _layernorm(x + attn, g1_ref[0], be1_ref[0])
    f = jnp.dot(x1.astype(mm_dtype), wf1_ref[0],
                preferred_element_type=jnp.float32) + bf1_ref[0]
    f = jnp.maximum(f, 0.0)
    f = jnp.dot(f.astype(mm_dtype), wf2_ref[0],
                preferred_element_type=jnp.float32) + bf2_ref[0]
    x2 = _layernorm(x1 + f, g2_ref[0], be2_ref[0])
    x_sc[...] = x2

    # ---- last layer: mean-pool over sequence + valence / arousal heads ----
    @pl.when(layer == num_layers - 1)
    def _heads():
        xm = jnp.mean(x2, axis=0, keepdims=True).astype(mm_dtype)   # (1, D)

        def mlp_head(w1, b1, w2, b2):
            hh = jnp.maximum(
                jnp.dot(xm, w1, preferred_element_type=jnp.float32) + b1, 0.0)
            z = jnp.sum(hh * w2, axis=-1, keepdims=True) + b2       # (1, 1)
            return pl.reciprocal(1.0 + jnp.exp(-z), approx=True)    # sigmoid

        val_ref[0] = mlp_head(hv1_ref[...], hbv1_ref[...], hv2_ref[...], hbv2_ref[...])
        aro_ref[0] = mlp_head(ha1_ref[...], hba1_ref[...], ha2_ref[...], hba2_ref[...])


# ---------------------------------------------------------------------------
# Host-side packing + pallas_call wrapper
# ---------------------------------------------------------------------------
_CONST_NAMES = ('wa', 'ba', 'ga', 'bta', 'posa', 'wv', 'bv', 'gv', 'btv', 'posv')
_LAYER_NAMES = ('wqkv', 'bqkv', 'wo', 'bo', 'g1', 'be1',
                'wf1', 'bf1', 'wf2', 'bf2', 'g2', 'be2')
_HEAD_NAMES = ('hv1', 'hbv1', 'hv2', 'hbv2', 'ha1', 'hba1', 'ha2', 'hba2')


def pack_params(params, matmul_dtype):
    """Fuse Q|K|V, stack per-layer weights along a leading layer axis, and
    cast the big matmul weights to `matmul_dtype` (biases / LN / pos stay f32)."""
    mm = lambda a: a.astype(matmul_dtype)
    stack = lambda fn: jnp.stack([fn(p) for p in params['layers']], axis=0)
    pa, pv, ph = params['audio'], params['video'], params['heads']
    return {
        'wa': mm(pa['w']), 'ba': pa['b'], 'ga': pa['g'], 'bta': pa['bt'], 'posa': pa['pos'],
        'wv': mm(pv['w']), 'bv': pv['b'], 'gv': pv['g'], 'btv': pv['bt'], 'posv': pv['pos'],
        'wqkv': mm(stack(lambda p: jnp.concatenate([p['wq'], p['wk'], p['wv']], axis=1))),
        'bqkv': stack(lambda p: jnp.concatenate([p['bq'], p['bk'], p['bv']], axis=1)),
        'wo': mm(stack(lambda p: p['wo'])), 'bo': stack(lambda p: p['bo']),
        'g1': stack(lambda p: p['g1']), 'be1': stack(lambda p: p['be1']),
        'wf1': mm(stack(lambda p: p['wf1'])), 'bf1': stack(lambda p: p['bf1']),
        'wf2': mm(stack(lambda p: p['wf2'])), 'bf2': stack(lambda p: p['bf2']),
        'g2': stack(lambda p: p['g2']), 'be2': stack(lambda p: p['be2']),
        'hv1': mm(ph['wv1']), 'hbv1': ph['bv1'], 'hv2': ph['wv2'], 'hbv2': ph['bv2'],
        'ha1': mm(ph['wa1']), 'hba1': ph['ba1'], 'ha2': ph['wa2'], 'hba2': ph['ba2'],
    }


def multimodal_transformer_forward(audio, video, params, num_heads,
                                   matmul_dtype=jnp.bfloat16):
    pk = pack_params(params, matmul_dtype)
    B, S, _ = audio.shape
    L, D, _ = pk['wqkv'].shape
    assert D % num_heads == 0

    def const_spec(a):
        nd = a.ndim
        return pl.BlockSpec(a.shape, lambda b, l, nd=nd: (0,) * nd)

    def layer_spec(a):
        nz = a.ndim - 1
        return pl.BlockSpec((1,) + a.shape[1:], lambda b, l, nz=nz: (l,) + (0,) * nz)

    def batch_spec(a):
        return pl.BlockSpec((1,) + a.shape[1:], lambda b, l: (b, 0, 0))

    inputs = ([audio, video] + [pk[n] for n in _CONST_NAMES]
              + [pk[n] for n in _LAYER_NAMES] + [pk[n] for n in _HEAD_NAMES])
    in_specs = ([batch_spec(audio), batch_spec(video)]
                + [const_spec(pk[n]) for n in _CONST_NAMES]
                + [layer_spec(pk[n]) for n in _LAYER_NAMES]
                + [const_spec(pk[n]) for n in _HEAD_NAMES])

    out_spec = pl.BlockSpec((1, 1, 1), lambda b, l: (b, 0, 0))
    val, aro = pl.pallas_call(
        partial(fused_kernel, num_heads=num_heads),
        out_shape=(jax.ShapeDtypeStruct((B, 1, 1), jnp.float32),
                   jax.ShapeDtypeStruct((B, 1, 1), jnp.float32)),
        grid=(B, L),
        in_specs=in_specs,
        out_specs=(out_spec, out_spec),
        scratch_shapes=[pltpu.VMEM((S, D), jnp.float32)],   # resident activation
        compiler_params=pltpu.CompilerParams(
            dimension_semantics=("parallel", "arbitrary")),
    )(*inputs)
    return val.reshape(B, 1), aro.reshape(B, 1)


# ---------------------------------------------------------------------------
# Deterministic synthetic parameter init (shapes per the module's __init__)
# ---------------------------------------------------------------------------
def init_params(key, audio_dim, video_dim, hidden_dim, num_heads, num_layers, seq_len):
    D = hidden_dim * 2
    H2 = hidden_dim // 2
    keys = iter(jax.random.split(key, 256))

    def lin(in_d, out_d, scale=0.05):
        w = jax.random.normal(next(keys), (in_d, out_d), jnp.float32) * scale
        b = jax.random.normal(next(keys), (1, out_d), jnp.float32) * scale
        return w, b

    def modality(in_dim):
        w, b = lin(in_dim, hidden_dim)
        return {'w': w, 'b': b,
                'g': jnp.ones((1, hidden_dim), jnp.float32),
                'bt': jnp.zeros((1, hidden_dim), jnp.float32),
                'pos': jax.random.normal(next(keys), (seq_len, hidden_dim), jnp.float32)}

    params = {'audio': modality(audio_dim), 'video': modality(video_dim), 'layers': []}
    for _ in range(num_layers):
        wq, bq = lin(D, D); wk, bk = lin(D, D); wv, bv = lin(D, D); wo, bo = lin(D, D)
        wf1, bf1 = lin(D, 4 * D); wf2, bf2 = lin(4 * D, D)
        params['layers'].append({
            'wq': wq, 'bq': bq, 'wk': wk, 'bk': bk, 'wv': wv, 'bv': bv,
            'wo': wo, 'bo': bo,
            'g1': jnp.ones((1, D), jnp.float32), 'be1': jnp.zeros((1, D), jnp.float32),
            'wf1': wf1, 'bf1': bf1, 'wf2': wf2, 'bf2': bf2,
            'g2': jnp.ones((1, D), jnp.float32), 'be2': jnp.zeros((1, D), jnp.float32)})

    wv1, bv1 = lin(D, H2)
    wa1, ba1 = lin(D, H2)
    params['heads'] = {
        'wv1': wv1, 'bv1': bv1,
        'wv2': jax.random.normal(next(keys), (1, H2), jnp.float32) * 0.05,
        'bv2': jax.random.normal(next(keys), (1, 1), jnp.float32) * 0.05,
        'wa1': wa1, 'ba1': ba1,
        'wa2': jax.random.normal(next(keys), (1, H2), jnp.float32) * 0.05,
        'ba2': jax.random.normal(next(keys), (1, 1), jnp.float32) * 0.05}
    return params


# ---------------------------------------------------------------------------
# Pure-JAX reference (for correctness check; uses the unfused per-layer params)
# ---------------------------------------------------------------------------
def reference_forward(audio, video, params, num_heads):
    def ln(x, g, b):
        mu = x.mean(-1, keepdims=True)
        var = ((x - mu) ** 2).mean(-1, keepdims=True)
        return (x - mu) / jnp.sqrt(var + EPS) * g + b

    def proj(x, pp):
        h = jax.nn.relu(x @ pp['w'] + pp['b'])
        return ln(h, pp['g'], pp['bt']) + pp['pos']

    x = jnp.concatenate([proj(audio, params['audio']), proj(video, params['video'])], axis=-1)
    B, S, D = x.shape
    hd = D // num_heads
    for lp in params['layers']:
        def split(t):
            return t.reshape(B, S, num_heads, hd).transpose(0, 2, 1, 3)
        q = split(x @ lp['wq'] + lp['bq'])
        k = split(x @ lp['wk'] + lp['bk'])
        v = split(x @ lp['wv'] + lp['bv'])
        s = (q @ jnp.swapaxes(k, -1, -2)) / math.sqrt(hd)
        attn = jax.nn.softmax(s, axis=-1)
        o = (attn @ v).transpose(0, 2, 1, 3).reshape(B, S, D)
        o = o @ lp['wo'] + lp['bo']
        x1 = ln(x + o, lp['g1'], lp['be1'])
        f = jax.nn.relu(x1 @ lp['wf1'] + lp['bf1']) @ lp['wf2'] + lp['bf2']
        x = ln(x1 + f, lp['g2'], lp['be2'])
    xm = x.mean(axis=1)

    def head(w1, b1, w2, b2):
        h = jax.nn.relu(xm @ w1 + b1)
        return jax.nn.sigmoid(jnp.sum(h * w2, -1, keepdims=True) + b2)

    hp = params['heads']
    return (head(hp['wv1'], hp['bv1'], hp['wv2'], hp['bv2']),
            head(hp['wa1'], hp['ba1'], hp['wa2'], hp['ba2']))


if __name__ == "__main__":
    B, S = 2, 8
    audio_dim, video_dim, hidden_dim = 12, 20, 32
    num_heads, num_layers = 4, 2

    key = jax.random.PRNGKey(0)
    kp, ka, kv = jax.random.split(key, 3)
    params = init_params(kp, audio_dim, video_dim, hidden_dim, num_heads, num_layers, S)
    audio = jax.random.normal(ka, (B, S, audio_dim), jnp.float32)
    video = jax.random.normal(kv, (B, S, video_dim), jnp.float32)

    v_ref, a_ref = reference_forward(audio, video, params, num_heads)

    # f32 matmul path: tight check against the pure-JAX reference.
    val32, aro32 = multimodal_transformer_forward(
        audio, video, params, num_heads, matmul_dtype=jnp.float32)
    jax.block_until_ready((val32, aro32))
    assert val32.shape == (B, 1) and aro32.shape == (B, 1)
    assert jnp.allclose(val32, v_ref, atol=5e-3), (val32, v_ref)
    assert jnp.allclose(aro32, a_ref, atol=5e-3), (aro32, a_ref)

    # bf16 matmul path (default): bf16 MXU operands, f32 accumulate + f32
    # LayerNorm/softmax -> looser tolerance.
    valence, arousal = multimodal_transformer_forward(audio, video, params, num_heads)
    jax.block_until_ready((valence, arousal))
    assert valence.shape == (B, 1) and arousal.shape == (B, 1)
    assert jnp.allclose(valence, v_ref, atol=3e-2), (valence, v_ref)
    assert jnp.allclose(arousal, a_ref, atol=3e-2), (arousal, a_ref)
    print("KERNEL_OK")
</pallas_src>

<mosaic_0001>
module attributes {stable_mosaic.version = 11 : i64} {
  func.func @fused_kernel(%arg0: i32, %arg1: i32, %arg2: memref<1x8x12xf32, #tpu.memory_space<vmem>>, %arg3: memref<1x8x20xf32, #tpu.memory_space<vmem>>, %arg4: memref<12x32xf32, #tpu.memory_space<vmem>>, %arg5: memref<1x32xf32, #tpu.memory_space<vmem>>, %arg6: memref<1x32xf32, #tpu.memory_space<vmem>>, %arg7: memref<1x32xf32, #tpu.memory_space<vmem>>, %arg8: memref<8x32xf32, #tpu.memory_space<vmem>>, %arg9: memref<20x32xf32, #tpu.memory_space<vmem>>, %arg10: memref<1x32xf32, #tpu.memory_space<vmem>>, %arg11: memref<1x32xf32, #tpu.memory_space<vmem>>, %arg12: memref<1x32xf32, #tpu.memory_space<vmem>>, %arg13: memref<8x32xf32, #tpu.memory_space<vmem>>, %arg14: memref<1x64x192xf32, #tpu.memory_space<vmem>>, %arg15: memref<1x1x192xf32, #tpu.memory_space<vmem>>, %arg16: memref<1x64x64xf32, #tpu.memory_space<vmem>>, %arg17: memref<1x1x64xf32, #tpu.memory_space<vmem>>, %arg18: memref<1x1x64xf32, #tpu.memory_space<vmem>>, %arg19: memref<1x1x64xf32, #tpu.memory_space<vmem>>, %arg20: memref<1x64x256xf32, #tpu.memory_space<vmem>>, %arg21: memref<1x1x256xf32, #tpu.memory_space<vmem>>, %arg22: memref<1x256x64xf32, #tpu.memory_space<vmem>>, %arg23: memref<1x1x64xf32, #tpu.memory_space<vmem>>, %arg24: memref<1x1x64xf32, #tpu.memory_space<vmem>>, %arg25: memref<1x1x64xf32, #tpu.memory_space<vmem>>, %arg26: memref<64x16xf32, #tpu.memory_space<vmem>>, %arg27: memref<1x16xf32, #tpu.memory_space<vmem>>, %arg28: memref<1x16xf32, #tpu.memory_space<vmem>>, %arg29: memref<1x1xf32, #tpu.memory_space<vmem>>, %arg30: memref<64x16xf32, #tpu.memory_space<vmem>>, %arg31: memref<1x16xf32, #tpu.memory_space<vmem>>, %arg32: memref<1x16xf32, #tpu.memory_space<vmem>>, %arg33: memref<1x1xf32, #tpu.memory_space<vmem>>, %arg34: memref<1x1x1xf32, #tpu.memory_space<vmem>>, %arg35: memref<1x1x1xf32, #tpu.memory_space<vmem>>, %arg36: memref<8x64xf32, #tpu.memory_space<vmem>>) attributes {dimension_semantics = [#tpu.dimension_semantics<parallel>, #tpu.dimension_semantics<arbitrary>], iteration_bounds = array<i64: 2, 2>, scalar_prefetch = 0 : i64, scratch_operands = 1 : i64, tpu.core_type = #tpu.core_type<tc>, window_params = [{transform_indices = @transform_0, window_bounds = array<i64: 1, 8, 12>}, {transform_indices = @transform_1, window_bounds = array<i64: 1, 8, 20>}, {pipeline_mode = #tpu.pipeline_mode<synchronous>, transform_indices = @transform_2, window_bounds = array<i64: 12, 32>}, {pipeline_mode = #tpu.pipeline_mode<synchronous>, transform_indices = @transform_3, window_bounds = array<i64: 1, 32>}, {pipeline_mode = #tpu.pipeline_mode<synchronous>, transform_indices = @transform_4, window_bounds = array<i64: 1, 32>}, {pipeline_mode = #tpu.pipeline_mode<synchronous>, transform_indices = @transform_5, window_bounds = array<i64: 1, 32>}, {pipeline_mode = #tpu.pipeline_mode<synchronous>, transform_indices = @transform_6, window_bounds = array<i64: 8, 32>}, {pipeline_mode = #tpu.pipeline_mode<synchronous>, transform_indices = @transform_7, window_bounds = array<i64: 20, 32>}, {pipeline_mode = #tpu.pipeline_mode<synchronous>, transform_indices = @transform_8, window_bounds = array<i64: 1, 32>}, {pipeline_mode = #tpu.pipeline_mode<synchronous>, transform_indices = @transform_9, window_bounds = array<i64: 1, 32>}, {pipeline_mode = #tpu.pipeline_mode<synchronous>, transform_indices = @transform_10, window_bounds = array<i64: 1, 32>}, {pipeline_mode = #tpu.pipeline_mode<synchronous>, transform_indices = @transform_11, window_bounds = array<i64: 8, 32>}, {transform_indices = @transform_12, window_bounds = array<i64: 1, 64, 192>}, {transform_indices = @transform_13, window_bounds = array<i64: 1, 1, 192>}, {transform_indices = @transform_14, window_bounds = array<i64: 1, 64, 64>}, {transform_indices = @transform_15, window_bounds = array<i64: 1, 1, 64>}, {transform_indices = @transform_16, window_bounds = array<i64: 1, 1, 64>}, {transform_indices = @transform_17, window_bounds = array<i64: 1, 1, 64>}, {transform_indices = @transform_18, window_bounds = array<i64: 1, 64, 256>}, {transform_indices = @transform_19, window_bounds = array<i64: 1, 1, 256>}, {transform_indices = @transform_20, window_bounds = array<i64: 1, 256, 64>}, {transform_indices = @transform_21, window_bounds = array<i64: 1, 1, 64>}, {transform_indices = @transform_22, window_bounds = array<i64: 1, 1, 64>}, {transform_indices = @transform_23, window_bounds = array<i64: 1, 1, 64>}, {pipeline_mode = #tpu.pipeline_mode<synchronous>, transform_indices = @transform_24, window_bounds = array<i64: 64, 16>}, {pipeline_mode = #tpu.pipeline_mode<synchronous>, transform_indices = @transform_25, window_bounds = array<i64: 1, 16>}, {pipeline_mode = #tpu.pipeline_mode<synchronous>, transform_indices = @transform_26, window_bounds = array<i64: 1, 16>}, {pipeline_mode = #tpu.pipeline_mode<synchronous>, transform_indices = @transform_27, window_bounds = array<i64: 1, 1>}, {pipeline_mode = #tpu.pipeline_mode<synchronous>, transform_indices = @transform_28, window_bounds = array<i64: 64, 16>}, {pipeline_mode = #tpu.pipeline_mode<synchronous>, transform_indices = @transform_29, window_bounds = array<i64: 1, 16>}, {pipeline_mode = #tpu.pipeline_mode<synchronous>, transform_indices = @transform_30, window_bounds = array<i64: 1, 16>}, {pipeline_mode = #tpu.pipeline_mode<synchronous>, transform_indices = @transform_31, window_bounds = array<i64: 1, 1>}, {transform_indices = @transform_32, window_bounds = array<i64: 1, 1, 1>}, {transform_indices = @transform_33, window_bounds = array<i64: 1, 1, 1>}]} {
    %c0_i32 = arith.constant 0 : i32
    %0 = arith.cmpi eq, %arg1, %c0_i32 : i32
    %1 = arith.extui %0 : i1 to i32
    %c0_i32_0 = arith.constant 0 : i32
    %2 = arith.cmpi ne, %1, %c0_i32_0 : i32
    scf.if %2 {
      %c0_75 = arith.constant 0 : index
      %c0_76 = arith.constant 0 : index
      %c0_77 = arith.constant 0 : index
      %161 = vector.load %arg2[%c0_75, %c0_76, %c0_77] : memref<1x8x12xf32, #tpu.memory_space<vmem>>, vector<1x8x12xf32>
      %162 = vector.shape_cast %161 : vector<1x8x12xf32> to vector<8x12xf32>
      %c0_78 = arith.constant 0 : index
      %c0_79 = arith.constant 0 : index
      %163 = vector.load %arg4[%c0_78, %c0_79] : memref<12x32xf32, #tpu.memory_space<vmem>>, vector<12x32xf32>
      %cst_80 = arith.constant dense<0.000000e+00> : vector<8x32xf32>
      %164 = tpu.matmul %162, %163, %cst_80 {dimension_numbers = #tpu.dot_dimension_numbers<[1], [0], [0], [1], [0, 0, 1, 1], [], []>} : vector<8x12xf32>, vector<12x32xf32>, vector<8x32xf32> -> vector<8x32xf32>
      %c0_81 = arith.constant 0 : index
      %c0_82 = arith.constant 0 : index
      %165 = vector.load %arg5[%c0_81, %c0_82] : memref<1x32xf32, #tpu.memory_space<vmem>>, vector<1x32xf32>
      %166 = vector.broadcast %165 : vector<1x32xf32> to vector<8x32xf32>
      %167 = arith.addf %164, %166 : vector<8x32xf32>
      %cst_83 = arith.constant 0.000000e+00 : f32
      %168 = vector.broadcast %cst_83 : f32 to vector<8x32xf32>
      %169 = arith.maximumf %167, %168 : vector<8x32xf32>
      %c0_84 = arith.constant 0 : index
      %c0_85 = arith.constant 0 : index
      %170 = vector.load %arg6[%c0_84, %c0_85] : memref<1x32xf32, #tpu.memory_space<vmem>>, vector<1x32xf32>
      %c0_86 = arith.constant 0 : index
      %c0_87 = arith.constant 0 : index
      %171 = vector.load %arg7[%c0_86, %c0_87] : memref<1x32xf32, #tpu.memory_space<vmem>>, vector<1x32xf32>
      %cst_88 = arith.constant dense<0.000000e+00> : vector<8xf32>
      %172 = vector.multi_reduction <add>, %169, %cst_88 [1] : vector<8x32xf32> to vector<8xf32>
      %173 = vector.shape_cast %172 : vector<8xf32> to vector<8x1xf32>
      %cst_89 = arith.constant 3.200000e+01 : f32
      %174 = vector.broadcast %cst_89 : f32 to vector<8x1xf32>
      %175 = arith.divf %173, %174 : vector<8x1xf32>
      %176 = vector.broadcast %175 : vector<8x1xf32> to vector<8x32xf32>
      %177 = arith.subf %169, %176 : vector<8x32xf32>
      %178 = arith.mulf %177, %177 : vector<8x32xf32>
      %cst_90 = arith.constant dense<0.000000e+00> : vector<8xf32>
      %179 = vector.multi_reduction <add>, %178, %cst_90 [1] : vector<8x32xf32> to vector<8xf32>
      %180 = vector.shape_cast %179 : vector<8xf32> to vector<8x1xf32>
      %cst_91 = arith.constant 3.200000e+01 : f32
      %181 = vector.broadcast %cst_91 : f32 to vector<8x1xf32>
      %182 = arith.divf %180, %181 : vector<8x1xf32>
      %183 = vector.broadcast %175 : vector<8x1xf32> to vector<8x32xf32>
      %184 = arith.subf %169, %183 : vector<8x32xf32>
      %cst_92 = arith.constant 9.99999974E-6 : f32
      %185 = vector.broadcast %cst_92 : f32 to vector<8x1xf32>
      %186 = arith.addf %182, %185 : vector<8x1xf32>
      %187 = math.rsqrt %186 : vector<8x1xf32>
      %188 = vector.broadcast %187 : vector<8x1xf32> to vector<8x32xf32>
      %189 = arith.mulf %184, %188 : vector<8x32xf32>
      %190 = vector.broadcast %170 : vector<1x32xf32> to vector<8x32xf32>
      %191 = arith.mulf %189, %190 : vector<8x32xf32>
      %192 = vector.broadcast %171 : vector<1x32xf32> to vector<8x32xf32>
      %193 = arith.addf %191, %192 : vector<8x32xf32>
      %c0_93 = arith.constant 0 : index
      %c0_94 = arith.constant 0 : index
      %194 = vector.load %arg8[%c0_93, %c0_94] : memref<8x32xf32, #tpu.memory_space<vmem>>, vector<8x32xf32>
      %195 = arith.addf %193, %194 : vector<8x32xf32>
      %c0_95 = arith.constant 0 : index
      %c0_96 = arith.constant 0 : index
      %c0_97 = arith.constant 0 : index
      %196 = vector.load %arg3[%c0_95, %c0_96, %c0_97] : memref<1x8x20xf32, #tpu.memory_space<vmem>>, vector<1x8x20xf32>
      %197 = vector.shape_cast %196 : vector<1x8x20xf32> to vector<8x20xf32>
      %c0_98 = arith.constant 0 : index
      %c0_99 = arith.constant 0 : index
      %198 = vector.load %arg9[%c0_98, %c0_99] : memref<20x32xf32, #tpu.memory_space<vmem>>, vector<20x32xf32>
      %cst_100 = arith.constant dense<0.000000e+00> : vector<8x32xf32>
      %199 = tpu.matmul %197, %198, %cst_100 {dimension_numbers = #tpu.dot_dimension_numbers<[1], [0], [0], [1], [0, 0, 1, 1], [], []>} : vector<8x20xf32>, vector<20x32xf32>, vector<8x32xf32> -> vector<8x32xf32>
      %c0_101 = arith.constant 0 : index
      %c0_102 = arith.constant 0 : index
      %200 = vector.load %arg10[%c0_101, %c0_102] : memref<1x32xf32, #tpu.memory_space<vmem>>, vector<1x32xf32>
      %201 = vector.broadcast %200 : vector<1x32xf32> to vector<8x32xf32>
      %202 = arith.addf %199, %201 : vector<8x32xf32>
      %cst_103 = arith.constant 0.000000e+00 : f32
      %203 = vector.broadcast %cst_103 : f32 to vector<8x32xf32>
      %204 = arith.maximumf %202, %203 : vector<8x32xf32>
      %c0_104 = arith.constant 0 : index
      %c0_105 = arith.constant 0 : index
      %205 = vector.load %arg11[%c0_104, %c0_105] : memref<1x32xf32, #tpu.memory_space<vmem>>, vector<1x32xf32>
      %c0_106 = arith.constant 0 : index
      %c0_107 = arith.constant 0 : index
      %206 = vector.load %arg12[%c0_106, %c0_107] : memref<1x32xf32, #tpu.memory_space<vmem>>, vector<1x32xf32>
      %cst_108 = arith.constant dense<0.000000e+00> : vector<8xf32>
      %207 = vector.multi_reduction <add>, %204, %cst_108 [1] : vector<8x32xf32> to vector<8xf32>
      %208 = vector.shape_cast %207 : vector<8xf32> to vector<8x1xf32>
      %cst_109 = arith.constant 3.200000e+01 : f32
      %209 = vector.broadcast %cst_109 : f32 to vector<8x1xf32>
      %210 = arith.divf %208, %209 : vector<8x1xf32>
      %211 = vector.broadcast %210 : vector<8x1xf32> to vector<8x32xf32>
      %212 = arith.subf %204, %211 : vector<8x32xf32>
      %213 = arith.mulf %212, %212 : vector<8x32xf32>
      %cst_110 = arith.constant dense<0.000000e+00> : vector<8xf32>
      %214 = vector.multi_reduction <add>, %213, %cst_110 [1] : vector<8x32xf32> to vector<8xf32>
      %215 = vector.shape_cast %214 : vector<8xf32> to vector<8x1xf32>
      %cst_111 = arith.constant 3.200000e+01 : f32
      %216 = vector.broadcast %cst_111 : f32 to vector<8x1xf32>
      %217 = arith.divf %215, %216 : vector<8x1xf32>
      %218 = vector.broadcast %210 : vector<8x1xf32> to vector<8x32xf32>
      %219 = arith.subf %204, %218 : vector<8x32xf32>
      %cst_112 = arith.constant 9.99999974E-6 : f32
      %220 = vector.broadcast %cst_112 : f32 to vector<8x1xf32>
      %221 = arith.addf %217, %220 : vector<8x1xf32>
      %222 = math.rsqrt %221 : vector<8x1xf32>
      %223 = vector.broadcast %222 : vector<8x1xf32> to vector<8x32xf32>
      %224 = arith.mulf %219, %223 : vector<8x32xf32>
      %225 = vector.broadcast %205 : vector<1x32xf32> to vector<8x32xf32>
      %226 = arith.mulf %224, %225 : vector<8x32xf32>
      %227 = vector.broadcast %206 : vector<1x32xf32> to vector<8x32xf32>
      %228 = arith.addf %226, %227 : vector<8x32xf32>
      %c0_113 = arith.constant 0 : index
      %c0_114 = arith.constant 0 : index
      %229 = vector.load %arg13[%c0_113, %c0_114] : memref<8x32xf32, #tpu.memory_space<vmem>>, vector<8x32xf32>
      %230 = arith.addf %228, %229 : vector<8x32xf32>
      %231 = tpu.concatenate %195, %230 in 1 : vector<8x32xf32>, vector<8x32xf32> -> vector<8x64xf32>
      %c0_115 = arith.constant 0 : index
      %c0_116 = arith.constant 0 : index
      %232 = vector.load %arg36[%c0_115, %c0_116] : memref<8x64xf32, #tpu.memory_space<vmem>>, vector<8x64xf32>
      tpu.vector_store %arg36[%c0_115, %c0_116], %231 {strides = array<i32>} : memref<8x64xf32, #tpu.memory_space<vmem>>, vector<8x64xf32>,
    } else {
    }
    %c0 = arith.constant 0 : index
    %c0_1 = arith.constant 0 : index
    %3 = vector.load %arg36[%c0, %c0_1] : memref<8x64xf32, #tpu.memory_space<vmem>>, vector<8x64xf32>
    %c0_2 = arith.constant 0 : index
    %c0_3 = arith.constant 0 : index
    %c0_4 = arith.constant 0 : index
    %4 = vector.load %arg14[%c0_2, %c0_3, %c0_4] : memref<1x64x192xf32, #tpu.memory_space<vmem>>, vector<1x64x192xf32>
    %5 = vector.shape_cast %4 : vector<1x64x192xf32> to vector<64x192xf32>
    %cst = arith.constant dense<0.000000e+00> : vector<8x192xf32>
    %6 = tpu.matmul %3, %5, %cst {dimension_numbers = #tpu.dot_dimension_numbers<[1], [0], [0], [1], [0, 0, 1, 1], [], []>} : vector<8x64xf32>, vector<64x192xf32>, vector<8x192xf32> -> vector<8x192xf32>
    %c0_5 = arith.constant 0 : index
    %c0_6 = arith.constant 0 : index
    %c0_7 = arith.constant 0 : index
    %7 = vector.load %arg15[%c0_5, %c0_6, %c0_7] : memref<1x1x192xf32, #tpu.memory_space<vmem>>, vector<1x1x192xf32>
    %8 = vector.shape_cast %7 : vector<1x1x192xf32> to vector<1x192xf32>
    %9 = vector.broadcast %8 : vector<1x192xf32> to vector<8x192xf32>
    %10 = arith.addf %6, %9 : vector<8x192xf32>
    %11 = vector.extract_strided_slice %10 {offsets = [0, 0], sizes = [8, 16], strides = [1, 1]} : vector<8x192xf32> to vector<8x16xf32>
    %12 = vector.extract_strided_slice %10 {offsets = [0, 64], sizes = [8, 16], strides = [1, 1]} : vector<8x192xf32> to vector<8x16xf32>
    %13 = vector.extract_strided_slice %10 {offsets = [0, 128], sizes = [8, 16], strides = [1, 1]} : vector<8x192xf32> to vector<8x16xf32>
    %cst_8 = arith.constant dense<0.000000e+00> : vector<8x8xf32>
    %14 = tpu.matmul %11, %12, %cst_8 {dimension_numbers = #tpu.dot_dimension_numbers<[1], [1], [0], [0], [0, 0, 1, 0], [], []>} : vector<8x16xf32>, vector<8x16xf32>, vector<8x8xf32> -> vector<8x8xf32>
    %cst_9 = arith.constant 2.500000e-01 : f32
    %15 = vector.broadcast %cst_9 : f32 to vector<8x8xf32>
    %16 = arith.mulf %14, %15 : vector<8x8xf32>
    %cst_10 = arith.constant dense<0xFF800000> : vector<8xf32>
    %17 = vector.multi_reduction <maximumf>, %16, %cst_10 [1] : vector<8x8xf32> to vector<8xf32>
    %18 = vector.shape_cast %17 : vector<8xf32> to vector<8x1xf32>
    %19 = vector.broadcast %18 : vector<8x1xf32> to vector<8x8xf32>
    %20 = arith.subf %16, %19 : vector<8x8xf32>
    %21 = math.exp %20 : vector<8x8xf32>
    %cst_11 = arith.constant dense<0.000000e+00> : vector<8xf32>
    %22 = vector.multi_reduction <add>, %21, %cst_11 [1] : vector<8x8xf32> to vector<8xf32>
    %23 = vector.shape_cast %22 : vector<8xf32> to vector<8x1xf32>
    %24 = tpu.reciprocal %23 {approx = true} : vector<8x1xf32> -> vector<8x1xf32>
    %25 = vector.broadcast %24 : vector<8x1xf32> to vector<8x8xf32>
    %26 = arith.mulf %21, %25 : vector<8x8xf32>
    %cst_12 = arith.constant dense<0.000000e+00> : vector<8x16xf32>
    %27 = tpu.matmul %26, %13, %cst_12 {dimension_numbers = #tpu.dot_dimension_numbers<[1], [0], [0], [1], [0, 0, 1, 1], [], []>} : vector<8x8xf32>, vector<8x16xf32>, vector<8x16xf32> -> vector<8x16xf32>
    %28 = vector.extract_strided_slice %10 {offsets = [0, 16], sizes = [8, 16], strides = [1, 1]} : vector<8x192xf32> to vector<8x16xf32>
    %29 = vector.extract_strided_slice %10 {offsets = [0, 80], sizes = [8, 16], strides = [1, 1]} : vector<8x192xf32> to vector<8x16xf32>
    %30 = vector.extract_strided_slice %10 {offsets = [0, 144], sizes = [8, 16], strides = [1, 1]} : vector<8x192xf32> to vector<8x16xf32>
    %cst_13 = arith.constant dense<0.000000e+00> : vector<8x8xf32>
    %31 = tpu.matmul %28, %29, %cst_13 {dimension_numbers = #tpu.dot_dimension_numbers<[1], [1], [0], [0], [0, 0, 1, 0], [], []>} : vector<8x16xf32>, vector<8x16xf32>, vector<8x8xf32> -> vector<8x8xf32>
    %cst_14 = arith.constant 2.500000e-01 : f32
    %32 = vector.broadcast %cst_14 : f32 to vector<8x8xf32>
    %33 = arith.mulf %31, %32 : vector<8x8xf32>
    %cst_15 = arith.constant dense<0xFF800000> : vector<8xf32>
    %34 = vector.multi_reduction <maximumf>, %33, %cst_15 [1] : vector<8x8xf32> to vector<8xf32>
    %35 = vector.shape_cast %34 : vector<8xf32> to vector<8x1xf32>
    %36 = vector.broadcast %35 : vector<8x1xf32> to vector<8x8xf32>
    %37 = arith.subf %33, %36 : vector<8x8xf32>
    %38 = math.exp %37 : vector<8x8xf32>
    %cst_16 = arith.constant dense<0.000000e+00> : vector<8xf32>
    %39 = vector.multi_reduction <add>, %38, %cst_16 [1] : vector<8x8xf32> to vector<8xf32>
    %40 = vector.shape_cast %39 : vector<8xf32> to vector<8x1xf32>
    %41 = tpu.reciprocal %40 {approx = true} : vector<8x1xf32> -> vector<8x1xf32>
    %42 = vector.broadcast %41 : vector<8x1xf32> to vector<8x8xf32>
    %43 = arith.mulf %38, %42 : vector<8x8xf32>
    %cst_17 = arith.constant dense<0.000000e+00> : vector<8x16xf32>
    %44 = tpu.matmul %43, %30, %cst_17 {dimension_numbers = #tpu.dot_dimension_numbers<[1], [0], [0], [1], [0, 0, 1, 1], [], []>} : vector<8x8xf32>, vector<8x16xf32>, vector<8x16xf32> -> vector<8x16xf32>
    %45 = vector.extract_strided_slice %10 {offsets = [0, 32], sizes = [8, 16], strides = [1, 1]} : vector<8x192xf32> to vector<8x16xf32>
    %46 = vector.extract_strided_slice %10 {offsets = [0, 96], sizes = [8, 16], strides = [1, 1]} : vector<8x192xf32> to vector<8x16xf32>
    %47 = vector.extract_strided_slice %10 {offsets = [0, 160], sizes = [8, 16], strides = [1, 1]} : vector<8x192xf32> to vector<8x16xf32>
    %cst_18 = arith.constant dense<0.000000e+00> : vector<8x8xf32>
    %48 = tpu.matmul %45, %46, %cst_18 {dimension_numbers = #tpu.dot_dimension_numbers<[1], [1], [0], [0], [0, 0, 1, 0], [], []>} : vector<8x16xf32>, vector<8x16xf32>, vector<8x8xf32> -> vector<8x8xf32>
    %cst_19 = arith.constant 2.500000e-01 : f32
    %49 = vector.broadcast %cst_19 : f32 to vector<8x8xf32>
    %50 = arith.mulf %48, %49 : vector<8x8xf32>
    %cst_20 = arith.constant dense<0xFF800000> : vector<8xf32>
    %51 = vector.multi_reduction <maximumf>, %50, %cst_20 [1] : vector<8x8xf32> to vector<8xf32>
    %52 = vector.shape_cast %51 : vector<8xf32> to vector<8x1xf32>
    %53 = vector.broadcast %52 : vector<8x1xf32> to vector<8x8xf32>
    %54 = arith.subf %50, %53 : vector<8x8xf32>
    %55 = math.exp %54 : vector<8x8xf32>
    %cst_21 = arith.constant dense<0.000000e+00> : vector<8xf32>
    %56 = vector.multi_reduction <add>, %55, %cst_21 [1] : vector<8x8xf32> to vector<8xf32>
    %57 = vector.shape_cast %56 : vector<8xf32> to vector<8x1xf32>
    %58 = tpu.reciprocal %57 {approx = true} : vector<8x1xf32> -> vector<8x1xf32>
    %59 = vector.broadcast %58 : vector<8x1xf32> to vector<8x8xf32>
    %60 = arith.mulf %55, %59 : vector<8x8xf32>
    %cst_22 = arith.constant dense<0.000000e+00> : vector<8x16xf32>
    %61 = tpu.matmul %60, %47, %cst_22 {dimension_numbers = #tpu.dot_dimension_numbers<[1], [0], [0], [1], [0, 0, 1, 1], [], []>} : vector<8x8xf32>, vector<8x16xf32>, vector<8x16xf32> -> vector<8x16xf32>
    %62 = vector.extract_strided_slice %10 {offsets = [0, 48], sizes = [8, 16], strides = [1, 1]} : vector<8x192xf32> to vector<8x16xf32>
    %63 = vector.extract_strided_slice %10 {offsets = [0, 112], sizes = [8, 16], strides = [1, 1]} : vector<8x192xf32> to vector<8x16xf32>
    %64 = vector.extract_strided_slice %10 {offsets = [0, 176], sizes = [8, 16], strides = [1, 1]} : vector<8x192xf32> to vector<8x16xf32>
    %cst_23 = arith.constant dense<0.000000e+00> : vector<8x8xf32>
    %65 = tpu.matmul %62, %63, %cst_23 {dimension_numbers = #tpu.dot_dimension_numbers<[1], [1], [0], [0], [0, 0, 1, 0], [], []>} : vector<8x16xf32>, vector<8x16xf32>, vector<8x8xf32> -> vector<8x8xf32>
    %cst_24 = arith.constant 2.500000e-01 : f32
    %66 = vector.broadcast %cst_24 : f32 to vector<8x8xf32>
    %67 = arith.mulf %65, %66 : vector<8x8xf32>
    %cst_25 = arith.constant dense<0xFF800000> : vector<8xf32>
    %68 = vector.multi_reduction <maximumf>, %67, %cst_25 [1] : vector<8x8xf32> to vector<8xf32>
    %69 = vector.shape_cast %68 : vector<8xf32> to vector<8x1xf32>
    %70 = vector.broadcast %69 : vector<8x1xf32> to vector<8x8xf32>
    %71 = arith.subf %67, %70 : vector<8x8xf32>
    %72 = math.exp %71 : vector<8x8xf32>
    %cst_26 = arith.constant dense<0.000000e+00> : vector<8xf32>
    %73 = vector.multi_reduction <add>, %72, %cst_26 [1] : vector<8x8xf32> to vector<8xf32>
    %74 = vector.shape_cast %73 : vector<8xf32> to vector<8x1xf32>
    %75 = tpu.reciprocal %74 {approx = true} : vector<8x1xf32> -> vector<8x1xf32>
    %76 = vector.broadcast %75 : vector<8x1xf32> to vector<8x8xf32>
    %77 = arith.mulf %72, %76 : vector<8x8xf32>
    %cst_27 = arith.constant dense<0.000000e+00> : vector<8x16xf32>
    %78 = tpu.matmul %77, %64, %cst_27 {dimension_numbers = #tpu.dot_dimension_numbers<[1], [0], [0], [1], [0, 0, 1, 1], [], []>} : vector<8x8xf32>, vector<8x16xf32>, vector<8x16xf32> -> vector<8x16xf32>
    %79 = tpu.concatenate %27, %44, %61, %78 in 1 : vector<8x16xf32>, vector<8x16xf32>, vector<8x16xf32>, vector<8x16xf32> -> vector<8x64xf32>
    %c0_28 = arith.constant 0 : index
    %c0_29 = arith.constant 0 : index
    %c0_30 = arith.constant 0 : index
    %80 = vector.load %arg16[%c0_28, %c0_29, %c0_30] : memref<1x64x64xf32, #tpu.memory_space<vmem>>, vector<1x64x64xf32>
    %81 = vector.shape_cast %80 : vector<1x64x64xf32> to vector<64x64xf32>
    %cst_31 = arith.constant dense<0.000000e+00> : vector<8x64xf32>
    %82 = tpu.matmul %79, %81, %cst_31 {dimension_numbers = #tpu.dot_dimension_numbers<[1], [0], [0], [1], [0, 0, 1, 1], [], []>} : vector<8x64xf32>, vector<64x64xf32>, vector<8x64xf32> -> vector<8x64xf32>
    %c0_32 = arith.constant 0 : index
    %c0_33 = arith.constant 0 : index
    %c0_34 = arith.constant 0 : index
    %83 = vector.load %arg17[%c0_32, %c0_33, %c0_34] : memref<1x1x64xf32, #tpu.memory_space<vmem>>, vector<1x1x64xf32>
    %84 = vector.shape_cast %83 : vector<1x1x64xf32> to vector<1x64xf32>
    %85 = vector.broadcast %84 : vector<1x64xf32> to vector<8x64xf32>
    %86 = arith.addf %82, %85 : vector<8x64xf32>
    %87 = arith.addf %3, %86 : vector<8x64xf32>
    %c0_35 = arith.constant 0 : index
    %c0_36 = arith.constant 0 : index
    %c0_37 = arith.constant 0 : index
    %88 = vector.load %arg18[%c0_35, %c0_36, %c0_37] : memref<1x1x64xf32, #tpu.memory_space<vmem>>, vector<1x1x64xf32>
    %89 = vector.shape_cast %88 : vector<1x1x64xf32> to vector<1x64xf32>
    %c0_38 = arith.constant 0 : index
    %c0_39 = arith.constant 0 : index
    %c0_40 = arith.constant 0 : index
    %90 = vector.load %arg19[%c0_38, %c0_39, %c0_40] : memref<1x1x64xf32, #tpu.memory_space<vmem>>, vector<1x1x64xf32>
    %91 = vector.shape_cast %90 : vector<1x1x64xf32> to vector<1x64xf32>
    %cst_41 = arith.constant dense<0.000000e+00> : vector<8xf32>
    %92 = vector.multi_reduction <add>, %87, %cst_41 [1] : vector<8x64xf32> to vector<8xf32>
    %93 = vector.shape_cast %92 : vector<8xf32> to vector<8x1xf32>
    %cst_42 = arith.constant 6.400000e+01 : f32
    %94 = vector.broadcast %cst_42 : f32 to vector<8x1xf32>
    %95 = arith.divf %93, %94 : vector<8x1xf32>
    %96 = vector.broadcast %95 : vector<8x1xf32> to vector<8x64xf32>
    %97 = arith.subf %87, %96 : vector<8x64xf32>
    %98 = arith.mulf %97, %97 : vector<8x64xf32>
    %cst_43 = arith.constant dense<0.000000e+00> : vector<8xf32>
    %99 = vector.multi_reduction <add>, %98, %cst_43 [1] : vector<8x64xf32> to vector<8xf32>
    %100 = vector.shape_cast %99 : vector<8xf32> to vector<8x1xf32>
    %cst_44 = arith.constant 6.400000e+01 : f32
    %101 = vector.broadcast %cst_44 : f32 to vector<8x1xf32>
    %102 = arith.divf %100, %101 : vector<8x1xf32>
    %103 = vector.broadcast %95 : vector<8x1xf32> to vector<8x64xf32>
    %104 = arith.subf %87, %103 : vector<8x64xf32>
    %cst_45 = arith.constant 9.99999974E-6 : f32
    %105 = vector.broadcast %cst_45 : f32 to vector<8x1xf32>
    %106 = arith.addf %102, %105 : vector<8x1xf32>
    %107 = math.rsqrt %106 : vector<8x1xf32>
    %108 = vector.broadcast %107 : vector<8x1xf32> to vector<8x64xf32>
    %109 = arith.mulf %104, %108 : vector<8x64xf32>
    %110 = vector.broadcast %89 : vector<1x64xf32> to vector<8x64xf32>
    %111 = arith.mulf %109, %110 : vector<8x64xf32>
    %112 = vector.broadcast %91 : vector<1x64xf32> to vector<8x64xf32>
    %113 = arith.addf %111, %112 : vector<8x64xf32>
    %c0_46 = arith.constant 0 : index
    %c0_47 = arith.constant 0 : index
    %c0_48 = arith.constant 0 : index
    %114 = vector.load %arg20[%c0_46, %c0_47, %c0_48] : memref<1x64x256xf32, #tpu.memory_space<vmem>>, vector<1x64x256xf32>
    %115 = vector.shape_cast %114 : vector<1x64x256xf32> to vector<64x256xf32>
    %cst_49 = arith.constant dense<0.000000e+00> : vector<8x256xf32>
    %116 = tpu.matmul %113, %115, %cst_49 {dimension_numbers = #tpu.dot_dimension_numbers<[1], [0], [0], [1], [0, 0, 1, 1], [], []>} : vector<8x64xf32>, vector<64x256xf32>, vector<8x256xf32> -> vector<8x256xf32>
    %c0_50 = arith.constant 0 : index
    %c0_51 = arith.constant 0 : index
    %c0_52 = arith.constant 0 : index
    %117 = vector.load %arg21[%c0_50, %c0_51, %c0_52] : memref<1x1x256xf32, #tpu.memory_space<vmem>>, vector<1x1x256xf32>
    %118 = vector.shape_cast %117 : vector<1x1x256xf32> to vector<1x256xf32>
    %119 = vector.broadcast %118 : vector<1x256xf32> to vector<8x256xf32>
    %120 = arith.addf %116, %119 : vector<8x256xf32>
    %cst_53 = arith.constant 0.000000e+00 : f32
    %121 = vector.broadcast %cst_53 : f32 to vector<8x256xf32>
    %122 = arith.maximumf %120, %121 : vector<8x256xf32>
    %c0_54 = arith.constant 0 : index
    %c0_55 = arith.constant 0 : index
    %c0_56 = arith.constant 0 : index
    %123 = vector.load %arg22[%c0_54, %c0_55, %c0_56] : memref<1x256x64xf32, #tpu.memory_space<vmem>>, vector<1x256x64xf32>
    %124 = vector.shape_cast %123 : vector<1x256x64xf32> to vector<256x64xf32>
    %cst_57 = arith.constant dense<0.000000e+00> : vector<8x64xf32>
    %125 = tpu.matmul %122, %124, %cst_57 {dimension_numbers = #tpu.dot_dimension_numbers<[1], [0], [0], [1], [0, 0, 1, 1], [], []>} : vector<8x256xf32>, vector<256x64xf32>, vector<8x64xf32> -> vector<8x64xf32>
    %c0_58 = arith.constant 0 : index
    %c0_59 = arith.constant 0 : index
    %c0_60 = arith.constant 0 : index
    %126 = vector.load %arg23[%c0_58, %c0_59, %c0_60] : memref<1x1x64xf32, #tpu.memory_space<vmem>>, vector<1x1x64xf32>
    %127 = vector.shape_cast %126 : vector<1x1x64xf32> to vector<1x64xf32>
    %128 = vector.broadcast %127 : vector<1x64xf32> to vector<8x64xf32>
    %129 = arith.addf %125, %128 : vector<8x64xf32>
    %130 = arith.addf %113, %129 : vector<8x64xf32>
    %c0_61 = arith.constant 0 : index
    %c0_62 = arith.constant 0 : index
    %c0_63 = arith.constant 0 : index
    %131 = vector.load %arg24[%c0_61, %c0_62, %c0_63] : memref<1x1x64xf32, #tpu.memory_space<vmem>>, vector<1x1x64xf32>
    %132 = vector.shape_cast %131 : vector<1x1x64xf32> to vector<1x64xf32>
    %c0_64 = arith.constant 0 : index
    %c0_65 = arith.constant 0 : index
    %c0_66 = arith.constant 0 : index
    %133 = vector.load %arg25[%c0_64, %c0_65, %c0_66] : memref<1x1x64xf32, #tpu.memory_space<vmem>>, vector<1x1x64xf32>
    %134 = vector.shape_cast %133 : vector<1x1x64xf32> to vector<1x64xf32>
    %cst_67 = arith.constant dense<0.000000e+00> : vector<8xf32>
    %135 = vector.multi_reduction <add>, %130, %cst_67 [1] : vector<8x64xf32> to vector<8xf32>
    %136 = vector.shape_cast %135 : vector<8xf32> to vector<8x1xf32>
    %cst_68 = arith.constant 6.400000e+01 : f32
    %137 = vector.broadcast %cst_68 : f32 to vector<8x1xf32>
    %138 = arith.divf %136, %137 : vector<8x1xf32>
    %139 = vector.broadcast %138 : vector<8x1xf32> to vector<8x64xf32>
    %140 = arith.subf %130, %139 : vector<8x64xf32>
    %141 = arith.mulf %140, %140 : vector<8x64xf32>
    %cst_69 = arith.constant dense<0.000000e+00> : vector<8xf32>
    %142 = vector.multi_reduction <add>, %141, %cst_69 [1] : vector<8x64xf32> to vector<8xf32>
    %143 = vector.shape_cast %142 : vector<8xf32> to vector<8x1xf32>
    %cst_70 = arith.constant 6.400000e+01 : f32
    %144 = vector.broadcast %cst_70 : f32 to vector<8x1xf32>
    %145 = arith.divf %143, %144 : vector<8x1xf32>
    %146 = vector.broadcast %138 : vector<8x1xf32> to vector<8x64xf32>
    %147 = arith.subf %130, %146 : vector<8x64xf32>
    %cst_71 = arith.constant 9.99999974E-6 : f32
    %148 = vector.broadcast %cst_71 : f32 to vector<8x1xf32>
    %149 = arith.addf %145, %148 : vector<8x1xf32>
    %150 = math.rsqrt %149 : vector<8x1xf32>
    %151 = vector.broadcast %150 : vector<8x1xf32> to vector<8x64xf32>
    %152 = arith.mulf %147, %151 : vector<8x64xf32>
    %153 = vector.broadcast %132 : vector<1x64xf32> to vector<8x64xf32>
    %154 = arith.mulf %152, %153 : vector<8x64xf32>
    %155 = vector.broadcast %134 : vector<1x64xf32> to vector<8x64xf32>
    %156 = arith.addf %154, %155 : vector<8x64xf32>
    %c0_72 = arith.constant 0 : index
    %c0_73 = arith.constant 0 : index
    %157 = vector.load %arg36[%c0_72, %c0_73] : memref<8x64xf32, #tpu.memory_space<vmem>>, vector<8x64xf32>
    tpu.vector_store %arg36[%c0_72, %c0_73], %156 {strides = array<i32>} : memref<8x64xf32, #tpu.memory_space<vmem>>, vector<8x64xf32>,
    %c1_i32 = arith.constant 1 : i32
    %158 = arith.cmpi eq, %arg1, %c1_i32 : i32
    %159 = arith.extui %158 : i1 to i32
    %c0_i32_74 = arith.constant 0 : i32
    %160 = arith.cmpi ne, %159, %c0_i32_74 : i32
    scf.if %160 {
      %cst_75 = arith.constant dense<0.000000e+00> : vector<64xf32>
      %161 = vector.multi_reduction <add>, %156, %cst_75 [0] : vector<8x64xf32> to vector<64xf32>
      %162 = vector.shape_cast %161 : vector<64xf32> to vector<1x64xf32>
      %cst_76 = arith.constant 8.000000e+00 : f32
      %163 = vector.broadcast %cst_76 : f32 to vector<1x64xf32>
      %164 = arith.divf %162, %163 : vector<1x64xf32>
      %c0_77 = arith.constant 0 : index
      %c0_78 = arith.constant 0 : index
      %165 = vector.load %arg26[%c0_77, %c0_78] : memref<64x16xf32, #tpu.memory_space<vmem>>, vector<64x16xf32>
      %c0_79 = arith.constant 0 : index
      %c0_80 = arith.constant 0 : index
      %166 = vector.load %arg27[%c0_79, %c0_80] : memref<1x16xf32, #tpu.memory_space<vmem>>, vector<1x16xf32>
      %c0_81 = arith.constant 0 : index
      %c0_82 = arith.constant 0 : index
      %167 = vector.load %arg28[%c0_81, %c0_82] : memref<1x16xf32, #tpu.memory_space<vmem>>, vector<1x16xf32>
      %c0_83 = arith.constant 0 : index
      %c0_84 = arith.constant 0 : index
      %168 = vector.load %arg29[%c0_83, %c0_84] : memref<1x1xf32, #tpu.memory_space<vmem>>, vector<1x1xf32>
      %cst_85 = arith.constant dense<0.000000e+00> : vector<1x16xf32>
      %169 = tpu.matmul %164, %165, %cst_85 {dimension_numbers = #tpu.dot_dimension_numbers<[1], [0], [0], [1], [0, 0, 1, 1], [], []>} : vector<1x64xf32>, vector<64x16xf32>, vector<1x16xf32> -> vector<1x16xf32>
      %170 = arith.addf %169, %166 : vector<1x16xf32>
      %cst_86 = arith.constant 0.000000e+00 : f32
      %171 = vector.broadcast %cst_86 : f32 to vector<1x16xf32>
      %172 = arith.maximumf %170, %171 : vector<1x16xf32>
      %173 = arith.mulf %172, %167 : vector<1x16xf32>
      %cst_87 = arith.constant dense<0.000000e+00> : vector<1xf32>
      %174 = vector.multi_reduction <add>, %173, %cst_87 [1] : vector<1x16xf32> to vector<1xf32>
      %175 = vector.shape_cast %174 : vector<1xf32> to vector<1x1xf32>
      %176 = arith.addf %175, %168 : vector<1x1xf32>
      %cst_88 = arith.constant 0.000000e+00 : f32
      %177 = vector.broadcast %cst_88 : f32 to vector<1x1xf32>
      %178 = arith.subf %177, %176 : vector<1x1xf32>
      %179 = math.exp %178 : vector<1x1xf32>
      %cst_89 = arith.constant 1.000000e+00 : f32
      %180 = vector.broadcast %cst_89 : f32 to vector<1x1xf32>
      %181 = arith.addf %180, %179 : vector<1x1xf32>
      %182 = tpu.reciprocal %181 {approx = true} : vector<1x1xf32> -> vector<1x1xf32>
      %c0_90 = arith.constant 0 : index
      %c0_91 = arith.constant 0 : index
      %c0_92 = arith.constant 0 : index
      %183 = vector.load %arg34[%c0_90, %c0_91, %c0_92] : memref<1x1x1xf32, #tpu.memory_space<vmem>>, vector<1x1x1xf32>
      %184 = vector.shape_cast %183 : vector<1x1x1xf32> to vector<1x1xf32>
      %185 = vector.shape_cast %182 : vector<1x1xf32> to vector<1x1x1xf32>
      tpu.vector_store %arg34[%c0_90, %c0_91, %c0_92], %185 {strides = array<i32>} : memref<1x1x1xf32, #tpu.memory_space<vmem>>, vector<1x1x1xf32>,
      %c0_93 = arith.constant 0 : index
      %c0_94 = arith.constant 0 : index
      %186 = vector.load %arg30[%c0_93, %c0_94] : memref<64x16xf32, #tpu.memory_space<vmem>>, vector<64x16xf32>
      %c0_95 = arith.constant 0 : index
      %c0_96 = arith.constant 0 : index
      %187 = vector.load %arg31[%c0_95, %c0_96] : memref<1x16xf32, #tpu.memory_space<vmem>>, vector<1x16xf32>
      %c0_97 = arith.constant 0 : index
      %c0_98 = arith.constant 0 : index
      %188 = vector.load %arg32[%c0_97, %c0_98] : memref<1x16xf32, #tpu.memory_space<vmem>>, vector<1x16xf32>
      %c0_99 = arith.constant 0 : index
      %c0_100 = arith.constant 0 : index
      %189 = vector.load %arg33[%c0_99, %c0_100] : memref<1x1xf32, #tpu.memory_space<vmem>>, vector<1x1xf32>
      %cst_101 = arith.constant dense<0.000000e+00> : vector<1x16xf32>
      %190 = tpu.matmul %164, %186, %cst_101 {dimension_numbers = #tpu.dot_dimension_numbers<[1], [0], [0], [1], [0, 0, 1, 1], [], []>} : vector<1x64xf32>, vector<64x16xf32>, vector<1x16xf32> -> vector<1x16xf32>
      %191 = arith.addf %190, %187 : vector<1x16xf32>
      %cst_102 = arith.constant 0.000000e+00 : f32
      %192 = vector.broadcast %cst_102 : f32 to vector<1x16xf32>
      %193 = arith.maximumf %191, %192 : vector<1x16xf32>
      %194 = arith.mulf %193, %188 : vector<1x16xf32>
      %cst_103 = arith.constant dense<0.000000e+00> : vector<1xf32>
      %195 = vector.multi_reduction <add>, %194, %cst_103 [1] : vector<1x16xf32> to vector<1xf32>
      %196 = vector.shape_cast %195 : vector<1xf32> to vector<1x1xf32>
      %197 = arith.addf %196, %189 : vector<1x1xf32>
      %cst_104 = arith.constant 0.000000e+00 : f32
      %198 = vector.broadcast %cst_104 : f32 to vector<1x1xf32>
      %199 = arith.subf %198, %197 : vector<1x1xf32>
      %200 = math.exp %199 : vector<1x1xf32>
      %cst_105 = arith.constant 1.000000e+00 : f32
      %201 = vector.broadcast %cst_105 : f32 to vector<1x1xf32>
      %202 = arith.addf %201, %200 : vector<1x1xf32>
      %203 = tpu.reciprocal %202 {approx = true} : vector<1x1xf32> -> vector<1x1xf32>
      %c0_106 = arith.constant 0 : index
      %c0_107 = arith.constant 0 : index
      %c0_108 = arith.constant 0 : index
      %204 = vector.load %arg35[%c0_106, %c0_107, %c0_108] : memref<1x1x1xf32, #tpu.memory_space<vmem>>, vector<1x1x1xf32>
      %205 = vector.shape_cast %204 : vector<1x1x1xf32> to vector<1x1xf32>
      %206 = vector.shape_cast %203 : vector<1x1xf32> to vector<1x1x1xf32>
      tpu.vector_store %arg35[%c0_106, %c0_107, %c0_108], %206 {strides = array<i32>} : memref<1x1x1xf32, #tpu.memory_space<vmem>>, vector<1x1x1xf32>,
    } else {
    }
    return
  }
  func.func @transform_0(%arg0: i32, %arg1: i32) -> (i32, i32, i32) {
    %c0_i32 = arith.constant 0 : i32
    %c0_i32_0 = arith.constant 0 : i32
    %c0_i32_1 = arith.constant 0 : i32
    return %arg0, %c0_i32, %c0_i32_0 : i32, i32, i32
  }
  func.func @transform_1(%arg0: i32, %arg1: i32) -> (i32, i32, i32) {
    %c0_i32 = arith.constant 0 : i32
    %c0_i32_0 = arith.constant 0 : i32
    %c0_i32_1 = arith.constant 0 : i32
    return %arg0, %c0_i32, %c0_i32_0 : i32, i32, i32
  }
  func.func @transform_2(%arg0: i32, %arg1: i32) -> (i32, i32) {
    %c0_i32 = arith.constant 0 : i32
    %c0_i32_0 = arith.constant 0 : i32
    %c0_i32_1 = arith.constant 0 : i32
    return %c0_i32, %c0_i32_0 : i32, i32
  }
  func.func @transform_3(%arg0: i32, %arg1: i32) -> (i32, i32) {
    %c0_i32 = arith.constant 0 : i32
    %c0_i32_0 = arith.constant 0 : i32
    %c0_i32_1 = arith.constant 0 : i32
    return %c0_i32, %c0_i32_0 : i32, i32
  }
  func.func @transform_4(%arg0: i32, %arg1: i32) -> (i32, i32) {
    %c0_i32 = arith.constant 0 : i32
    %c0_i32_0 = arith.constant 0 : i32
    %c0_i32_1 = arith.constant 0 : i32
    return %c0_i32, %c0_i32_0 : i32, i32
  }
  func.func @transform_5(%arg0: i32, %arg1: i32) -> (i32, i32) {
    %c0_i32 = arith.constant 0 : i32
    %c0_i32_0 = arith.constant 0 : i32
    %c0_i32_1 = arith.constant 0 : i32
    return %c0_i32, %c0_i32_0 : i32, i32
  }
  func.func @transform_6(%arg0: i32, %arg1: i32) -> (i32, i32) {
    %c0_i32 = arith.constant 0 : i32
    %c0_i32_0 = arith.constant 0 : i32
    %c0_i32_1 = arith.constant 0 : i32
    return %c0_i32, %c0_i32_0 : i32, i32
  }
  func.func @transform_7(%arg0: i32, %arg1: i32) -> (i32, i32) {
    %c0_i32 = arith.constant 0 : i32
    %c0_i32_0 = arith.constant 0 : i32
    %c0_i32_1 = arith.constant 0 : i32
    return %c0_i32, %c0_i32_0 : i32, i32
  }
  func.func @transform_8(%arg0: i32, %arg1: i32) -> (i32, i32) {
    %c0_i32 = arith.constant 0 : i32
    %c0_i32_0 = arith.constant 0 : i32
    %c0_i32_1 = arith.constant 0 : i32
    return %c0_i32, %c0_i32_0 : i32, i32
  }
  func.func @transform_9(%arg0: i32, %arg1: i32) -> (i32, i32) {
    %c0_i32 = arith.constant 0 : i32
    %c0_i32_0 = arith.constant 0 : i32
    %c0_i32_1 = arith.constant 0 : i32
    return %c0_i32, %c0_i32_0 : i32, i32
  }
  func.func @transform_10(%arg0: i32, %arg1: i32) -> (i32, i32) {
    %c0_i32 = arith.constant 0 : i32
    %c0_i32_0 = arith.constant 0 : i32
    %c0_i32_1 = arith.constant 0 : i32
    return %c0_i32, %c0_i32_0 : i32, i32
  }
  func.func @transform_11(%arg0: i32, %arg1: i32) -> (i32, i32) {
    %c0_i32 = arith.constant 0 : i32
    %c0_i32_0 = arith.constant 0 : i32
    %c0_i32_1 = arith.constant 0 : i32
    return %c0_i32, %c0_i32_0 : i32, i32
  }
  func.func @transform_12(%arg0: i32, %arg1: i32) -> (i32, i32, i32) {
    %c0_i32 = arith.constant 0 : i32
    %c0_i32_0 = arith.constant 0 : i32
    %c0_i32_1 = arith.constant 0 : i32
    return %arg1, %c0_i32, %c0_i32_0 : i32, i32, i32
  }
  func.func @transform_13(%arg0: i32, %arg1: i32) -> (i32, i32, i32) {
    %c0_i32 = arith.constant 0 : i32
    %c0_i32_0 = arith.constant 0 : i32
    %c0_i32_1 = arith.constant 0 : i32
    return %arg1, %c0_i32, %c0_i32_0 : i32, i32, i32
  }
  func.func @transform_14(%arg0: i32, %arg1: i32) -> (i32, i32, i32) {
    %c0_i32 = arith.constant 0 : i32
    %c0_i32_0 = arith.constant 0 : i32
    %c0_i32_1 = arith.constant 0 : i32
    return %arg1, %c0_i32, %c0_i32_0 : i32, i32, i32
  }
  func.func @transform_15(%arg0: i32, %arg1: i32) -> (i32, i32, i32) {
    %c0_i32 = arith.constant 0 : i32
    %c0_i32_0 = arith.constant 0 : i32
    %c0_i32_1 = arith.constant 0 : i32
    return %arg1, %c0_i32, %c0_i32_0 : i32, i32, i32
  }
  func.func @transform_16(%arg0: i32, %arg1: i32) -> (i32, i32, i32) {
    %c0_i32 = arith.constant 0 : i32
    %c0_i32_0 = arith.constant 0 : i32
    %c0_i32_1 = arith.constant 0 : i32
    return %arg1, %c0_i32, %c0_i32_0 : i32, i32, i32
  }
  func.func @transform_17(%arg0: i32, %arg1: i32) -> (i32, i32, i32) {
    %c0_i32 = arith.constant 0 : i32
    %c0_i32_0 = arith.constant 0 : i32
    %c0_i32_1 = arith.constant 0 : i32
    return %arg1, %c0_i32, %c0_i32_0 : i32, i32, i32
  }
  func.func @transform_18(%arg0: i32, %arg1: i32) -> (i32, i32, i32) {
    %c0_i32 = arith.constant 0 : i32
    %c0_i32_0 = arith.constant 0 : i32
    %c0_i32_1 = arith.constant 0 : i32
    return %arg1, %c0_i32, %c0_i32_0 : i32, i32, i32
  }
  func.func @transform_19(%arg0: i32, %arg1: i32) -> (i32, i32, i32) {
    %c0_i32 = arith.constant 0 : i32
    %c0_i32_0 = arith.constant 0 : i32
    %c0_i32_1 = arith.constant 0 : i32
    return %arg1, %c0_i32, %c0_i32_0 : i32, i32, i32
  }
  func.func @transform_20(%arg0: i32, %arg1: i32) -> (i32, i32, i32) {
    %c0_i32 = arith.constant 0 : i32
    %c0_i32_0 = arith.constant 0 : i32
    %c0_i32_1 = arith.constant 0 : i32
    return %arg1, %c0_i32, %c0_i32_0 : i32, i32, i32
  }
  func.func @transform_21(%arg0: i32, %arg1: i32) -> (i32, i32, i32) {
    %c0_i32 = arith.constant 0 : i32
    %c0_i32_0 = arith.constant 0 : i32
    %c0_i32_1 = arith.constant 0 : i32
    return %arg1, %c0_i32, %c0_i32_0 : i32, i32, i32
  }
  func.func @transform_22(%arg0: i32, %arg1: i32) -> (i32, i32, i32) {
    %c0_i32 = arith.constant 0 : i32
    %c0_i32_0 = arith.constant 0 : i32
    %c0_i32_1 = arith.constant 0 : i32
    return %arg1, %c0_i32, %c0_i32_0 : i32, i32, i32
  }
  func.func @transform_23(%arg0: i32, %arg1: i32) -> (i32, i32, i32) {
    %c0_i32 = arith.constant 0 : i32
    %c0_i32_0 = arith.constant 0 : i32
    %c0_i32_1 = arith.constant 0 : i32
    return %arg1, %c0_i32, %c0_i32_0 : i32, i32, i32
  }
  func.func @transform_24(%arg0: i32, %arg1: i32) -> (i32, i32) {
    %c0_i32 = arith.constant 0 : i32
    %c0_i32_0 = arith.constant 0 : i32
    %c0_i32_1 = arith.constant 0 : i32
    return %c0_i32, %c0_i32_0 : i32, i32
  }
  func.func @transform_25(%arg0: i32, %arg1: i32) -> (i32, i32) {
    %c0_i32 = arith.constant 0 : i32
    %c0_i32_0 = arith.constant 0 : i32
    %c0_i32_1 = arith.constant 0 : i32
    return %c0_i32, %c0_i32_0 : i32, i32
  }
  func.func @transform_26(%arg0: i32, %arg1: i32) -> (i32, i32) {
    %c0_i32 = arith.constant 0 : i32
    %c0_i32_0 = arith.constant 0 : i32
    %c0_i32_1 = arith.constant 0 : i32
    return %c0_i32, %c0_i32_0 : i32, i32
  }
  func.func @transform_27(%arg0: i32, %arg1: i32) -> (i32, i32) {
    %c0_i32 = arith.constant 0 : i32
    %c0_i32_0 = arith.constant 0 : i32
    %c0_i32_1 = arith.constant 0 : i32
    return %c0_i32, %c0_i32_0 : i32, i32
  }
  func.func @transform_28(%arg0: i32, %arg1: i32) -> (i32, i32) {
    %c0_i32 = arith.constant 0 : i32
    %c0_i32_0 = arith.constant 0 : i32
    %c0_i32_1 = arith.constant 0 : i32
    return %c0_i32, %c0_i32_0 : i32, i32
  }
  func.func @transform_29(%arg0: i32, %arg1: i32) -> (i32, i32) {
    %c0_i32 = arith.constant 0 : i32
    %c0_i32_0 = arith.constant 0 : i32
    %c0_i32_1 = arith.constant 0 : i32
    return %c0_i32, %c0_i32_0 : i32, i32
  }
  func.func @transform_30(%arg0: i32, %arg1: i32) -> (i32, i32) {
    %c0_i32 = arith.constant 0 : i32
    %c0_i32_0 = arith.constant 0 : i32
    %c0_i32_1 = arith.constant 0 : i32
    return %c0_i32, %c0_i32_0 : i32, i32
  }
  func.func @transform_31(%arg0: i32, %arg1: i32) -> (i32, i32) {
    %c0_i32 = arith.constant 0 : i32
    %c0_i32_0 = arith.constant 0 : i32
    %c0_i32_1 = arith.constant 0 : i32
    return %c0_i32, %c0_i32_0 : i32, i32
  }
  func.func @transform_32(%arg0: i32, %arg1: i32) -> (i32, i32, i32) {
    %c0_i32 = arith.constant 0 : i32
    %c0_i32_0 = arith.constant 0 : i32
    %c0_i32_1 = arith.constant 0 : i32
    return %arg0, %c0_i32, %c0_i32_0 : i32, i32, i32
  }
  func.func @transform_33(%arg0: i32, %arg1: i32) -> (i32, i32, i32) {
    %c0_i32 = arith.constant 0 : i32
    %c0_i32_0 = arith.constant 0 : i32
    %c0_i32_1 = arith.constant 0 : i32
    return %arg0, %c0_i32, %c0_i32_0 : i32, i32, i32
  }
}

</mosaic_0001>

<llo_original>
// kernel: tpu_custom_call.1
$region0: #{tpu_custom_call.1}
  #allocation0 [shape = 'u32[]', space=smem, size = 0x4, offset = 0x4, fixed_abs, tag = 'smem constant byte address 0x4 - core index']
  #allocation1 [shape = 'u32[144,128]{1,0:T(1,128)}', space=vmem, size = 0x12000, scoped, tag = 'internal scratch']
  #allocation2 [shape = 'f32[8,64]{1,0:T(8,128)}', space=vmem, size = 0x1000, scoped, tag = 'scratch operand']
  #allocation3 [shape = 'f32[1,1]{1,0:T(1,128)S(1)}', space=vmem, size = 0x200, scoped, tag = 'scoped memory for tpu_custom_call.1']
  #allocation4 [shape = 'f32[1,1]{1,0:T(1,128)S(1)}', space=vmem, size = 0x200, scoped, tag = 'scoped memory for tpu_custom_call.1']
  %s0 = inlined_call_operand.smem [shape: u32[34], index: -1, kind: input, shape index: {}]
  %s1 = sld [smem:[%s0]]
  %s2 = scalar_lea.smem %s0, 1
  %s3 = sld [smem:[%s2]]
  %s4 = scalar_lea.smem %s0, 2
  %s5 = sld [smem:[%s4]]
  %s6 = scalar_lea.smem %s0, 3
  %s7 = sld [smem:[%s6]]
  %s8 = scalar_lea.smem %s0, 4
  %s9 = sld [smem:[%s8]]
  %s10 = scalar_lea.smem %s0, 5
  %s11 = sld [smem:[%s10]]
  %s12 = scalar_lea.smem %s0, 6
  %s13 = sld [smem:[%s12]]
  %s14 = scalar_lea.smem %s0, 7
  %s15 = sld [smem:[%s14]]
  %s16 = scalar_lea.smem %s0, 8
  %s17 = sld [smem:[%s16]]
  %s18 = scalar_lea.smem %s0, 9
  %s19 = sld [smem:[%s18]]
  %s20 = scalar_lea.smem %s0, 10
  %s21 = sld [smem:[%s20]]
  %s22 = scalar_lea.smem %s0, 11
  %s23 = sld [smem:[%s22]]
  %s24 = scalar_lea.smem %s0, 12
  %s25 = sld [smem:[%s24]]
  %s26 = scalar_lea.smem %s0, 13
  %s27 = sld [smem:[%s26]]
  %s28 = scalar_lea.smem %s0, 14
  %s29 = sld [smem:[%s28]]
  %s30 = scalar_lea.smem %s0, 15
  %s31 = sld [smem:[%s30]]
  %s32 = scalar_lea.smem %s0, 16
  %s33 = sld [smem:[%s32]]
  %s34 = scalar_lea.smem %s0, 17
  %s35 = sld [smem:[%s34]]
  %s36 = scalar_lea.smem %s0, 18
  %s37 = sld [smem:[%s36]]
  %s38 = scalar_lea.smem %s0, 19
  %s39 = sld [smem:[%s38]]
  %s40 = scalar_lea.smem %s0, 20
  %s41 = sld [smem:[%s40]]
  %s42 = scalar_lea.smem %s0, 21
  %s43 = sld [smem:[%s42]]
  %s44 = scalar_lea.smem %s0, 22
  %s45 = sld [smem:[%s44]]
  %s46 = scalar_lea.smem %s0, 23
  %s47 = sld [smem:[%s46]]
  %s48 = scalar_lea.smem %s0, 24
  %s49 = sld [smem:[%s48]]
  %s50 = scalar_lea.smem %s0, 25
  %s51 = sld [smem:[%s50]]
  %s52 = scalar_lea.smem %s0, 26
  %s53 = sld [smem:[%s52]]
  %s54 = scalar_lea.smem %s0, 27
  %s55 = sld [smem:[%s54]]
  %s56 = scalar_lea.smem %s0, 28
  %s57 = sld [smem:[%s56]]
  %s58 = scalar_lea.smem %s0, 29
  %s59 = sld [smem:[%s58]]
  %s60 = scalar_lea.smem %s0, 30
  %s61 = sld [smem:[%s60]]
  %s62 = scalar_lea.smem %s0, 31
  %s63 = sld [smem:[%s62]]
  %s64 = scalar_lea.smem %s0, 32
  %s65 = sld [smem:[%s64]]
  %s66 = scalar_lea.smem %s0, 33
  %s67 = sld [smem:[%s66]]
  %68 = xla_tuple %s65, %s67
  %s69 = sld [smem:[#allocation0]]
  $region177: #{tpu_custom_call.1} parent=0
    _
  %s71 = ssub.s32 1, %s69
  %s72 = scalar_select 0, %s71, %s69
  %v73 = vstv %s55
  %74 = vst [vmem:[#allocation3] sm:$0x1] %v73
  %v75 = vstv %s63
  %76 = vst [vmem:[#allocation4] sm:$0x1] %v75
  loop: start=0, step=1, limit=6
  $region2: #{tpu_custom_call.1} parent=0 // loop_pre_header
    _
  $region3: #{tpu_custom_call.1} parent=0 // loop_header
    %s78 = sphi 0, %s82
    %p79 = scmp.ge.s32.totalorder %s78, 6
    %s85 = sphi 0, %s97
    %s86 = sphi 0, %s93
    %s87 = sphi 0, %s85
    %s88 = sphi 0, %s86
    %s89 = sphi 0, %s87
    %s90 = sphi 0, %s88
    %s100 = sphi 0, %s102
    %s103 = sphi 0, %s100
    %s104 = sphi 0, %s103
    %s120 = sphi 0, %s104
    %s126 = sphi 0, %s128
    %s129 = sphi 0, %s126
    %s130 = sphi 0, %s129
    %s146 = sphi 0, %s130
    %s150 = sphi 0, %s150
    %s152 = sphi 0, %s150
    %s153 = sphi 0, %s152
    %s167 = sphi 0, %s153
    %s171 = sphi 0, %s171
    %s173 = sphi 0, %s171
    %s174 = sphi 0, %s173
    %s188 = sphi 0, %s174
    %s192 = sphi 0, %s192
    %s194 = sphi 0, %s192
    %s195 = sphi 0, %s194
    %s209 = sphi 0, %s195
    %s213 = sphi 0, %s213
    %s215 = sphi 0, %s213
    %s216 = sphi 0, %s215
    %s230 = sphi 0, %s216
    %s234 = sphi 0, %s234
    %s236 = sphi 0, %s234
    %s237 = sphi 0, %s236
    %s251 = sphi 0, %s237
    %s255 = sphi 0, %s255
    %s257 = sphi 0, %s255
    %s258 = sphi 0, %s257
    %s272 = sphi 0, %s258
    %s276 = sphi 0, %s276
    %s278 = sphi 0, %s276
    %s279 = sphi 0, %s278
    %s293 = sphi 0, %s279
    %s297 = sphi 0, %s297
    %s299 = sphi 0, %s297
    %s300 = sphi 0, %s299
    %s314 = sphi 0, %s300
    %s318 = sphi 0, %s318
    %s320 = sphi 0, %s318
    %s321 = sphi 0, %s320
    %s335 = sphi 0, %s321
    %s339 = sphi 0, %s339
    %s341 = sphi 0, %s339
    %s342 = sphi 0, %s341
    %s356 = sphi 0, %s342
    %s362 = sphi 0, %s364
    %s365 = sphi 0, %s362
    %s366 = sphi 0, %s365
    %s382 = sphi 0, %s366
    %s388 = sphi 0, %s390
    %s391 = sphi 0, %s388
    %s392 = sphi 0, %s391
    %s408 = sphi 0, %s392
    %s414 = sphi 0, %s416
    %s417 = sphi 0, %s414
    %s418 = sphi 0, %s417
    %s434 = sphi 0, %s418
    %s440 = sphi 0, %s442
    %s443 = sphi 0, %s440
    %s444 = sphi 0, %s443
    %s460 = sphi 0, %s444
    %s466 = sphi 0, %s468
    %s469 = sphi 0, %s466
    %s470 = sphi 0, %s469
    %s486 = sphi 0, %s470
    %s492 = sphi 0, %s494
    %s495 = sphi 0, %s492
    %s496 = sphi 0, %s495
    %s512 = sphi 0, %s496
    %s518 = sphi 0, %s520
    %s521 = sphi 0, %s518
    %s522 = sphi 0, %s521
    %s538 = sphi 0, %s522
    %s544 = sphi 0, %s546
    %s547 = sphi 0, %s544
    %s548 = sphi 0, %s547
    %s564 = sphi 0, %s548
    %s570 = sphi 0, %s572
    %s573 = sphi 0, %s570
    %s574 = sphi 0, %s573
    %s590 = sphi 0, %s574
    %s596 = sphi 0, %s598
    %s599 = sphi 0, %s596
    %s600 = sphi 0, %s599
    %s616 = sphi 0, %s600
    %s622 = sphi 0, %s624
    %s625 = sphi 0, %s622
    %s626 = sphi 0, %s625
    %s642 = sphi 0, %s626
    %s648 = sphi 0, %s650
    %s651 = sphi 0, %s648
    %s652 = sphi 0, %s651
    %s668 = sphi 0, %s652
    %s672 = sphi 0, %s672
    %s674 = sphi 0, %s672
    %s675 = sphi 0, %s674
    %s689 = sphi 0, %s675
    %s693 = sphi 0, %s693
    %s695 = sphi 0, %s693
    %s696 = sphi 0, %s695
    %s710 = sphi 0, %s696
    %s714 = sphi 0, %s714
    %s716 = sphi 0, %s714
    %s717 = sphi 0, %s716
    %s731 = sphi 0, %s717
    %s735 = sphi 0, %s735
    %s737 = sphi 0, %s735
    %s738 = sphi 0, %s737
    %s752 = sphi 0, %s738
    %s756 = sphi 0, %s756
    %s758 = sphi 0, %s756
    %s759 = sphi 0, %s758
    %s773 = sphi 0, %s759
    %s777 = sphi 0, %s777
    %s779 = sphi 0, %s777
    %s780 = sphi 0, %s779
    %s794 = sphi 0, %s780
    %s798 = sphi 0, %s798
    %s800 = sphi 0, %s798
    %s801 = sphi 0, %s800
    %s815 = sphi 0, %s801
    %s819 = sphi 0, %s819
    %s821 = sphi 0, %s819
    %s822 = sphi 0, %s821
    %s836 = sphi 0, %s822
    %s842 = sphi 0, %s844
    %s845 = sphi 0, %s842
    %s846 = sphi 0, %s845
    %s862 = sphi 0, %s846
    %s868 = sphi 0, %s870
    %s871 = sphi 0, %s868
    %s872 = sphi 0, %s871
    %s888 = sphi 0, %s872
  $region4: #{tpu_custom_call.1} parent=0 // loop_header_branch
    %81 = sbr.rel (%p79) target = $region8
  $region5: #{tpu_custom_call.1} parent=0 // loop_body
    %s83 = ssub.s32 %s78, 1
    %s84 = ssub.s32 %s78, 2
    %s91 = sadd.s32 1, %s86
    %p92 = scmp.ge.s32.totalorder %s91, 2
    %s93 = scalar_select %p92, 0, %s91
    %s94 = sadd.s32 1, %s85
    %s95 = scalar_select %p92, %s94, %s85
    %p96 = scmp.ge.s32.totalorder %s95, 2
    %s97 = scalar_select %p96, 0, %s95
    %s98 = ssub.s32 %s85, %s97
    %p99 = scmp.eq.s32.totalorder %s98, 0
    %s101 = sadd.s32 %s100, 1
    %s102 = scalar_select %p99, %s100, %s101
    %p105 = pneg %p99
    %p106 = scmp.eq.s32.totalorder %s78, 3
    %p107 = por %p105, %p106
    %p108 = scmp.ne.s32.totalorder %s100, %s103
    %p109 = scmp.eq.s32.totalorder %s78, 0
    %p110 = por %p108, %p109
    %p111 = scmp.ne.s32.totalorder %s100, %s103
    %p112 = scmp.eq.s32.totalorder %s83, 3
    %p113 = por %p111, %p112
    %p114 = scmp.ne.s32.totalorder %s103, %s104
    %p115 = scmp.eq.s32.totalorder %s83, 0
    %p116 = por %p114, %p115
    %p117 = scmp.ne.s32.totalorder %s103, %s104
    %p118 = scmp.eq.s32.totalorder %s84, 3
    %p119 = por %p117, %p118
    %p121 = scmp.ne.s32.totalorder %s104, %s120
    %p122 = scmp.eq.s32.totalorder %s84, 0
    %p123 = por %p121, %p122
    %s124 = ssub.s32 %s85, %s97
    %p125 = scmp.eq.s32.totalorder %s124, 0
    %s127 = sadd.s32 %s126, 1
    %s128 = scalar_select %p125, %s126, %s127
    %p131 = pneg %p125
    %p132 = scmp.eq.s32.totalorder %s78, 3
    %p133 = por %p131, %p132
    %p134 = scmp.ne.s32.totalorder %s126, %s129
    %p135 = scmp.eq.s32.totalorder %s78, 0
    %p136 = por %p134, %p135
    %p137 = scmp.ne.s32.totalorder %s126, %s129
    %p138 = scmp.eq.s32.totalorder %s83, 3
    %p139 = por %p137, %p138
    %p140 = scmp.ne.s32.totalorder %s129, %s130
    %p141 = scmp.eq.s32.totalorder %s83, 0
    %p142 = por %p140, %p141
    %p143 = scmp.ne.s32.totalorder %s129, %s130
    %p144 = scmp.eq.s32.totalorder %s84, 3
    %p145 = por %p143, %p144
    %p147 = scmp.ne.s32.totalorder %s130, %s146
    %p148 = scmp.eq.s32.totalorder %s84, 0
    %p149 = por %p147, %p148
    %s151 = sadd.s32 %s150, 1
    %p154 = scmp.eq.s32.totalorder %s78, 3
    %p155 = scmp.ne.s32.totalorder %s150, %s152
    %p156 = scmp.eq.s32.totalorder %s78, 0
    %p157 = por %p155, %p156
    %p158 = scmp.ne.s32.totalorder %s150, %s152
    %p159 = scmp.eq.s32.totalorder %s83, 3
    %p160 = por %p158, %p159
    %p161 = scmp.ne.s32.totalorder %s152, %s153
    %p162 = scmp.eq.s32.totalorder %s83, 0
    %p163 = por %p161, %p162
    %p164 = scmp.ne.s32.totalorder %s152, %s153
    %p165 = scmp.eq.s32.totalorder %s84, 3
    %p166 = por %p164, %p165
    %p168 = scmp.ne.s32.totalorder %s153, %s167
    %p169 = scmp.eq.s32.totalorder %s84, 0
    %p170 = por %p168, %p169
    %s172 = sadd.s32 %s171, 1
    %p175 = scmp.eq.s32.totalorder %s78, 3
    %p176 = scmp.ne.s32.totalorder %s171, %s173
    %p177 = scmp.eq.s32.totalorder %s78, 0
    %p178 = por %p176, %p177
    %p179 = scmp.ne.s32.totalorder %s171, %s173
    %p180 = scmp.eq.s32.totalorder %s83, 3
    %p181 = por %p179, %p180
    %p182 = scmp.ne.s32.totalorder %s173, %s174
    %p183 = scmp.eq.s32.totalorder %s83, 0
    %p184 = por %p182, %p183
    %p185 = scmp.ne.s32.totalorder %s173, %s174
    %p186 = scmp.eq.s32.totalorder %s84, 3
    %p187 = por %p185, %p186
    %p189 = scmp.ne.s32.totalorder %s174, %s188
    %p190 = scmp.eq.s32.totalorder %s84, 0
    %p191 = por %p189, %p190
    %s193 = sadd.s32 %s192, 1
    %p196 = scmp.eq.s32.totalorder %s78, 3
    %p197 = scmp.ne.s32.totalorder %s192, %s194
    %p198 = scmp.eq.s32.totalorder %s78, 0
    %p199 = por %p197, %p198
    %p200 = scmp.ne.s32.totalorder %s192, %s194
    %p201 = scmp.eq.s32.totalorder %s83, 3
    %p202 = por %p200, %p201
    %p203 = scmp.ne.s32.totalorder %s194, %s195
    %p204 = scmp.eq.s32.totalorder %s83, 0
    %p205 = por %p203, %p204
    %p206 = scmp.ne.s32.totalorder %s194, %s195
    %p207 = scmp.eq.s32.totalorder %s84, 3
    %p208 = por %p206, %p207
    %p210 = scmp.ne.s32.totalorder %s195, %s209
    %p211 = scmp.eq.s32.totalorder %s84, 0
    %p212 = por %p210, %p211
    %s214 = sadd.s32 %s213, 1
    %p217 = scmp.eq.s32.totalorder %s78, 3
    %p218 = scmp.ne.s32.totalorder %s213, %s215
    %p219 = scmp.eq.s32.totalorder %s78, 0
    %p220 = por %p218, %p219
    %p221 = scmp.ne.s32.totalorder %s213, %s215
    %p222 = scmp.eq.s32.totalorder %s83, 3
    %p223 = por %p221, %p222
    %p224 = scmp.ne.s32.totalorder %s215, %s216
    %p225 = scmp.eq.s32.totalorder %s83, 0
    %p226 = por %p224, %p225
    %p227 = scmp.ne.s32.totalorder %s215, %s216
    %p228 = scmp.eq.s32.totalorder %s84, 3
    %p229 = por %p227, %p228
    %p231 = scmp.ne.s32.totalorder %s216, %s230
    %p232 = scmp.eq.s32.totalorder %s84, 0
    %p233 = por %p231, %p232
    %s235 = sadd.s32 %s234, 1
    %p238 = scmp.eq.s32.totalorder %s78, 3
    %p239 = scmp.ne.s32.totalorder %s234, %s236
    %p240 = scmp.eq.s32.totalorder %s78, 0
    %p241 = por %p239, %p240
    %p242 = scmp.ne.s32.totalorder %s234, %s236
    %p243 = scmp.eq.s32.totalorder %s83, 3
    %p244 = por %p242, %p243
    %p245 = scmp.ne.s32.totalorder %s236, %s237
    %p246 = scmp.eq.s32.totalorder %s83, 0
    %p247 = por %p245, %p246
    %p248 = scmp.ne.s32.totalorder %s236, %s237
    %p249 = scmp.eq.s32.totalorder %s84, 3
    %p250 = por %p248, %p249
    %p252 = scmp.ne.s32.totalorder %s237, %s251
    %p253 = scmp.eq.s32.totalorder %s84, 0
    %p254 = por %p252, %p253
    %s256 = sadd.s32 %s255, 1
    %p259 = scmp.eq.s32.totalorder %s78, 3
    %p260 = scmp.ne.s32.totalorder %s255, %s257
    %p261 = scmp.eq.s32.totalorder %s78, 0
    %p262 = por %p260, %p261
    %p263 = scmp.ne.s32.totalorder %s255, %s257
    %p264 = scmp.eq.s32.totalorder %s83, 3
    %p265 = por %p263, %p264
    %p266 = scmp.ne.s32.totalorder %s257, %s258
    %p267 = scmp.eq.s32.totalorder %s83, 0
    %p268 = por %p266, %p267
    %p269 = scmp.ne.s32.totalorder %s257, %s258
    %p270 = scmp.eq.s32.totalorder %s84, 3
    %p271 = por %p269, %p270
    %p273 = scmp.ne.s32.totalorder %s258, %s272
    %p274 = scmp.eq.s32.totalorder %s84, 0
    %p275 = por %p273, %p274
    %s277 = sadd.s32 %s276, 1
    %p280 = scmp.eq.s32.totalorder %s78, 3
    %p281 = scmp.ne.s32.totalorder %s276, %s278
    %p282 = scmp.eq.s32.totalorder %s78, 0
    %p283 = por %p281, %p282
    %p284 = scmp.ne.s32.totalorder %s276, %s278
    %p285 = scmp.eq.s32.totalorder %s83, 3
    %p286 = por %p284, %p285
    %p287 = scmp.ne.s32.totalorder %s278, %s279
    %p288 = scmp.eq.s32.totalorder %s83, 0
    %p289 = por %p287, %p288
    %p290 = scmp.ne.s32.totalorder %s278, %s279
    %p291 = scmp.eq.s32.totalorder %s84, 3
    %p292 = por %p290, %p291
    %p294 = scmp.ne.s32.totalorder %s279, %s293
    %p295 = scmp.eq.s32.totalorder %s84, 0
    %p296 = por %p294, %p295
    %s298 = sadd.s32 %s297, 1
    %p301 = scmp.eq.s32.totalorder %s78, 3
    %p302 = scmp.ne.s32.totalorder %s297, %s299
    %p303 = scmp.eq.s32.totalorder %s78, 0
    %p304 = por %p302, %p303
    %p305 = scmp.ne.s32.totalorder %s297, %s299
    %p306 = scmp.eq.s32.totalorder %s83, 3
    %p307 = por %p305, %p306
    %p308 = scmp.ne.s32.totalorder %s299, %s300
    %p309 = scmp.eq.s32.totalorder %s83, 0
    %p310 = por %p308, %p309
    %p311 = scmp.ne.s32.totalorder %s299, %s300
    %p312 = scmp.eq.s32.totalorder %s84, 3
    %p313 = por %p311, %p312
    %p315 = scmp.ne.s32.totalorder %s300, %s314
    %p316 = scmp.eq.s32.totalorder %s84, 0
    %p317 = por %p315, %p316
    %s319 = sadd.s32 %s318, 1
    %p322 = scmp.eq.s32.totalorder %s78, 3
    %p323 = scmp.ne.s32.totalorder %s318, %s320
    %p324 = scmp.eq.s32.totalorder %s78, 0
    %p325 = por %p323, %p324
    %p326 = scmp.ne.s32.totalorder %s318, %s320
    %p327 = scmp.eq.s32.totalorder %s83, 3
    %p328 = por %p326, %p327
    %p329 = scmp.ne.s32.totalorder %s320, %s321
    %p330 = scmp.eq.s32.totalorder %s83, 0
    %p331 = por %p329, %p330
    %p332 = scmp.ne.s32.totalorder %s320, %s321
    %p333 = scmp.eq.s32.totalorder %s84, 3
    %p334 = por %p332, %p333
    %p336 = scmp.ne.s32.totalorder %s321, %s335
    %p337 = scmp.eq.s32.totalorder %s84, 0
    %p338 = por %p336, %p337
    %s340 = sadd.s32 %s339, 1
    %p343 = scmp.eq.s32.totalorder %s78, 3
    %p344 = scmp.ne.s32.totalorder %s339, %s341
    %p345 = scmp.eq.s32.totalorder %s78, 0
    %p346 = por %p344, %p345
    %p347 = scmp.ne.s32.totalorder %s339, %s341
    %p348 = scmp.eq.s32.totalorder %s83, 3
    %p349 = por %p347, %p348
    %p350 = scmp.ne.s32.totalorder %s341, %s342
    %p351 = scmp.eq.s32.totalorder %s83, 0
    %p352 = por %p350, %p351
    %p353 = scmp.ne.s32.totalorder %s341, %s342
    %p354 = scmp.eq.s32.totalorder %s84, 3
    %p355 = por %p353, %p354
    %p357 = scmp.ne.s32.totalorder %s342, %s356
    %p358 = scmp.eq.s32.totalorder %s84, 0
    %p359 = por %p357, %p358
    %s360 = ssub.s32 %s86, %s93
    %p361 = scmp.eq.s32.totalorder %s360, 0
    %s363 = sadd.s32 %s362, 1
    %s364 = scalar_select %p361, %s362, %s363
    %p367 = pneg %p361
    %p368 = scmp.eq.s32.totalorder %s78, 3
    %p369 = por %p367, %p368
    %p370 = scmp.ne.s32.totalorder %s362, %s365
    %p371 = scmp.eq.s32.totalorder %s78, 0
    %p372 = por %p370, %p371
    %p373 = scmp.ne.s32.totalorder %s362, %s365
    %p374 = scmp.eq.s32.totalorder %s83, 3
    %p375 = por %p373, %p374
    %p376 = scmp.ne.s32.totalorder %s365, %s366
    %p377 = scmp.eq.s32.totalorder %s83, 0
    %p378 = por %p376, %p377
    %p379 = scmp.ne.s32.totalorder %s365, %s366
    %p380 = scmp.eq.s32.totalorder %s84, 3
    %p381 = por %p379, %p380
    %p383 = scmp.ne.s32.totalorder %s366, %s382
    %p384 = scmp.eq.s32.totalorder %s84, 0
    %p385 = por %p383, %p384
    %s386 = ssub.s32 %s86, %s93
    %p387 = scmp.eq.s32.totalorder %s386, 0
    %s389 = sadd.s32 %s388, 1
    %s390 = scalar_select %p387, %s388, %s389
    %p393 = pneg %p387
    %p394 = scmp.eq.s32.totalorder %s78, 3
    %p395 = por %p393, %p394
    %p396 = scmp.ne.s32.totalorder %s388, %s391
    %p397 = scmp.eq.s32.totalorder %s78, 0
    %p398 = por %p396, %p397
    %p399 = scmp.ne.s32.totalorder %s388, %s391
    %p400 = scmp.eq.s32.totalorder %s83, 3
    %p401 = por %p399, %p400
    %p402 = scmp.ne.s32.totalorder %s391, %s392
    %p403 = scmp.eq.s32.totalorder %s83, 0
    %p404 = por %p402, %p403
    %p405 = scmp.ne.s32.totalorder %s391, %s392
    %p406 = scmp.eq.s32.totalorder %s84, 3
    %p407 = por %p405, %p406
    %p409 = scmp.ne.s32.totalorder %s392, %s408
    %p410 = scmp.eq.s32.totalorder %s84, 0
    %p411 = por %p409, %p410
    %s412 = ssub.s32 %s86, %s93
    %p413 = scmp.eq.s32.totalorder %s412, 0
    %s415 = sadd.s32 %s414, 1
    %s416 = scalar_select %p413, %s414, %s415
    %p419 = pneg %p413
    %p420 = scmp.eq.s32.totalorder %s78, 3
    %p421 = por %p419, %p420
    %p422 = scmp.ne.s32.totalorder %s414, %s417
    %p423 = scmp.eq.s32.totalorder %s78, 0
    %p424 = por %p422, %p423
    %p425 = scmp.ne.s32.totalorder %s414, %s417
    %p426 = scmp.eq.s32.totalorder %s83, 3
    %p427 = por %p425, %p426
    %p428 = scmp.ne.s32.totalorder %s417, %s418
    %p429 = scmp.eq.s32.totalorder %s83, 0
    %p430 = por %p428, %p429
    %p431 = scmp.ne.s32.totalorder %s417, %s418
    %p432 = scmp.eq.s32.totalorder %s84, 3
    %p433 = por %p431, %p432
    %p435 = scmp.ne.s32.totalorder %s418, %s434
    %p436 = scmp.eq.s32.totalorder %s84, 0
    %p437 = por %p435, %p436
    %s438 = ssub.s32 %s86, %s93
    %p439 = scmp.eq.s32.totalorder %s438, 0
    %s441 = sadd.s32 %s440, 1
    %s442 = scalar_select %p439, %s440, %s441
    %p445 = pneg %p439
    %p446 = scmp.eq.s32.totalorder %s78, 3
    %p447 = por %p445, %p446
    %p448 = scmp.ne.s32.totalorder %s440, %s443
    %p449 = scmp.eq.s32.totalorder %s78, 0
    %p450 = por %p448, %p449
    %p451 = scmp.ne.s32.totalorder %s440, %s443
    %p452 = scmp.eq.s32.totalorder %s83, 3
    %p453 = por %p451, %p452
    %p454 = scmp.ne.s32.totalorder %s443, %s444
    %p455 = scmp.eq.s32.totalorder %s83, 0
    %p456 = por %p454, %p455
    %p457 = scmp.ne.s32.totalorder %s443, %s444
    %p458 = scmp.eq.s32.totalorder %s84, 3
    %p459 = por %p457, %p458
    %p461 = scmp.ne.s32.totalorder %s444, %s460
    %p462 = scmp.eq.s32.totalorder %s84, 0
    %p463 = por %p461, %p462
    %s464 = ssub.s32 %s86, %s93
    %p465 = scmp.eq.s32.totalorder %s464, 0
    %s467 = sadd.s32 %s466, 1
    %s468 = scalar_select %p465, %s466, %s467
    %p471 = pneg %p465
    %p472 = scmp.eq.s32.totalorder %s78, 3
    %p473 = por %p471, %p472
    %p474 = scmp.ne.s32.totalorder %s466, %s469
    %p475 = scmp.eq.s32.totalorder %s78, 0
    %p476 = por %p474, %p475
    %p477 = scmp.ne.s32.totalorder %s466, %s469
    %p478 = scmp.eq.s32.totalorder %s83, 3
    %p479 = por %p477, %p478
    %p480 = scmp.ne.s32.totalorder %s469, %s470
    %p481 = scmp.eq.s32.totalorder %s83, 0
    %p482 = por %p480, %p481
    %p483 = scmp.ne.s32.totalorder %s469, %s470
    %p484 = scmp.eq.s32.totalorder %s84, 3
    %p485 = por %p483, %p484
    %p487 = scmp.ne.s32.totalorder %s470, %s486
    %p488 = scmp.eq.s32.totalorder %s84, 0
    %p489 = por %p487, %p488
    %s490 = ssub.s32 %s86, %s93
    %p491 = scmp.eq.s32.totalorder %s490, 0
    %s493 = sadd.s32 %s492, 1
    %s494 = scalar_select %p491, %s492, %s493
    %p497 = pneg %p491
    %p498 = scmp.eq.s32.totalorder %s78, 3
    %p499 = por %p497, %p498
    %p500 = scmp.ne.s32.totalorder %s492, %s495
    %p501 = scmp.eq.s32.totalorder %s78, 0
    %p502 = por %p500, %p501
    %p503 = scmp.ne.s32.totalorder %s492, %s495
    %p504 = scmp.eq.s32.totalorder %s83, 3
    %p505 = por %p503, %p504
    %p506 = scmp.ne.s32.totalorder %s495, %s496
    %p507 = scmp.eq.s32.totalorder %s83, 0
    %p508 = por %p506, %p507
    %p509 = scmp.ne.s32.totalorder %s495, %s496
    %p510 = scmp.eq.s32.totalorder %s84, 3
    %p511 = por %p509, %p510
    %p513 = scmp.ne.s32.totalorder %s496, %s512
    %p514 = scmp.eq.s32.totalorder %s84, 0
    %p515 = por %p513, %p514
    %s516 = ssub.s32 %s86, %s93
    %p517 = scmp.eq.s32.totalorder %s516, 0
    %s519 = sadd.s32 %s518, 1
    %s520 = scalar_select %p517, %s518, %s519
    %p523 = pneg %p517
    %p524 = scmp.eq.s32.totalorder %s78, 3
    %p525 = por %p523, %p524
    %p526 = scmp.ne.s32.totalorder %s518, %s521
    %p527 = scmp.eq.s32.totalorder %s78, 0
    %p528 = por %p526, %p527
    %p529 = scmp.ne.s32.totalorder %s518, %s521
    %p530 = scmp.eq.s32.totalorder %s83, 3
    %p531 = por %p529, %p530
    %p532 = scmp.ne.s32.totalorder %s521, %s522
    %p533 = scmp.eq.s32.totalorder %s83, 0
    %p534 = por %p532, %p533
    %p535 = scmp.ne.s32.totalorder %s521, %s522
    %p536 = scmp.eq.s32.totalorder %s84, 3
    %p537 = por %p535, %p536
    %p539 = scmp.ne.s32.totalorder %s522, %s538
    %p540 = scmp.eq.s32.totalorder %s84, 0
    %p541 = por %p539, %p540
    %s542 = ssub.s32 %s86, %s93
    %p543 = scmp.eq.s32.totalorder %s542, 0
    %s545 = sadd.s32 %s544, 1
    %s546 = scalar_select %p543, %s544, %s545
    %p549 = pneg %p543
    %p550 = scmp.eq.s32.totalorder %s78, 3
    %p551 = por %p549, %p550
    %p552 = scmp.ne.s32.totalorder %s544, %s547
    %p553 = scmp.eq.s32.totalorder %s78, 0
    %p554 = por %p552, %p553
    %p555 = scmp.ne.s32.totalorder %s544, %s547
    %p556 = scmp.eq.s32.totalorder %s83, 3
    %p557 = por %p555, %p556
    %p558 = scmp.ne.s32.totalorder %s547, %s548
    %p559 = scmp.eq.s32.totalorder %s83, 0
    %p560 = por %p558, %p559
    %p561 = scmp.ne.s32.totalorder %s547, %s548
    %p562 = scmp.eq.s32.totalorder %s84, 3
    %p563 = por %p561, %p562
    %p565 = scmp.ne.s32.totalorder %s548, %s564
    %p566 = scmp.eq.s32.totalorder %s84, 0
    %p567 = por %p565, %p566
    %s568 = ssub.s32 %s86, %s93
    %p569 = scmp.eq.s32.totalorder %s568, 0
    %s571 = sadd.s32 %s570, 1
    %s572 = scalar_select %p569, %s570, %s571
    %p575 = pneg %p569
    %p576 = scmp.eq.s32.totalorder %s78, 3
    %p577 = por %p575, %p576
    %p578 = scmp.ne.s32.totalorder %s570, %s573
    %p579 = scmp.eq.s32.totalorder %s78, 0
    %p580 = por %p578, %p579
    %p581 = scmp.ne.s32.totalorder %s570, %s573
    %p582 = scmp.eq.s32.totalorder %s83, 3
    %p583 = por %p581, %p582
    %p584 = scmp.ne.s32.totalorder %s573, %s574
    %p585 = scmp.eq.s32.totalorder %s83, 0
    %p586 = por %p584, %p585
    %p587 = scmp.ne.s32.totalorder %s573, %s574
    %p588 = scmp.eq.s32.totalorder %s84, 3
    %p589 = por %p587, %p588
    %p591 = scmp.ne.s32.totalorder %s574, %s590
    %p592 = scmp.eq.s32.totalorder %s84, 0
    %p593 = por %p591, %p592
    %s594 = ssub.s32 %s86, %s93
    %p595 = scmp.eq.s32.totalorder %s594, 0
    %s597 = sadd.s32 %s596, 1
    %s598 = scalar_select %p595, %s596, %s597
    %p601 = pneg %p595
    %p602 = scmp.eq.s32.totalorder %s78, 3
    %p603 = por %p601, %p602
    %p604 = scmp.ne.s32.totalorder %s596, %s599
    %p605 = scmp.eq.s32.totalorder %s78, 0
    %p606 = por %p604, %p605
    %p607 = scmp.ne.s32.totalorder %s596, %s599
    %p608 = scmp.eq.s32.totalorder %s83, 3
    %p609 = por %p607, %p608
    %p610 = scmp.ne.s32.totalorder %s599, %s600
    %p611 = scmp.eq.s32.totalorder %s83, 0
    %p612 = por %p610, %p611
    %p613 = scmp.ne.s32.totalorder %s599, %s600
    %p614 = scmp.eq.s32.totalorder %s84, 3
    %p615 = por %p613, %p614
    %p617 = scmp.ne.s32.totalorder %s600, %s616
    %p618 = scmp.eq.s32.totalorder %s84, 0
    %p619 = por %p617, %p618
    %s620 = ssub.s32 %s86, %s93
    %p621 = scmp.eq.s32.totalorder %s620, 0
    %s623 = sadd.s32 %s622, 1
    %s624 = scalar_select %p621, %s622, %s623
    %p627 = pneg %p621
    %p628 = scmp.eq.s32.totalorder %s78, 3
    %p629 = por %p627, %p628
    %p630 = scmp.ne.s32.totalorder %s622, %s625
    %p631 = scmp.eq.s32.totalorder %s78, 0
    %p632 = por %p630, %p631
    %p633 = scmp.ne.s32.totalorder %s622, %s625
    %p634 = scmp.eq.s32.totalorder %s83, 3
    %p635 = por %p633, %p634
    %p636 = scmp.ne.s32.totalorder %s625, %s626
    %p637 = scmp.eq.s32.totalorder %s83, 0
    %p638 = por %p636, %p637
    %p639 = scmp.ne.s32.totalorder %s625, %s626
    %p640 = scmp.eq.s32.totalorder %s84, 3
    %p641 = por %p639, %p640
    %p643 = scmp.ne.s32.totalorder %s626, %s642
    %p644 = scmp.eq.s32.totalorder %s84, 0
    %p645 = por %p643, %p644
    %s646 = ssub.s32 %s86, %s93
    %p647 = scmp.eq.s32.totalorder %s646, 0
    %s649 = sadd.s32 %s648, 1
    %s650 = scalar_select %p647, %s648, %s649
    %p653 = pneg %p647
    %p654 = scmp.eq.s32.totalorder %s78, 3
    %p655 = por %p653, %p654
    %p656 = scmp.ne.s32.totalorder %s648, %s651
    %p657 = scmp.eq.s32.totalorder %s78, 0
    %p658 = por %p656, %p657
    %p659 = scmp.ne.s32.totalorder %s648, %s651
    %p660 = scmp.eq.s32.totalorder %s83, 3
    %p661 = por %p659, %p660
    %p662 = scmp.ne.s32.totalorder %s651, %s652
    %p663 = scmp.eq.s32.totalorder %s83, 0
    %p664 = por %p662, %p663
    %p665 = scmp.ne.s32.totalorder %s651, %s652
    %p666 = scmp.eq.s32.totalorder %s84, 3
    %p667 = por %p665, %p666
    %p669 = scmp.ne.s32.totalorder %s652, %s668
    %p670 = scmp.eq.s32.totalorder %s84, 0
    %p671 = por %p669, %p670
    %s673 = sadd.s32 %s672, 1
    %p676 = scmp.eq.s32.totalorder %s78, 3
    %p677 = scmp.ne.s32.totalorder %s672, %s674
    %p678 = scmp.eq.s32.totalorder %s78, 0
    %p679 = por %p677, %p678
    %p680 = scmp.ne.s32.totalorder %s672, %s674
    %p681 = scmp.eq.s32.totalorder %s83, 3
    %p682 = por %p680, %p681
    %p683 = scmp.ne.s32.totalorder %s674, %s675
    %p684 = scmp.eq.s32.totalorder %s83, 0
    %p685 = por %p683, %p684
    %p686 = scmp.ne.s32.totalorder %s674, %s675
    %p687 = scmp.eq.s32.totalorder %s84, 3
    %p688 = por %p686, %p687
    %p690 = scmp.ne.s32.totalorder %s675, %s689
    %p691 = scmp.eq.s32.totalorder %s84, 0
    %p692 = por %p690, %p691
    %s694 = sadd.s32 %s693, 1
    %p697 = scmp.eq.s32.totalorder %s78, 3
    %p698 = scmp.ne.s32.totalorder %s693, %s695
    %p699 = scmp.eq.s32.totalorder %s78, 0
    %p700 = por %p698, %p699
    %p701 = scmp.ne.s32.totalorder %s693, %s695
    %p702 = scmp.eq.s32.totalorder %s83, 3
    %p703 = por %p701, %p702
    %p704 = scmp.ne.s32.totalorder %s695, %s696
    %p705 = scmp.eq.s32.totalorder %s83, 0
    %p706 = por %p704, %p705
    %p707 = scmp.ne.s32.totalorder %s695, %s696
    %p708 = scmp.eq.s32.totalorder %s84, 3
    %p709 = por %p707, %p708
    %p711 = scmp.ne.s32.totalorder %s696, %s710
    %p712 = scmp.eq.s32.totalorder %s84, 0
    %p713 = por %p711, %p712
    %s715 = sadd.s32 %s714, 1
    %p718 = scmp.eq.s32.totalorder %s78, 3
    %p719 = scmp.ne.s32.totalorder %s714, %s716
    %p720 = scmp.eq.s32.totalorder %s78, 0
    %p721 = por %p719, %p720
    %p722 = scmp.ne.s32.totalorder %s714, %s716
    %p723 = scmp.eq.s32.totalorder %s83, 3
    %p724 = por %p722, %p723
    %p725 = scmp.ne.s32.totalorder %s716, %s717
    %p726 = scmp.eq.s32.totalorder %s83, 0
    %p727 = por %p725, %p726
    %p728 = scmp.ne.s32.totalorder %s716, %s717
    %p729 = scmp.eq.s32.totalorder %s84, 3
    %p730 = por %p728, %p729
    %p732 = scmp.ne.s32.totalorder %s717, %s731
    %p733 = scmp.eq.s32.totalorder %s84, 0
    %p734 = por %p732, %p733
    %s736 = sadd.s32 %s735, 1
    %p739 = scmp.eq.s32.totalorder %s78, 3
    %p740 = scmp.ne.s32.totalorder %s735, %s737
    %p741 = scmp.eq.s32.totalorder %s78, 0
    %p742 = por %p740, %p741
    %p743 = scmp.ne.s32.totalorder %s735, %s737
    %p744 = scmp.eq.s32.totalorder %s83, 3
    %p745 = por %p743, %p744
    %p746 = scmp.ne.s32.totalorder %s737, %s738
    %p747 = scmp.eq.s32.totalorder %s83, 0
    %p748 = por %p746, %p747
    %p749 = scmp.ne.s32.totalorder %s737, %s738
    %p750 = scmp.eq.s32.totalorder %s84, 3
    %p751 = por %p749, %p750
    %p753 = scmp.ne.s32.totalorder %s738, %s752
    %p754 = scmp.eq.s32.totalorder %s84, 0
    %p755 = por %p753, %p754
    %s757 = sadd.s32 %s756, 1
    %p760 = scmp.eq.s32.totalorder %s78, 3
    %p761 = scmp.ne.s32.totalorder %s756, %s758
    %p762 = scmp.eq.s32.totalorder %s78, 0
    %p763 = por %p761, %p762
    %p764 = scmp.ne.s32.totalorder %s756, %s758
    %p765 = scmp.eq.s32.totalorder %s83, 3
    %p766 = por %p764, %p765
    %p767 = scmp.ne.s32.totalorder %s758, %s759
    %p768 = scmp.eq.s32.totalorder %s83, 0
    %p769 = por %p767, %p768
    %p770 = scmp.ne.s32.totalorder %s758, %s759
    %p771 = scmp.eq.s32.totalorder %s84, 3
    %p772 = por %p770, %p771
    %p774 = scmp.ne.s32.totalorder %s759, %s773
    %p775 = scmp.eq.s32.totalorder %s84, 0
    %p776 = por %p774, %p775
    %s778 = sadd.s32 %s777, 1
    %p781 = scmp.eq.s32.totalorder %s78, 3
    %p782 = scmp.ne.s32.totalorder %s777, %s779
    %p783 = scmp.eq.s32.totalorder %s78, 0
    %p784 = por %p782, %p783
    %p785 = scmp.ne.s32.totalorder %s777, %s779
    %p786 = scmp.eq.s32.totalorder %s83, 3
    %p787 = por %p785, %p786
    %p788 = scmp.ne.s32.totalorder %s779, %s780
    %p789 = scmp.eq.s32.totalorder %s83, 0
    %p790 = por %p788, %p789
    %p791 = scmp.ne.s32.totalorder %s779, %s780
    %p792 = scmp.eq.s32.totalorder %s84, 3
    %p793 = por %p791, %p792
    %p795 = scmp.ne.s32.totalorder %s780, %s794
    %p796 = scmp.eq.s32.totalorder %s84, 0
    %p797 = por %p795, %p796
    %s799 = sadd.s32 %s798, 1
    %p802 = scmp.eq.s32.totalorder %s78, 3
    %p803 = scmp.ne.s32.totalorder %s798, %s800
    %p804 = scmp.eq.s32.totalorder %s78, 0
    %p805 = por %p803, %p804
    %p806 = scmp.ne.s32.totalorder %s798, %s800
    %p807 = scmp.eq.s32.totalorder %s83, 3
    %p808 = por %p806, %p807
    %p809 = scmp.ne.s32.totalorder %s800, %s801
    %p810 = scmp.eq.s32.totalorder %s83, 0
    %p811 = por %p809, %p810
    %p812 = scmp.ne.s32.totalorder %s800, %s801
    %p813 = scmp.eq.s32.totalorder %s84, 3
    %p814 = por %p812, %p813
    %p816 = scmp.ne.s32.totalorder %s801, %s815
    %p817 = scmp.eq.s32.totalorder %s84, 0
    %p818 = por %p816, %p817
    %s820 = sadd.s32 %s819, 1
    %p823 = scmp.eq.s32.totalorder %s78, 3
    %p824 = scmp.ne.s32.totalorder %s819, %s821
    %p825 = scmp.eq.s32.totalorder %s78, 0
    %p826 = por %p824, %p825
    %p827 = scmp.ne.s32.totalorder %s819, %s821
    %p828 = scmp.eq.s32.totalorder %s83, 3
    %p829 = por %p827, %p828
    %p830 = scmp.ne.s32.totalorder %s821, %s822
    %p831 = scmp.eq.s32.totalorder %s83, 0
    %p832 = por %p830, %p831
    %p833 = scmp.ne.s32.totalorder %s821, %s822
    %p834 = scmp.eq.s32.totalorder %s84, 3
    %p835 = por %p833, %p834
    %p837 = scmp.ne.s32.totalorder %s822, %s836
    %p838 = scmp.eq.s32.totalorder %s84, 0
    %p839 = por %p837, %p838
    %s840 = ssub.s32 %s85, %s97
    %p841 = scmp.eq.s32.totalorder %s840, 0
    %s843 = sadd.s32 %s842, 1
    %s844 = scalar_select %p841, %s842, %s843
    %p847 = pneg %p841
    %p848 = scmp.eq.s32.totalorder %s78, 3
    %p849 = por %p847, %p848
    %p850 = scmp.ne.s32.totalorder %s842, %s845
    %p851 = scmp.eq.s32.totalorder %s78, 0
    %p852 = por %p850, %p851
    %p853 = scmp.ne.s32.totalorder %s842, %s845
    %p854 = scmp.eq.s32.totalorder %s83, 3
    %p855 = por %p853, %p854
    %p856 = scmp.ne.s32.totalorder %s845, %s846
    %p857 = scmp.eq.s32.totalorder %s83, 0
    %p858 = por %p856, %p857
    %p859 = scmp.ne.s32.totalorder %s845, %s846
    %p860 = scmp.eq.s32.totalorder %s84, 3
    %p861 = por %p859, %p860
    %p863 = scmp.ne.s32.totalorder %s846, %s862
    %p864 = scmp.eq.s32.totalorder %s84, 0
    %p865 = por %p863, %p864
    %s866 = ssub.s32 %s85, %s97
    %p867 = scmp.eq.s32.totalorder %s866, 0
    %s869 = sadd.s32 %s868, 1
    %s870 = scalar_select %p867, %s868, %s869
    %p873 = pneg %p867
    %p874 = scmp.eq.s32.totalorder %s78, 3
    %p875 = por %p873, %p874
    %p876 = scmp.ne.s32.totalorder %s868, %s871
    %p877 = scmp.eq.s32.totalorder %s78, 0
    %p878 = por %p876, %p877
    %p879 = scmp.ne.s32.totalorder %s868, %s871
    %p880 = scmp.eq.s32.totalorder %s83, 3
    %p881 = por %p879, %p880
    %p882 = scmp.ne.s32.totalorder %s871, %s872
    %p883 = scmp.eq.s32.totalorder %s83, 0
    %p884 = por %p882, %p883
    %p885 = scmp.ne.s32.totalorder %s871, %s872
    %p886 = scmp.eq.s32.totalorder %s84, 3
    %p887 = por %p885, %p886
    %p889 = scmp.ne.s32.totalorder %s872, %s888
    %p890 = scmp.eq.s32.totalorder %s84, 0
    %p891 = por %p889, %p890
    %p892 = scmp.le.s32.totalorder 1, %s78
    %p893 = scmp.lt.s32.totalorder %s78, 5
    %p894 = pnand %p892, %p893
    %p895 = pneg %p894
    // Predicated region
    $region9: #{tpu_custom_call.1} parent=5 // pred_check
      _
    $region10: #{tpu_custom_call.1} parent=5 // pred_check_branch
      %897 = sbr.rel (%p894) target = $region12
    $region11: #{tpu_custom_call.1} parent=5 // pred_region
      %s898 = ssub.s32 %s78, 1
      // Predicated region
      $region13: #{tpu_custom_call.1} parent=11 // pred_check
        %p899 = pneg %p163
      $region14: #{tpu_custom_call.1} parent=11 // pred_check_branch
        %901 = sbr.rel (%p899) target = $region16
      $region15: #{tpu_custom_call.1} parent=11 // pred_region
        _
      $region16: #{tpu_custom_call.1} parent=11 // pred_fallthru
        _
      // Predicated region
      $region17: #{tpu_custom_call.1} parent=11 // pred_check
        %p902 = pneg %p184
      $region18: #{tpu_custom_call.1} parent=11 // pred_check_branch
        %904 = sbr.rel (%p902) target = $region20
      $region19: #{tpu_custom_call.1} parent=11 // pred_region
        _
      $region20: #{tpu_custom_call.1} parent=11 // pred_fallthru
        _
      // Predicated region
      $region21: #{tpu_custom_call.1} parent=11 // pred_check
        %p905 = pneg %p205
      $region22: #{tpu_custom_call.1} parent=11 // pred_check_branch
        %907 = sbr.rel (%p905) target = $region24
      $region23: #{tpu_custom_call.1} parent=11 // pred_region
        _
      $region24: #{tpu_custom_call.1} parent=11 // pred_fallthru
        _
      // Predicated region
      $region25: #{tpu_custom_call.1} parent=11 // pred_check
        %p908 = pneg %p226
      $region26: #{tpu_custom_call.1} parent=11 // pred_check_branch
        %910 = sbr.rel (%p908) target = $region28
      $region27: #{tpu_custom_call.1} parent=11 // pred_region
        _
      $region28: #{tpu_custom_call.1} parent=11 // pred_fallthru
        _
      // Predicated region
      $region29: #{tpu_custom_call.1} parent=11 // pred_check
        %p911 = pneg %p247
      $region30: #{tpu_custom_call.1} parent=11 // pred_check_branch
        %913 = sbr.rel (%p911) target = $region32
      $region31: #{tpu_custom_call.1} parent=11 // pred_region
        _
      $region32: #{tpu_custom_call.1} parent=11 // pred_fallthru
        _
      // Predicated region
      $region33: #{tpu_custom_call.1} parent=11 // pred_check
        %p914 = pneg %p268
      $region34: #{tpu_custom_call.1} parent=11 // pred_check_branch
        %916 = sbr.rel (%p914) target = $region36
      $region35: #{tpu_custom_call.1} parent=11 // pred_region
        _
      $region36: #{tpu_custom_call.1} parent=11 // pred_fallthru
        _
      // Predicated region
      $region37: #{tpu_custom_call.1} parent=11 // pred_check
        %p917 = pneg %p289
      $region38: #{tpu_custom_call.1} parent=11 // pred_check_branch
        %919 = sbr.rel (%p917) target = $region40
      $region39: #{tpu_custom_call.1} parent=11 // pred_region
        _
      $region40: #{tpu_custom_call.1} parent=11 // pred_fallthru
        _
      // Predicated region
      $region41: #{tpu_custom_call.1} parent=11 // pred_check
        %p920 = pneg %p310
      $region42: #{tpu_custom_call.1} parent=11 // pred_check_branch
        %922 = sbr.rel (%p920) target = $region44
      $region43: #{tpu_custom_call.1} parent=11 // pred_region
        _
      $region44: #{tpu_custom_call.1} parent=11 // pred_fallthru
        _
      // Predicated region
      $region45: #{tpu_custom_call.1} parent=11 // pred_check
        %p923 = pneg %p331
      $region46: #{tpu_custom_call.1} parent=11 // pred_check_branch
        %925 = sbr.rel (%p923) target = $region48
      $region47: #{tpu_custom_call.1} parent=11 // pred_region
        _
      $region48: #{tpu_custom_call.1} parent=11 // pred_fallthru
        _
      // Predicated region
      $region49: #{tpu_custom_call.1} parent=11 // pred_check
        %p926 = pneg %p352
      $region50: #{tpu_custom_call.1} parent=11 // pred_check_branch
        %928 = sbr.rel (%p926) target = $region52
      $region51: #{tpu_custom_call.1} parent=11 // pred_region
        _
      $region52: #{tpu_custom_call.1} parent=11 // pred_fallthru
        _
      // Predicated region
      $region53: #{tpu_custom_call.1} parent=11 // pred_check
        %p929 = pneg %p685
      $region54: #{tpu_custom_call.1} parent=11 // pred_check_branch
        %931 = sbr.rel (%p929) target = $region56
      $region55: #{tpu_custom_call.1} parent=11 // pred_region
        _
      $region56: #{tpu_custom_call.1} parent=11 // pred_fallthru
        _
      // Predicated region
      $region57: #{tpu_custom_call.1} parent=11 // pred_check
        %p932 = pneg %p706
      $region58: #{tpu_custom_call.1} parent=11 // pred_check_branch
        %934 = sbr.rel (%p932) target = $region60
      $region59: #{tpu_custom_call.1} parent=11 // pred_region
        _
      $region60: #{tpu_custom_call.1} parent=11 // pred_fallthru
        _
      // Predicated region
      $region61: #{tpu_custom_call.1} parent=11 // pred_check
        %p935 = pneg %p727
      $region62: #{tpu_custom_call.1} parent=11 // pred_check_branch
        %937 = sbr.rel (%p935) target = $region64
      $region63: #{tpu_custom_call.1} parent=11 // pred_region
        _
      $region64: #{tpu_custom_call.1} parent=11 // pred_fallthru
        _
      // Predicated region
      $region65: #{tpu_custom_call.1} parent=11 // pred_check
        %p938 = pneg %p748
      $region66: #{tpu_custom_call.1} parent=11 // pred_check_branch
        %940 = sbr.rel (%p938) target = $region68
      $region67: #{tpu_custom_call.1} parent=11 // pred_region
        _
      $region68: #{tpu_custom_call.1} parent=11 // pred_fallthru
        _
      // Predicated region
      $region69: #{tpu_custom_call.1} parent=11 // pred_check
        %p941 = pneg %p769
      $region70: #{tpu_custom_call.1} parent=11 // pred_check_branch
        %943 = sbr.rel (%p941) target = $region72
      $region71: #{tpu_custom_call.1} parent=11 // pred_region
        _
      $region72: #{tpu_custom_call.1} parent=11 // pred_fallthru
        _
      // Predicated region
      $region73: #{tpu_custom_call.1} parent=11 // pred_check
        %p944 = pneg %p790
      $region74: #{tpu_custom_call.1} parent=11 // pred_check_branch
        %946 = sbr.rel (%p944) target = $region76
      $region75: #{tpu_custom_call.1} parent=11 // pred_region
        _
      $region76: #{tpu_custom_call.1} parent=11 // pred_fallthru
        _
      // Predicated region
      $region77: #{tpu_custom_call.1} parent=11 // pred_check
        %p947 = pneg %p811
      $region78: #{tpu_custom_call.1} parent=11 // pred_check_branch
        %949 = sbr.rel (%p947) target = $region80
      $region79: #{tpu_custom_call.1} parent=11 // pred_region
        _
      $region80: #{tpu_custom_call.1} parent=11 // pred_fallthru
        _
      // Predicated region
      $region81: #{tpu_custom_call.1} parent=11 // pred_check
        %p950 = pneg %p832
      $region82: #{tpu_custom_call.1} parent=11 // pred_check_branch
        %952 = sbr.rel (%p950) target = $region84
      $region83: #{tpu_custom_call.1} parent=11 // pred_region
        _
      $region84: #{tpu_custom_call.1} parent=11 // pred_fallthru
        _
    $region12: #{tpu_custom_call.1} parent=5 // pred_fallthru
      _
    %p953 = scmp.lt.s32.totalorder %s78, 4
    // Predicated region
    $region85: #{tpu_custom_call.1} parent=5 // pred_check
      %p954 = pneg %p953
    $region86: #{tpu_custom_call.1} parent=5 // pred_check_branch
      %956 = sbr.rel (%p954) target = $region88
    $region87: #{tpu_custom_call.1} parent=5 // pred_region
      // Predicated region
      $region89: #{tpu_custom_call.1} parent=87 // pred_check
        %p957 = pneg %p110
      $region90: #{tpu_custom_call.1} parent=87 // pred_check_branch
        %959 = sbr.rel (%p957) target = $region92
      $region91: #{tpu_custom_call.1} parent=87 // pred_region
        %p960 = scmp.lt.s32.totalorder %s85, 1
        %s961 = scalar_select %p960, %s85, 1
        %s962 = smul.addr %s961, 8
        %s963 = scalar_lea.vmem %s1, %s962
      $region92: #{tpu_custom_call.1} parent=87 // pred_fallthru
        _
      // Predicated region
      $region93: #{tpu_custom_call.1} parent=87 // pred_check
        %p964 = pneg %p136
      $region94: #{tpu_custom_call.1} parent=87 // pred_check_branch
        %966 = sbr.rel (%p964) target = $region96
      $region95: #{tpu_custom_call.1} parent=87 // pred_region
        %p967 = scmp.lt.s32.totalorder %s85, 1
        %s968 = scalar_select %p967, %s85, 1
        %s969 = smul.addr %s968, 8
        %s970 = scalar_lea.vmem %s3, %s969
      $region96: #{tpu_custom_call.1} parent=87 // pred_fallthru
        _
      // Predicated region
      $region97: #{tpu_custom_call.1} parent=87 // pred_check
        %p971 = pneg %p372
      $region98: #{tpu_custom_call.1} parent=87 // pred_check_branch
        %973 = sbr.rel (%p971) target = $region100
      $region99: #{tpu_custom_call.1} parent=87 // pred_region
        %p974 = scmp.lt.s32.totalorder %s86, 1
        %s975 = scalar_select %p974, %s86, 1
        %s976 = smul.addr %s975, 16
        %s977 = smul.addr %s976, 8
        %s978 = scalar_lea.vmem %s25, %s977
      $region100: #{tpu_custom_call.1} parent=87 // pred_fallthru
        _
      // Predicated region
      $region101: #{tpu_custom_call.1} parent=87 // pred_check
        %p979 = pneg %p398
      $region102: #{tpu_custom_call.1} parent=87 // pred_check_branch
        %981 = sbr.rel (%p979) target = $region104
      $region103: #{tpu_custom_call.1} parent=87 // pred_region
        %p982 = scmp.lt.s32.totalorder %s86, 1
        %s983 = scalar_select %p982, %s86, 1
        %s984 = smul.addr %s983, 2
        %s985 = scalar_lea.vmem %s27, %s984
      $region104: #{tpu_custom_call.1} parent=87 // pred_fallthru
        _
      // Predicated region
      $region105: #{tpu_custom_call.1} parent=87 // pred_check
        %p986 = pneg %p424
      $region106: #{tpu_custom_call.1} parent=87 // pred_check_branch
        %988 = sbr.rel (%p986) target = $region108
      $region107: #{tpu_custom_call.1} parent=87 // pred_region
        %p989 = scmp.lt.s32.totalorder %s86, 1
        %s990 = scalar_select %p989, %s86, 1
        %s991 = smul.addr %s990, 8
        %s992 = smul.addr %s991, 8
        %s993 = scalar_lea.vmem %s29, %s992
      $region108: #{tpu_custom_call.1} parent=87 // pred_fallthru
        _
      // Predicated region
      $region109: #{tpu_custom_call.1} parent=87 // pred_check
        %p994 = pneg %p450
      $region110: #{tpu_custom_call.1} parent=87 // pred_check_branch
        %996 = sbr.rel (%p994) target = $region112
      $region111: #{tpu_custom_call.1} parent=87 // pred_region
        %p997 = scmp.lt.s32.totalorder %s86, 1
        %s998 = scalar_select %p997, %s86, 1
        %s999 = scalar_lea.vmem %s31, %s998
      $region112: #{tpu_custom_call.1} parent=87 // pred_fallthru
        _
      // Predicated region
      $region113: #{tpu_custom_call.1} parent=87 // pred_check
        %p1000 = pneg %p476
      $region114: #{tpu_custom_call.1} parent=87 // pred_check_branch
        %1002 = sbr.rel (%p1000) target = $region116
      $region115: #{tpu_custom_call.1} parent=87 // pred_region
        %p1003 = scmp.lt.s32.totalorder %s86, 1
        %s1004 = scalar_select %p1003, %s86, 1
        %s1005 = scalar_lea.vmem %s33, %s1004
      $region116: #{tpu_custom_call.1} parent=87 // pred_fallthru
        _
      // Predicated region
      $region117: #{tpu_custom_call.1} parent=87 // pred_check
        %p1006 = pneg %p502
      $region118: #{tpu_custom_call.1} parent=87 // pred_check_branch
        %1008 = sbr.rel (%p1006) target = $region120
      $region119: #{tpu_custom_call.1} parent=87 // pred_region
        %p1009 = scmp.lt.s32.totalorder %s86, 1
        %s1010 = scalar_select %p1009, %s86, 1
        %s1011 = scalar_lea.vmem %s35, %s1010
      $region120: #{tpu_custom_call.1} parent=87 // pred_fallthru
        _
      // Predicated region
      $region121: #{tpu_custom_call.1} parent=87 // pred_check
        %p1012 = pneg %p528
      $region122: #{tpu_custom_call.1} parent=87 // pred_check_branch
        %1014 = sbr.rel (%p1012) target = $region124
      $region123: #{tpu_custom_call.1} parent=87 // pred_region
        %p1015 = scmp.lt.s32.totalorder %s86, 1
        %s1016 = scalar_select %p1015, %s86, 1
        %s1017 = smul.addr %s1016, 16
        %s1018 = smul.addr %s1017, 8
        %s1019 = scalar_lea.vmem %s37, %s1018
      $region124: #{tpu_custom_call.1} parent=87 // pred_fallthru
        _
      // Predicated region
      $region125: #{tpu_custom_call.1} parent=87 // pred_check
        %p1020 = pneg %p554
      $region126: #{tpu_custom_call.1} parent=87 // pred_check_branch
        %1022 = sbr.rel (%p1020) target = $region128
      $region127: #{tpu_custom_call.1} parent=87 // pred_region
        %p1023 = scmp.lt.s32.totalorder %s86, 1
        %s1024 = scalar_select %p1023, %s86, 1
        %s1025 = smul.addr %s1024, 2
        %s1026 = scalar_lea.vmem %s39, %s1025
      $region128: #{tpu_custom_call.1} parent=87 // pred_fallthru
        _
      // Predicated region
      $region129: #{tpu_custom_call.1} parent=87 // pred_check
        %p1027 = pneg %p580
      $region130: #{tpu_custom_call.1} parent=87 // pred_check_branch
        %1029 = sbr.rel (%p1027) target = $region132
      $region131: #{tpu_custom_call.1} parent=87 // pred_region
        %p1030 = scmp.lt.s32.totalorder %s86, 1
        %s1031 = scalar_select %p1030, %s86, 1
        %s1032 = smul.addr %s1031, 32
        %s1033 = smul.addr %s1032, 8
        %s1034 = scalar_lea.vmem %s41, %s1033
      $region132: #{tpu_custom_call.1} parent=87 // pred_fallthru
        _
      // Predicated region
      $region133: #{tpu_custom_call.1} parent=87 // pred_check
        %p1035 = pneg %p606
      $region134: #{tpu_custom_call.1} parent=87 // pred_check_branch
        %1037 = sbr.rel (%p1035) target = $region136
      $region135: #{tpu_custom_call.1} parent=87 // pred_region
        %p1038 = scmp.lt.s32.totalorder %s86, 1
        %s1039 = scalar_select %p1038, %s86, 1
        %s1040 = scalar_lea.vmem %s43, %s1039
      $region136: #{tpu_custom_call.1} parent=87 // pred_fallthru
        _
      // Predicated region
      $region137: #{tpu_custom_call.1} parent=87 // pred_check
        %p1041 = pneg %p632
      $region138: #{tpu_custom_call.1} parent=87 // pred_check_branch
        %1043 = sbr.rel (%p1041) target = $region140
      $region139: #{tpu_custom_call.1} parent=87 // pred_region
        %p1044 = scmp.lt.s32.totalorder %s86, 1
        %s1045 = scalar_select %p1044, %s86, 1
        %s1046 = scalar_lea.vmem %s45, %s1045
      $region140: #{tpu_custom_call.1} parent=87 // pred_fallthru
        _
      // Predicated region
      $region141: #{tpu_custom_call.1} parent=87 // pred_check
        %p1047 = pneg %p658
      $region142: #{tpu_custom_call.1} parent=87 // pred_check_branch
        %1049 = sbr.rel (%p1047) target = $region144
      $region143: #{tpu_custom_call.1} parent=87 // pred_region
        %p1050 = scmp.lt.s32.totalorder %s86, 1
        %s1051 = scalar_select %p1050, %s86, 1
        %s1052 = scalar_lea.vmem %s47, %s1051
      $region144: #{tpu_custom_call.1} parent=87 // pred_fallthru
        _
    $region88: #{tpu_custom_call.1} parent=5 // pred_fallthru
      _
    %p1053 = scmp.le.s32.totalorder 1, %s78
    %p1054 = scmp.lt.s32.totalorder %s78, 5
    %p1055 = pnand %p1053, %p1054
    %p1056 = pneg %p1055
    // Predicated region
    $region145: #{tpu_custom_call.1} parent=5 // pred_check
      _
    $region146: #{tpu_custom_call.1} parent=5 // pred_check_branch
      %1058 = sbr.rel (%p1055) target = $region148
    $region147: #{tpu_custom_call.1} parent=5 // pred_region
      %s1059 = ssub.s32 %s78, 1
      %p1060 = scmp.lt.s32.totalorder %s87, 1
      %s1061 = scalar_select %p1060, %s87, 1
      %s1062 = smul.addr %s1061, 8
      %s1063 = scalar_lea.vmem %s1, %s1062
      %p1064 = pneg %p116
      %p1065 = pneg %p113
      %p1066 = scmp.lt.s32.totalorder %s87, 1
      %s1067 = scalar_select %p1066, %s87, 1
      %s1068 = smul.addr %s1067, 8
      %s1069 = scalar_lea.vmem %s3, %s1068
      %p1070 = pneg %p142
      %p1071 = pneg %p139
      %p1072 = pneg %p163
      %p1073 = pneg %p160
      %p1074 = pneg %p184
      %p1075 = pneg %p181
      %p1076 = pneg %p205
      %p1077 = pneg %p202
      %p1078 = pneg %p226
      %p1079 = pneg %p223
      %p1080 = pneg %p247
      %p1081 = pneg %p244
      %p1082 = pneg %p268
      %p1083 = pneg %p265
      %p1084 = pneg %p289
      %p1085 = pneg %p286
      %p1086 = pneg %p310
      %p1087 = pneg %p307
      %p1088 = pneg %p331
      %p1089 = pneg %p328
      %p1090 = pneg %p352
      %p1091 = pneg %p349
      %p1092 = scmp.lt.s32.totalorder %s88, 1
      %s1093 = scalar_select %p1092, %s88, 1
      %s1094 = smul.addr %s1093, 16
      %s1095 = smul.addr %s1094, 8
      %s1096 = scalar_lea.vmem %s25, %s1095
      %p1097 = pneg %p378
      %p1098 = pneg %p375
      %p1099 = scmp.lt.s32.totalorder %s88, 1
      %s1100 = scalar_select %p1099, %s88, 1
      %s1101 = smul.addr %s1100, 2
      %s1102 = scalar_lea.vmem %s27, %s1101
      %p1103 = pneg %p404
      %p1104 = pneg %p401
      %p1105 = scmp.lt.s32.totalorder %s88, 1
      %s1106 = scalar_select %p1105, %s88, 1
      %s1107 = smul.addr %s1106, 8
      %s1108 = smul.addr %s1107, 8
      %s1109 = scalar_lea.vmem %s29, %s1108
      %p1110 = pneg %p430
      %p1111 = pneg %p427
      %p1112 = scmp.lt.s32.totalorder %s88, 1
      %s1113 = scalar_select %p1112, %s88, 1
      %s1114 = scalar_lea.vmem %s31, %s1113
      %p1115 = pneg %p456
      %p1116 = pneg %p453
      %p1117 = scmp.lt.s32.totalorder %s88, 1
      %s1118 = scalar_select %p1117, %s88, 1
      %s1119 = scalar_lea.vmem %s33, %s1118
      %p1120 = pneg %p482
      %p1121 = pneg %p479
      %p1122 = scmp.lt.s32.totalorder %s88, 1
      %s1123 = scalar_select %p1122, %s88, 1
      %s1124 = scalar_lea.vmem %s35, %s1123
      %p1125 = pneg %p508
      %p1126 = pneg %p505
      %p1127 = scmp.lt.s32.totalorder %s88, 1
      %s1128 = scalar_select %p1127, %s88, 1
      %s1129 = smul.addr %s1128, 16
      %s1130 = smul.addr %s1129, 8
      %s1131 = scalar_lea.vmem %s37, %s1130
      %p1132 = pneg %p534
      %p1133 = pneg %p531
      %p1134 = scmp.lt.s32.totalorder %s88, 1
      %s1135 = scalar_select %p1134, %s88, 1
      %s1136 = smul.addr %s1135, 2
      %s1137 = scalar_lea.vmem %s39, %s1136
      %p1138 = pneg %p560
      %p1139 = pneg %p557
      %p1140 = scmp.lt.s32.totalorder %s88, 1
      %s1141 = scalar_select %p1140, %s88, 1
      %s1142 = smul.addr %s1141, 32
      %s1143 = smul.addr %s1142, 8
      %s1144 = scalar_lea.vmem %s41, %s1143
      %p1145 = pneg %p586
      %p1146 = pneg %p583
      %p1147 = scmp.lt.s32.totalorder %s88, 1
      %s1148 = scalar_select %p1147, %s88, 1
      %s1149 = scalar_lea.vmem %s43, %s1148
      %p1150 = pneg %p612
      %p1151 = pneg %p609
      %p1152 = scmp.lt.s32.totalorder %s88, 1
      %s1153 = scalar_select %p1152, %s88, 1
      %s1154 = scalar_lea.vmem %s45, %s1153
      %p1155 = pneg %p638
      %p1156 = pneg %p635
      %p1157 = scmp.lt.s32.totalorder %s88, 1
      %s1158 = scalar_select %p1157, %s88, 1
      %s1159 = scalar_lea.vmem %s47, %s1158
      %p1160 = pneg %p664
      %p1161 = pneg %p661
      %p1162 = pneg %p685
      %p1163 = pneg %p682
      %p1164 = pneg %p706
      %p1165 = pneg %p703
      %p1166 = pneg %p727
      %p1167 = pneg %p724
      %p1168 = pneg %p748
      %p1169 = pneg %p745
      %p1170 = pneg %p769
      %p1171 = pneg %p766
      %p1172 = pneg %p790
      %p1173 = pneg %p787
      %p1174 = pneg %p811
      %p1175 = pneg %p808
      %p1176 = pneg %p832
      %p1177 = pneg %p829
      %p1178 = pneg %p858
      %p1179 = pneg %p855
      %p1180 = scmp.lt.s32.totalorder %s87, 1
      %s1181 = scalar_select %p1180, %s87, 1
      %s1182 = scalar_lea.vmem %s65, %s1181
      %p1183 = pneg %p884
      %p1184 = pneg %p881
      %p1185 = scmp.lt.s32.totalorder %s87, 1
      %s1186 = scalar_select %p1185, %s87, 1
      %s1187 = scalar_lea.vmem %s67, %s1186
      %p1188 = scmp.lt.s32.totalorder %s87, 1
      %s1189 = scalar_select %p1188, %s87, 1
      %s1190 = smul.addr %s1189, 8
      %s1191 = scalar_lea.vmem %s1, %s1190
      %p1192 = scmp.lt.s32.totalorder %s87, 1
      %s1193 = scalar_select %p1192, %s87, 1
      %s1194 = smul.addr %s1193, 8
      %s1195 = scalar_lea.vmem %s3, %s1194
      %p1196 = scmp.lt.s32.totalorder %s88, 1
      %s1197 = scalar_select %p1196, %s88, 1
      %s1198 = smul.addr %s1197, 16
      %s1199 = smul.addr %s1198, 8
      %s1200 = scalar_lea.vmem %s25, %s1199
      %p1201 = scmp.lt.s32.totalorder %s88, 1
      %s1202 = scalar_select %p1201, %s88, 1
      %s1203 = smul.addr %s1202, 2
      %s1204 = scalar_lea.vmem %s27, %s1203
      %p1205 = scmp.lt.s32.totalorder %s88, 1
      %s1206 = scalar_select %p1205, %s88, 1
      %s1207 = smul.addr %s1206, 8
      %s1208 = smul.addr %s1207, 8
      %s1209 = scalar_lea.vmem %s29, %s1208
      %p1210 = scmp.lt.s32.totalorder %s88, 1
      %s1211 = scalar_select %p1210, %s88, 1
      %s1212 = scalar_lea.vmem %s31, %s1211
      %p1213 = scmp.lt.s32.totalorder %s88, 1
      %s1214 = scalar_select %p1213, %s88, 1
      %s1215 = scalar_lea.vmem %s33, %s1214
      %p1216 = scmp.lt.s32.totalorder %s88, 1
      %s1217 = scalar_select %p1216, %s88, 1
      %s1218 = scalar_lea.vmem %s35, %s1217
      %p1219 = scmp.lt.s32.totalorder %s88, 1
      %s1220 = scalar_select %p1219, %s88, 1
      %s1221 = smul.addr %s1220, 16
      %s1222 = smul.addr %s1221, 8
      %s1223 = scalar_lea.vmem %s37, %s1222
      %p1224 = scmp.lt.s32.totalorder %s88, 1
      %s1225 = scalar_select %p1224, %s88, 1
      %s1226 = smul.addr %s1225, 2
      %s1227 = scalar_lea.vmem %s39, %s1226
      %p1228 = scmp.lt.s32.totalorder %s88, 1
      %s1229 = scalar_select %p1228, %s88, 1
      %s1230 = smul.addr %s1229, 32
      %s1231 = smul.addr %s1230, 8
      %s1232 = scalar_lea.vmem %s41, %s1231
      %p1233 = scmp.lt.s32.totalorder %s88, 1
      %s1234 = scalar_select %p1233, %s88, 1
      %s1235 = scalar_lea.vmem %s43, %s1234
      %p1236 = scmp.lt.s32.totalorder %s88, 1
      %s1237 = scalar_select %p1236, %s88, 1
      %s1238 = scalar_lea.vmem %s45, %s1237
      %p1239 = scmp.lt.s32.totalorder %s88, 1
      %s1240 = scalar_select %p1239, %s88, 1
      %s1241 = scalar_lea.vmem %s47, %s1240
      %p1242 = scmp.lt.s32.totalorder %s87, 1
      %s1243 = scalar_select %p1242, %s87, 1
      %s1244 = scalar_lea.vmem %s65, %s1243
      %p1245 = scmp.lt.s32.totalorder %s87, 1
      %s1246 = scalar_select %p1245, %s87, 1
      %s1247 = scalar_lea.vmem %s67, %s1246
      %p1248 = scmp.eq.s32.totalorder %s88, 0
      // Predicated region
      $region149: #{tpu_custom_call.1} parent=147 // pred_check
        %p1249 = pneg %p1248
      $region150: #{tpu_custom_call.1} parent=147 // pred_check_branch
        %1251 = sbr.rel (%p1249) target = $region152
      $region151: #{tpu_custom_call.1} parent=147 // pred_region
        %v1252 = vld [vmem:[%s1191] sm:$0xff]
        %v1253 = vld [vmem:[%s5] sm:$0xff]
        %v1254 = vld [vmem:[%s5 + $0x8] sm:$0xf]
        %v1255 = vld [vmem:[%s7] sm:$0x1]
        %v1257 = vlaneseq
        %v1258 = vshrl.u32 %v1257, 7
        %v1259 = vsub.s32 0, %v1258
        %v1260 = vrot.slane %v1255, %v1259
        %vm1262 = vcmask 97280
        %v1264 = vsel %vm1262, %v1252, 0
        %vm1266 = vcmask 1043456
        %v1268 = vsel %vm1266, %v1254, 0
        %1270 = vmatprep.subr.mxu0 0.0
        %1271 = vmatpush1.msra.mxu0 %v1253
        %1272 = vmatprep.subr.mxu0 0.0
        %1273 = vmatpush1.msra.mxu0 %v1268
        %1274 = vmatprep.subr.mxu0 0.0
        %1275 = vmatpush1.msra.mxu0 0.0
        %1276 = vmatprep.subr.mxu0 0.0
        %1277 = vmatpush1.msra.mxu0 0.0
        %1278 = vmatprep.subr.mxu0 0.0
        %1279 = vmatpush1.msra.mxu0 0.0
        %1280 = vmatprep.subr.mxu0 0.0
        %1281 = vmatpush1.msra.mxu0 0.0
        %1282 = vmatprep.subr.mxu0 0.0
        %1283 = vmatpush1.msra.mxu0 0.0
        %1284 = vmatprep.subr.mxu0 0.0
        %1285 = vmatpush1.msra.mxu0 0.0
        %1286 = vmatprep.subr.mxu0 0.0
        %1287 = vmatpush1.msra.mxu0 0.0
        %1288 = vmatprep.subr.mxu0 0.0
        %1289 = vmatpush1.msra.mxu0 0.0
        %1290 = vmatprep.subr.mxu0 0.0
        %1291 = vmatpush1.msra.mxu0 0.0
        %1292 = vmatprep.subr.mxu0 0.0
        %1293 = vmatpush1.msra.mxu0 0.0
        %1294 = vmatprep.subr.mxu0 0.0
        %1295 = vmatpush1.msra.mxu0 0.0
        %1296 = vmatprep.subr.mxu0 0.0
        %1297 = vmatpush1.msra.mxu0 0.0
        %1298 = vmatprep.subr.mxu0 0.0
        %1299 = vmatpush1.msra.mxu0 0.0
        %1300 = vmatprep.subr.mxu0 0.0
        %1301 = vmatpush1.msra.mxu0 0.0
        %1302 = vmatprep.subr.mxu0 0.0
        %1303 = vmatpush1.msra.mxu0 0.0
        %1304 = vmatprep.subr.mxu0 0.0
        %1305 = vmatpush1.msra.mxu0 0.0
        %1306 = vmatprep.subr.mxu0 0.0
        %1307 = vmatpush1.msra.mxu0 0.0
        %1308 = vmatprep.subr.mxu0 0.0
        %1309 = vmatpush1.msra.mxu0 0.0
        %1310 = vmatprep.subr.mxu0 0.0
        %1311 = vmatpush1.msra.mxu0 0.0
        %1312 = vmatprep.subr.mxu0 0.0
        %1313 = vmatpush1.msra.mxu0 0.0
        %1314 = vmatprep.subr.mxu0 0.0
        %1315 = vmatpush1.msra.mxu0 0.0
        %1316 = vmatprep.subr.mxu0 0.0
        %1317 = vmatpush1.msra.mxu0 0.0
        %1318 = vmatprep.subr.mxu0 0.0
        %1319 = vmatpush1.msra.mxu0 0.0
        %1320 = vmatprep.subr.mxu0 0.0
        %1321 = vmatpush1.msra.mxu0 0.0
        %1322 = vmatprep.subr.mxu0 0.0
        %1323 = vmatpush1.msra.mxu0 0.0
        %1324 = vmatprep.subr.mxu0 0.0
        %1325 = vmatpush1.msra.mxu0 0.0
        %1326 = vmatprep.subr.mxu0 0.0
        %1327 = vmatpush1.msra.mxu0 0.0
        %1328 = vmatprep.subr.mxu0 0.0
        %1329 = vmatpush1.msra.mxu0 0.0
        %1330 = vmatprep.subr.mxu0 0.0
        %1331 = vmatpush1.msra.mxu0 0.0
        %1332 = vmatprep.subr.mxu0 0.0
        %1333 = vmatpush1.msra.mxu0 0.0
        %1334 = vmatprep.mubr.f32.mxu0 0.0
        %1335 = vmatmul.mubr.f32.gmra.mrb[0].mxu0 %v1264
        %v1336 = vpop.f32.mrb[0].mxu0
        %v1337 = vadd.f32 %v1260, %v1336
        %v1338 = vpop.f32.mrb[0].mxu0
        %1339 = vdwg.mxu0
        %v1340 = vmax.f32 %v1337, 0.0
        %v1341 = vld [vmem:[%s9] sm:$0x1]
        %v1342 = vld [vmem:[%s11] sm:$0x1]
        %vm1343 = vcmask 261120
        %v1344 = vsel %vm1343, %v1340, 0.0
        %1345 = vadd.xlane.f32.xlu0 %v1344
        %v1346 = vpop.xlane.xlu0 %1345
        %v1347 = vrcp.pop 32.0
        %v1348 = vmul.f32 %v1346, %v1347
        %v1349 = vsub.f32 %v1340, %v1348
        %v1350 = vmul.f32 %v1349, %v1349
        %v1351 = vsel %vm1343, %v1350, 0.0
        %1352 = vadd.xlane.f32.xlu0 %v1351
        %v1353 = vpop.xlane.xlu0 %1352
        %v1354 = vmul.f32 %v1353, %v1347
        %v1355 = vadd.f32 %v1354, 1e-05
        %v1356 = vrsqrt.pop %v1355
        %v1357 = vmul.f32 %v1349, %v1356
        %v1359 = vlaneseq
        %v1360 = vshrl.u32 %v1359, 7
        %v1361 = vsub.s32 0, %v1360
        %v1362 = vrot.slane %v1341, %v1361
        %v1364 = vmul.f32 %v1357, %v1362
        %v1366 = vlaneseq
        %v1367 = vshrl.u32 %v1366, 7
        %v1368 = vsub.s32 0, %v1367
        %v1369 = vrot.slane %v1342, %v1368
        %v1371 = vadd.f32 %v1364, %v1369
        %v1372 = vld [vmem:[%s13] sm:$0xff]
        %v1373 = vadd.f32 %v1371, %v1372
        %v1374 = vld [vmem:[%s1195] sm:$0xff]
        %v1375 = vld [vmem:[%s15] sm:$0xff]
        %v1376 = vld [vmem:[%s15 + $0x8] sm:$0xff]
        %v1377 = vld [vmem:[%s15 + $0x10] sm:$0xf]
        %v1378 = vld [vmem:[%s17] sm:$0x1]
        %v1380 = vlaneseq
        %v1381 = vshrl.u32 %v1380, 7
        %v1382 = vsub.s32 0, %v1381
        %v1383 = vrot.slane %v1378, %v1382
        %vm1385 = vcmask 162816
        %v1387 = vsel %vm1385, %v1374, 0
        %v1390 = vsel %vm1266, %v1377, 0
        %1392 = vmatprep.subr.mxu0 0.0
        %1393 = vmatpush1.msra.mxu0 %v1375
        %1394 = vmatprep.subr.mxu0 0.0
        %1395 = vmatpush1.msra.mxu0 %v1376
        %1396 = vmatprep.subr.mxu0 0.0
        %1397 = vmatpush1.msra.mxu0 %v1390
        %1398 = vmatprep.subr.mxu0 0.0
        %1399 = vmatpush1.msra.mxu0 0.0
        %1400 = vmatprep.subr.mxu0 0.0
        %1401 = vmatpush1.msra.mxu0 0.0
        %1402 = vmatprep.subr.mxu0 0.0
        %1403 = vmatpush1.msra.mxu0 0.0
        %1404 = vmatprep.subr.mxu0 0.0
        %1405 = vmatpush1.msra.mxu0 0.0
        %1406 = vmatprep.subr.mxu0 0.0
        %1407 = vmatpush1.msra.mxu0 0.0
        %1408 = vmatprep.subr.mxu0 0.0
        %1409 = vmatpush1.msra.mxu0 0.0
        %1410 = vmatprep.subr.mxu0 0.0
        %1411 = vmatpush1.msra.mxu0 0.0
        %1412 = vmatprep.subr.mxu0 0.0
        %1413 = vmatpush1.msra.mxu0 0.0
        %1414 = vmatprep.subr.mxu0 0.0
        %1415 = vmatpush1.msra.mxu0 0.0
        %1416 = vmatprep.subr.mxu0 0.0
        %1417 = vmatpush1.msra.mxu0 0.0
        %1418 = vmatprep.subr.mxu0 0.0
        %1419 = vmatpush1.msra.mxu0 0.0
        %1420 = vmatprep.subr.mxu0 0.0
        %1421 = vmatpush1.msra.mxu0 0.0
        %1422 = vmatprep.subr.mxu0 0.0
        %1423 = vmatpush1.msra.mxu0 0.0
        %1424 = vmatprep.subr.mxu0 0.0
        %1425 = vmatpush1.msra.mxu0 0.0
        %1426 = vmatprep.subr.mxu0 0.0
        %1427 = vmatpush1.msra.mxu0 0.0
        %1428 = vmatprep.subr.mxu0 0.0
        %1429 = vmatpush1.msra.mxu0 0.0
        %1430 = vmatprep.subr.mxu0 0.0
        %1431 = vmatpush1.msra.mxu0 0.0
        %1432 = vmatprep.subr.mxu0 0.0
        %1433 = vmatpush1.msra.mxu0 0.0
        %1434 = vmatprep.subr.mxu0 0.0
        %1435 = vmatpush1.msra.mxu0 0.0
        %1436 = vmatprep.subr.mxu0 0.0
        %1437 = vmatpush1.msra.mxu0 0.0
        %1438 = vmatprep.subr.mxu0 0.0
        %1439 = vmatpush1.msra.mxu0 0.0
        %1440 = vmatprep.subr.mxu0 0.0
        %1441 = vmatpush1.msra.mxu0 0.0
        %1442 = vmatprep.subr.mxu0 0.0
        %1443 = vmatpush1.msra.mxu0 0.0
        %1444 = vmatprep.subr.mxu0 0.0
        %1445 = vmatpush1.msra.mxu0 0.0
        %1446 = vmatprep.subr.mxu0 0.0
        %1447 = vmatpush1.msra.mxu0 0.0
        %1448 = vmatprep.subr.mxu0 0.0
        %1449 = vmatpush1.msra.mxu0 0.0
        %1450 = vmatprep.subr.mxu0 0.0
        %1451 = vmatpush1.msra.mxu0 0.0
        %1452 = vmatprep.subr.mxu0 0.0
        %1453 = vmatpush1.msra.mxu0 0.0
        %1454 = vmatprep.subr.mxu0 0.0
        %1455 = vmatpush1.msra.mxu0 0.0
        %1456 = vmatprep.mubr.f32.mxu0 0.0
        %1457 = vmatmul.mubr.f32.gmra.mrb[0].mxu0 %v1387
        %v1458 = vpop.f32.mrb[0].mxu0
        %v1459 = vadd.f32 %v1383, %v1458
        %v1460 = vpop.f32.mrb[0].mxu0
        %1461 = vdwg.mxu0
        %v1462 = vmax.f32 %v1459, 0.0
        %v1463 = vld [vmem:[%s19] sm:$0x1]
        %v1464 = vld [vmem:[%s21] sm:$0x1]
        %v1465 = vsel %vm1343, %v1462, 0.0
        %1466 = vadd.xlane.f32.xlu0 %v1465
        %v1467 = vpop.xlane.xlu0 %1466
        %v1468 = vmul.f32 %v1467, %v1347
        %v1469 = vsub.f32 %v1462, %v1468
        %v1470 = vmul.f32 %v1469, %v1469
        %v1471 = vsel %vm1343, %v1470, 0.0
        %1472 = vadd.xlane.f32.xlu0 %v1471
        %v1473 = vpop.xlane.xlu0 %1472
        %v1474 = vmul.f32 %v1473, %v1347
        %v1475 = vadd.f32 %v1474, 1e-05
        %v1476 = vrsqrt.pop %v1475
        %v1477 = vmul.f32 %v1469, %v1476
        %v1479 = vlaneseq
        %v1480 = vshrl.u32 %v1479, 7
        %v1481 = vsub.s32 0, %v1480
        %v1482 = vrot.slane %v1463, %v1481
        %v1484 = vmul.f32 %v1477, %v1482
        %v1486 = vlaneseq
        %v1487 = vshrl.u32 %v1486, 7
        %v1488 = vsub.s32 0, %v1487
        %v1489 = vrot.slane %v1464, %v1488
        %v1491 = vadd.f32 %v1484, %v1489
        %v1492 = vld [vmem:[%s23] sm:$0xff]
        %v1493 = vadd.f32 %v1491, %v1492
        %1495 = vrot.lane.b32.xlu0 %v1493, 32
        %v1496 = vpop.permute.xlu0 %1495
        %v1498 = vsel %vm1343, %v1373, %v1496
        %vm1499 = vcmask 523264
        %1500 = vst.msk [vmem:[#allocation2] sm:$0xff] %vm1499, %v1498
      $region152: #{tpu_custom_call.1} parent=147 // pred_fallthru
        _
      %v1501 = vld [vmem:[#allocation2] sm:$0xff]
      %v1502 = vld [vmem:[%s1200] sm:$0xff]
      %v1503 = vld [vmem:[%s1200 + $0x8] sm:$0xff]
      %v1504 = vld [vmem:[%s1200 + $0x10] sm:$0xff]
      %v1505 = vld [vmem:[%s1200 + $0x18] sm:$0xff]
      %v1506 = vld [vmem:[%s1200 + $0x20] sm:$0xff]
      %v1507 = vld [vmem:[%s1200 + $0x28] sm:$0xff]
      %v1508 = vld [vmem:[%s1200 + $0x30] sm:$0xff]
      %v1509 = vld [vmem:[%s1200 + $0x38] sm:$0xff]
      %v1510 = vld [vmem:[%s1200 + $0x40] sm:$0xff]
      %v1511 = vld [vmem:[%s1200 + $0x48] sm:$0xff]
      %v1512 = vld [vmem:[%s1200 + $0x50] sm:$0xff]
      %v1513 = vld [vmem:[%s1200 + $0x58] sm:$0xff]
      %v1514 = vld [vmem:[%s1200 + $0x60] sm:$0xff]
      %v1515 = vld [vmem:[%s1200 + $0x68] sm:$0xff]
      %v1516 = vld [vmem:[%s1200 + $0x70] sm:$0xff]
      %v1517 = vld [vmem:[%s1200 + $0x78] sm:$0xff]
      %v1518 = vld [vmem:[%s1204] sm:$0x3]
      %v1520 = vlaneseq
      %v1521 = vshrl.u32 %v1520, 7
      %v1522 = vsub.s32 0, %v1521
      %v1523 = vrot.slane %v1518, %v1522
      %v1524 = vlaneseq
      %v1525 = vshrl.u32 %v1524, 7
      %v1526 = vsub.s32 1, %v1525
      %v1527 = vrot.slane %v1518, %v1526
      %vm1530 = vcmask 523264
      %v1532 = vsel %vm1530, %v1501, 0
      %1534 = vmatprep.subr.mxu0 %v1503
      %1535 = vmatpush1.msra.mxu0 %v1502
      %1536 = vmatprep.subr.mxu0 %v1505
      %1537 = vmatpush1.msra.mxu0 %v1504
      %1538 = vmatprep.subr.mxu0 %v1507
      %1539 = vmatpush1.msra.mxu0 %v1506
      %1540 = vmatprep.subr.mxu0 %v1509
      %1541 = vmatpush1.msra.mxu0 %v1508
      %1542 = vmatprep.subr.mxu0 %v1511
      %1543 = vmatpush1.msra.mxu0 %v1510
      %1544 = vmatprep.subr.mxu0 %v1513
      %1545 = vmatpush1.msra.mxu0 %v1512
      %1546 = vmatprep.subr.mxu0 %v1515
      %1547 = vmatpush1.msra.mxu0 %v1514
      %1548 = vmatprep.subr.mxu0 %v1517
      %1549 = vmatpush1.msra.mxu0 %v1516
      %1550 = vmatprep.subr.mxu0 0.0
      %1551 = vmatpush1.msra.mxu0 0.0
      %1552 = vmatprep.subr.mxu0 0.0
      %1553 = vmatpush1.msra.mxu0 0.0
      %1554 = vmatprep.subr.mxu0 0.0
      %1555 = vmatpush1.msra.mxu0 0.0
      %1556 = vmatprep.subr.mxu0 0.0
      %1557 = vmatpush1.msra.mxu0 0.0
      %1558 = vmatprep.subr.mxu0 0.0
      %1559 = vmatpush1.msra.mxu0 0.0
      %1560 = vmatprep.subr.mxu0 0.0
      %1561 = vmatpush1.msra.mxu0 0.0
      %1562 = vmatprep.subr.mxu0 0.0
      %1563 = vmatpush1.msra.mxu0 0.0
      %1564 = vmatprep.subr.mxu0 0.0
      %1565 = vmatpush1.msra.mxu0 0.0
      %1566 = vmatprep.subr.mxu0 0.0
      %1567 = vmatpush1.msra.mxu0 0.0
      %1568 = vmatprep.subr.mxu0 0.0
      %1569 = vmatpush1.msra.mxu0 0.0
      %1570 = vmatprep.subr.mxu0 0.0
      %1571 = vmatpush1.msra.mxu0 0.0
      %1572 = vmatprep.subr.mxu0 0.0
      %1573 = vmatpush1.msra.mxu0 0.0
      %1574 = vmatprep.subr.mxu0 0.0
      %1575 = vmatpush1.msra.mxu0 0.0
      %1576 = vmatprep.subr.mxu0 0.0
      %1577 = vmatpush1.msra.mxu0 0.0
      %1578 = vmatprep.subr.mxu0 0.0
      %1579 = vmatpush1.msra.mxu0 0.0
      %1580 = vmatprep.subr.mxu0 0.0
      %1581 = vmatpush1.msra.mxu0 0.0
      %1582 = vmatprep.subr.mxu0 0.0
      %1583 = vmatpush1.msra.mxu0 0.0
      %1584 = vmatprep.subr.mxu0 0.0
      %1585 = vmatpush1.msra.mxu0 0.0
      %1586 = vmatprep.subr.mxu0 0.0
      %1587 = vmatpush1.msra.mxu0 0.0
      %1588 = vmatprep.subr.mxu0 0.0
      %1589 = vmatpush1.msra.mxu0 0.0
      %1590 = vmatprep.subr.mxu0 0.0
      %1591 = vmatpush1.msra.mxu0 0.0
      %1592 = vmatprep.subr.mxu0 0.0
      %1593 = vmatpush1.msra.mxu0 0.0
      %1594 = vmatprep.subr.mxu0 0.0
      %1595 = vmatpush1.msra.mxu0 0.0
      %1596 = vmatprep.subr.mxu0 0.0
      %1597 = vmatpush1.msra.mxu0 0.0
      %1598 = vmatprep.mubr.f32.mxu0 0.0
      %1599 = vmatmul.mubr.f32.gmra.mrb[0].mxu0 %v1532
      %v1600 = vpop.f32.mrb[0].mxu0
      %v1601 = vadd.f32 %v1523, %v1600
      %v1602 = vpop.f32.mrb[0].mxu0
      %v1603 = vadd.f32 %v1527, %v1602
      %1604 = vdwg.mxu0
      %1606 = vrot.lane.b32.xlu0 %v1601, 64
      %v1607 = vpop.permute.xlu0 %1606
      %vm1608 = vcmask 130048
      %v1609 = vsel %vm1608, %v1601, 0
      %v1611 = vsel %vm1608, %v1607, 0
      %1613 = vmatprep.subr.mxu0 0.0
      %1614 = vmatpush1.xpose.msra.mxu0 %v1611
      %1615 = vmatprep.subr.mxu0 0.0
      %1616 = vmatpush1.xpose.msra.mxu0 0.0
      %1617 = vmatprep.subr.mxu0 0.0
      %1618 = vmatpush1.xpose.msra.mxu0 0.0
      %1619 = vmatprep.subr.mxu0 0.0
      %1620 = vmatpush1.xpose.msra.mxu0 0.0
      %1621 = vmatprep.subr.mxu0 0.0
      %1622 = vmatpush1.xpose.msra.mxu0 0.0
      %1623 = vmatprep.subr.mxu0 0.0
      %1624 = vmatpush1.xpose.msra.mxu0 0.0
      %1625 = vmatprep.subr.mxu0 0.0
      %1626 = vmatpush1.xpose.msra.mxu0 0.0
      %1627 = vmatprep.subr.mxu0 0.0
      %1628 = vmatpush1.xpose.msra.mxu0 0.0
      %1629 = vmatprep.subr.mxu0 0.0
      %1630 = vmatpush1.xpose.msra.mxu0 0.0
      %1631 = vmatprep.subr.mxu0 0.0
      %1632 = vmatpush1.xpose.msra.mxu0 0.0
      %1633 = vmatprep.subr.mxu0 0.0
      %1634 = vmatpush1.xpose.msra.mxu0 0.0
      %1635 = vmatprep.subr.mxu0 0.0
      %1636 = vmatpush1.xpose.msra.mxu0 0.0
      %1637 = vmatprep.subr.mxu0 0.0
      %1638 = vmatpush1.xpose.msra.mxu0 0.0
      %1639 = vmatprep.subr.mxu0 0.0
      %1640 = vmatpush1.xpose.msra.mxu0 0.0
      %1641 = vmatprep.subr.mxu0 0.0
      %1642 = vmatpush1.xpose.msra.mxu0 0.0
      %1643 = vmatprep.subr.mxu0 0.0
      %1644 = vmatpush1.xpose.msra.mxu0 0.0
      %1645 = vmatprep.subr.mxu0 0.0
      %1646 = vmatpush1.xpose.msra.mxu0 0.0
      %1647 = vmatprep.subr.mxu0 0.0
      %1648 = vmatpush1.xpose.msra.mxu0 0.0
      %1649 = vmatprep.subr.mxu0 0.0
      %1650 = vmatpush1.xpose.msra.mxu0 0.0
      %1651 = vmatprep.subr.mxu0 0.0
      %1652 = vmatpush1.xpose.msra.mxu0 0.0
      %1653 = vmatprep.subr.mxu0 0.0
      %1654 = vmatpush1.xpose.msra.mxu0 0.0
      %1655 = vmatprep.subr.mxu0 0.0
      %1656 = vmatpush1.xpose.msra.mxu0 0.0
      %1657 = vmatprep.subr.mxu0 0.0
      %1658 = vmatpush1.xpose.msra.mxu0 0.0
      %1659 = vmatprep.subr.mxu0 0.0
      %1660 = vmatpush1.xpose.msra.mxu0 0.0
      %1661 = vmatprep.subr.mxu0 0.0
      %1662 = vmatpush1.xpose.msra.mxu0 0.0
      %1663 = vmatprep.subr.mxu0 0.0
      %1664 = vmatpush1.xpose.msra.mxu0 0.0
      %1665 = vmatprep.subr.mxu0 0.0
      %1666 = vmatpush1.xpose.msra.mxu0 0.0
      %1667 = vmatprep.subr.mxu0 0.0
      %1668 = vmatpush1.xpose.msra.mxu0 0.0
      %1669 = vmatprep.subr.mxu0 0.0
      %1670 = vmatpush1.xpose.msra.mxu0 0.0
      %1671 = vmatprep.subr.mxu0 0.0
      %1672 = vmatpush1.xpose.msra.mxu0 0.0
      %1673 = vmatprep.subr.mxu0 0.0
      %1674 = vmatpush1.xpose.msra.mxu0 0.0
      %1675 = vmatprep.subr.mxu0 0.0
      %1676 = vmatpush1.xpose.msra.mxu0 0.0
      %1677 = vmatprep.mubr.f32.mxu0 0.0
      %1678 = vmatmul.mubr.f32.gmra.mrb[0].mxu0 %v1609
      %v1679 = vpop.f32.mrb[0].mxu0
      %v1680 = vadd.f32 0.0, %v1679
      %v1681 = vpop.f32.mrb[0].mxu0
      %1682 = vdwg.mxu0
      %v1683 = vmul.f32 %v1680, 0.25
      %vm1684 = vcmask 64512
      %v1685 = vsel %vm1684, %v1683, -inf
      %1686 = vmax.xlane.f32.xlu0 %v1685
      %v1687 = vpop.xlane.xlu0 %1686
      %v1688 = vsub.f32 %v1683, %v1687
      %v1689 = vmul.f32 %v1688, 1.442695
      %v1690 = vpow.pop %v1689
      %v1691 = vsel %vm1684, %v1690, 0.0
      %1692 = vadd.xlane.f32.xlu0 %v1691
      %v1693 = vpop.xlane.xlu0 %1692
      %v1694 = vrcp.pop %v1693
      %v1695 = vmul.f32 %v1690, %v1694
      %v1697 = vsel %vm1684, %v1695, 0
      %1699 = vmatprep.subr.mxu0 0.0
      %1700 = vmatpush1.msra.mxu0 %v1603
      %1701 = vmatprep.subr.mxu0 0.0
      %1702 = vmatpush1.msra.mxu0 0.0
      %1703 = vmatprep.subr.mxu0 0.0
      %1704 = vmatpush1.msra.mxu0 0.0
      %1705 = vmatprep.subr.mxu0 0.0
      %1706 = vmatpush1.msra.mxu0 0.0
      %1707 = vmatprep.subr.mxu0 0.0
      %1708 = vmatpush1.msra.mxu0 0.0
      %1709 = vmatprep.subr.mxu0 0.0
      %1710 = vmatpush1.msra.mxu0 0.0
      %1711 = vmatprep.subr.mxu0 0.0
      %1712 = vmatpush1.msra.mxu0 0.0
      %1713 = vmatprep.subr.mxu0 0.0
      %1714 = vmatpush1.msra.mxu0 0.0
      %1715 = vmatprep.subr.mxu0 0.0
      %1716 = vmatpush1.msra.mxu0 0.0
      %1717 = vmatprep.subr.mxu0 0.0
      %1718 = vmatpush1.msra.mxu0 0.0
      %1719 = vmatprep.subr.mxu0 0.0
      %1720 = vmatpush1.msra.mxu0 0.0
      %1721 = vmatprep.subr.mxu0 0.0
      %1722 = vmatpush1.msra.mxu0 0.0
      %1723 = vmatprep.subr.mxu0 0.0
      %1724 = vmatpush1.msra.mxu0 0.0
      %1725 = vmatprep.subr.mxu0 0.0
      %1726 = vmatpush1.msra.mxu0 0.0
      %1727 = vmatprep.subr.mxu0 0.0
      %1728 = vmatpush1.msra.mxu0 0.0
      %1729 = vmatprep.subr.mxu0 0.0
      %1730 = vmatpush1.msra.mxu0 0.0
      %1731 = vmatprep.subr.mxu0 0.0
      %1732 = vmatpush1.msra.mxu0 0.0
      %1733 = vmatprep.subr.mxu0 0.0
      %1734 = vmatpush1.msra.mxu0 0.0
      %1735 = vmatprep.subr.mxu0 0.0
      %1736 = vmatpush1.msra.mxu0 0.0
      %1737 = vmatprep.subr.mxu0 0.0
      %1738 = vmatpush1.msra.mxu0 0.0
      %1739 = vmatprep.subr.mxu0 0.0
      %1740 = vmatpush1.msra.mxu0 0.0
      %1741 = vmatprep.subr.mxu0 0.0
      %1742 = vmatpush1.msra.mxu0 0.0
      %1743 = vmatprep.subr.mxu0 0.0
      %1744 = vmatpush1.msra.mxu0 0.0
      %1745 = vmatprep.subr.mxu0 0.0
      %1746 = vmatpush1.msra.mxu0 0.0
      %1747 = vmatprep.subr.mxu0 0.0
      %1748 = vmatpush1.msra.mxu0 0.0
      %1749 = vmatprep.subr.mxu0 0.0
      %1750 = vmatpush1.msra.mxu0 0.0
      %1751 = vmatprep.subr.mxu0 0.0
      %1752 = vmatpush1.msra.mxu0 0.0
      %1753 = vmatprep.subr.mxu0 0.0
      %1754 = vmatpush1.msra.mxu0 0.0
      %1755 = vmatprep.subr.mxu0 0.0
      %1756 = vmatpush1.msra.mxu0 0.0
      %1757 = vmatprep.subr.mxu0 0.0
      %1758 = vmatpush1.msra.mxu0 0.0
      %1759 = vmatprep.subr.mxu0 0.0
      %1760 = vmatpush1.msra.mxu0 0.0
      %1761 = vmatprep.subr.mxu0 0.0
      %1762 = vmatpush1.msra.mxu0 0.0
      %1763 = vmatprep.mubr.f32.mxu0 0.0
      %1764 = vmatmul.mubr.f32.gmra.mrb[0].mxu0 %v1697
      %v1765 = vpop.f32.mrb[0].mxu0
      %v1766 = vadd.f32 0.0, %v1765
      %v1767 = vpop.f32.mrb[0].mxu0
      %1768 = vdwg.mxu0
      %1769 = vrot.lane.b32.xlu0 %v1601, 112
      %v1770 = vpop.permute.xlu0 %1769
      %1771 = vrot.lane.b32.xlu0 %v1601, 48
      %v1772 = vpop.permute.xlu0 %1771
      %v1773 = vsel %vm1608, %v1770, 0
      %v1775 = vsel %vm1608, %v1772, 0
      %1777 = vmatprep.subr.mxu0 0.0
      %1778 = vmatpush1.xpose.msra.mxu0 %v1775
      %1779 = vmatprep.subr.mxu0 0.0
      %1780 = vmatpush1.xpose.msra.mxu0 0.0
      %1781 = vmatprep.subr.mxu0 0.0
      %1782 = vmatpush1.xpose.msra.mxu0 0.0
      %1783 = vmatprep.subr.mxu0 0.0
      %1784 = vmatpush1.xpose.msra.mxu0 0.0
      %1785 = vmatprep.subr.mxu0 0.0
      %1786 = vmatpush1.xpose.msra.mxu0 0.0
      %1787 = vmatprep.subr.mxu0 0.0
      %1788 = vmatpush1.xpose.msra.mxu0 0.0
      %1789 = vmatprep.subr.mxu0 0.0
      %1790 = vmatpush1.xpose.msra.mxu0 0.0
      %1791 = vmatprep.subr.mxu0 0.0
      %1792 = vmatpush1.xpose.msra.mxu0 0.0
      %1793 = vmatprep.subr.mxu0 0.0
      %1794 = vmatpush1.xpose.msra.mxu0 0.0
      %1795 = vmatprep.subr.mxu0 0.0
      %1796 = vmatpush1.xpose.msra.mxu0 0.0
      %1797 = vmatprep.subr.mxu0 0.0
      %1798 = vmatpush1.xpose.msra.mxu0 0.0
      %1799 = vmatprep.subr.mxu0 0.0
      %1800 = vmatpush1.xpose.msra.mxu0 0.0
      %1801 = vmatprep.subr.mxu0 0.0
      %1802 = vmatpush1.xpose.msra.mxu0 0.0
      %1803 = vmatprep.subr.mxu0 0.0
      %1804 = vmatpush1.xpose.msra.mxu0 0.0
      %1805 = vmatprep.subr.mxu0 0.0
      %1806 = vmatpush1.xpose.msra.mxu0 0.0
      %1807 = vmatprep.subr.mxu0 0.0
      %1808 = vmatpush1.xpose.msra.mxu0 0.0
      %1809 = vmatprep.subr.mxu0 0.0
      %1810 = vmatpush1.xpose.msra.mxu0 0.0
      %1811 = vmatprep.subr.mxu0 0.0
      %1812 = vmatpush1.xpose.msra.mxu0 0.0
      %1813 = vmatprep.subr.mxu0 0.0
      %1814 = vmatpush1.xpose.msra.mxu0 0.0
      %1815 = vmatprep.subr.mxu0 0.0
      %1816 = vmatpush1.xpose.msra.mxu0 0.0
      %1817 = vmatprep.subr.mxu0 0.0
      %1818 = vmatpush1.xpose.msra.mxu0 0.0
      %1819 = vmatprep.subr.mxu0 0.0
      %1820 = vmatpush1.xpose.msra.mxu0 0.0
      %1821 = vmatprep.subr.mxu0 0.0
      %1822 = vmatpush1.xpose.msra.mxu0 0.0
      %1823 = vmatprep.subr.mxu0 0.0
      %1824 = vmatpush1.xpose.msra.mxu0 0.0
      %1825 = vmatprep.subr.mxu0 0.0
      %1826 = vmatpush1.xpose.msra.mxu0 0.0
      %1827 = vmatprep.subr.mxu0 0.0
      %1828 = vmatpush1.xpose.msra.mxu0 0.0
      %1829 = vmatprep.subr.mxu0 0.0
      %1830 = vmatpush1.xpose.msra.mxu0 0.0
      %1831 = vmatprep.subr.mxu0 0.0
      %1832 = vmatpush1.xpose.msra.mxu0 0.0
      %1833 = vmatprep.subr.mxu0 0.0
      %1834 = vmatpush1.xpose.msra.mxu0 0.0
      %1835 = vmatprep.subr.mxu0 0.0
      %1836 = vmatpush1.xpose.msra.mxu0 0.0
      %1837 = vmatprep.subr.mxu0 0.0
      %1838 = vmatpush1.xpose.msra.mxu0 0.0
      %1839 = vmatprep.subr.mxu0 0.0
      %1840 = vmatpush1.xpose.msra.mxu0 0.0
      %1841 = vmatprep.mubr.f32.mxu0 0.0
      %1842 = vmatmul.mubr.f32.gmra.mrb[0].mxu0 %v1773
      %v1843 = vpop.f32.mrb[0].mxu0
      %v1844 = vadd.f32 0.0, %v1843
      %v1845 = vpop.f32.mrb[0].mxu0
      %1846 = vdwg.mxu0
      %v1847 = vmul.f32 %v1844, 0.25
      %v1848 = vsel %vm1684, %v1847, -inf
      %1849 = vmax.xlane.f32.xlu0 %v1848
      %v1850 = vpop.xlane.xlu0 %1849
      %v1851 = vsub.f32 %v1847, %v1850
      %v1852 = vmul.f32 %v1851, 1.442695
      %v1853 = vpow.pop %v1852
      %v1854 = vsel %vm1684, %v1853, 0.0
      %1855 = vadd.xlane.f32.xlu0 %v1854
      %v1856 = vpop.xlane.xlu0 %1855
      %v1857 = vrcp.pop %v1856
      %v1858 = vmul.f32 %v1853, %v1857
      %1860 = vrot.lane.b32.xlu0 %v1603, 112
      %v1861 = vpop.permute.xlu0 %1860
      %v1864 = vsel %vm1684, %v1858, 0
      %1866 = vmatprep.subr.mxu0 0.0
      %1867 = vmatpush1.msra.mxu0 %v1861
      %1868 = vmatprep.subr.mxu0 0.0
      %1869 = vmatpush1.msra.mxu0 0.0
      %1870 = vmatprep.subr.mxu0 0.0
      %1871 = vmatpush1.msra.mxu0 0.0
      %1872 = vmatprep.subr.mxu0 0.0
      %1873 = vmatpush1.msra.mxu0 0.0
      %1874 = vmatprep.subr.mxu0 0.0
      %1875 = vmatpush1.msra.mxu0 0.0
      %1876 = vmatprep.subr.mxu0 0.0
      %1877 = vmatpush1.msra.mxu0 0.0
      %1878 = vmatprep.subr.mxu0 0.0
      %1879 = vmatpush1.msra.mxu0 0.0
      %1880 = vmatprep.subr.mxu0 0.0
      %1881 = vmatpush1.msra.mxu0 0.0
      %1882 = vmatprep.subr.mxu0 0.0
      %1883 = vmatpush1.msra.mxu0 0.0
      %1884 = vmatprep.subr.mxu0 0.0
      %1885 = vmatpush1.msra.mxu0 0.0
      %1886 = vmatprep.subr.mxu0 0.0
      %1887 = vmatpush1.msra.mxu0 0.0
      %1888 = vmatprep.subr.mxu0 0.0
      %1889 = vmatpush1.msra.mxu0 0.0
      %1890 = vmatprep.subr.mxu0 0.0
      %1891 = vmatpush1.msra.mxu0 0.0
      %1892 = vmatprep.subr.mxu0 0.0
      %1893 = vmatpush1.msra.mxu0 0.0
      %1894 = vmatprep.subr.mxu0 0.0
      %1895 = vmatpush1.msra.mxu0 0.0
      %1896 = vmatprep.subr.mxu0 0.0
      %1897 = vmatpush1.msra.mxu0 0.0
      %1898 = vmatprep.subr.mxu0 0.0
      %1899 = vmatpush1.msra.mxu0 0.0
      %1900 = vmatprep.subr.mxu0 0.0
      %1901 = vmatpush1.msra.mxu0 0.0
      %1902 = vmatprep.subr.mxu0 0.0
      %1903 = vmatpush1.msra.mxu0 0.0
      %1904 = vmatprep.subr.mxu0 0.0
      %1905 = vmatpush1.msra.mxu0 0.0
      %1906 = vmatprep.subr.mxu0 0.0
      %1907 = vmatpush1.msra.mxu0 0.0
      %1908 = vmatprep.subr.mxu0 0.0
      %1909 = vmatpush1.msra.mxu0 0.0
      %1910 = vmatprep.subr.mxu0 0.0
      %1911 = vmatpush1.msra.mxu0 0.0
      %1912 = vmatprep.subr.mxu0 0.0
      %1913 = vmatpush1.msra.mxu0 0.0
      %1914 = vmatprep.subr.mxu0 0.0
      %1915 = vmatpush1.msra.mxu0 0.0
      %1916 = vmatprep.subr.mxu0 0.0
      %1917 = vmatpush1.msra.mxu0 0.0
      %1918 = vmatprep.subr.mxu0 0.0
      %1919 = vmatpush1.msra.mxu0 0.0
      %1920 = vmatprep.subr.mxu0 0.0
      %1921 = vmatpush1.msra.mxu0 0.0
      %1922 = vmatprep.subr.mxu0 0.0
      %1923 = vmatpush1.msra.mxu0 0.0
      %1924 = vmatprep.subr.mxu0 0.0
      %1925 = vmatpush1.msra.mxu0 0.0
      %1926 = vmatprep.subr.mxu0 0.0
      %1927 = vmatpush1.msra.mxu0 0.0
      %1928 = vmatprep.subr.mxu0 0.0
      %1929 = vmatpush1.msra.mxu0 0.0
      %1930 = vmatprep.mubr.f32.mxu0 0.0
      %1931 = vmatmul.mubr.f32.gmra.mrb[0].mxu0 %v1864
      %v1932 = vpop.f32.mrb[0].mxu0
      %v1933 = vadd.f32 0.0, %v1932
      %v1934 = vpop.f32.mrb[0].mxu0
      %1935 = vdwg.mxu0
      %1936 = vrot.lane.b32.xlu0 %v1601, 96
      %v1937 = vpop.permute.xlu0 %1936
      %1938 = vrot.lane.b32.xlu0 %v1601, 32
      %v1939 = vpop.permute.xlu0 %1938
      %v1940 = vsel %vm1608, %v1937, 0
      %v1942 = vsel %vm1608, %v1939, 0
      %1944 = vmatprep.subr.mxu0 0.0
      %1945 = vmatpush1.xpose.msra.mxu0 %v1942
      %1946 = vmatprep.subr.mxu0 0.0
      %1947 = vmatpush1.xpose.msra.mxu0 0.0
      %1948 = vmatprep.subr.mxu0 0.0
      %1949 = vmatpush1.xpose.msra.mxu0 0.0
      %1950 = vmatprep.subr.mxu0 0.0
      %1951 = vmatpush1.xpose.msra.mxu0 0.0
      %1952 = vmatprep.subr.mxu0 0.0
      %1953 = vmatpush1.xpose.msra.mxu0 0.0
      %1954 = vmatprep.subr.mxu0 0.0
      %1955 = vmatpush1.xpose.msra.mxu0 0.0
      %1956 = vmatprep.subr.mxu0 0.0
      %1957 = vmatpush1.xpose.msra.mxu0 0.0
      %1958 = vmatprep.subr.mxu0 0.0
      %1959 = vmatpush1.xpose.msra.mxu0 0.0
      %1960 = vmatprep.subr.mxu0 0.0
      %1961 = vmatpush1.xpose.msra.mxu0 0.0
      %1962 = vmatprep.subr.mxu0 0.0
      %1963 = vmatpush1.xpose.msra.mxu0 0.0
      %1964 = vmatprep.subr.mxu0 0.0
      %1965 = vmatpush1.xpose.msra.mxu0 0.0
      %1966 = vmatprep.subr.mxu0 0.0
      %1967 = vmatpush1.xpose.msra.mxu0 0.0
      %1968 = vmatprep.subr.mxu0 0.0
      %1969 = vmatpush1.xpose.msra.mxu0 0.0
      %1970 = vmatprep.subr.mxu0 0.0
      %1971 = vmatpush1.xpose.msra.mxu0 0.0
      %1972 = vmatprep.subr.mxu0 0.0
      %1973 = vmatpush1.xpose.msra.mxu0 0.0
      %1974 = vmatprep.subr.mxu0 0.0
      %1975 = vmatpush1.xpose.msra.mxu0 0.0
      %1976 = vmatprep.subr.mxu0 0.0
      %1977 = vmatpush1.xpose.msra.mxu0 0.0
      %1978 = vmatprep.subr.mxu0 0.0
      %1979 = vmatpush1.xpose.msra.mxu0 0.0
      %1980 = vmatprep.subr.mxu0 0.0
      %1981 = vmatpush1.xpose.msra.mxu0 0.0
      %1982 = vmatprep.subr.mxu0 0.0
      %1983 = vmatpush1.xpose.msra.mxu0 0.0
      %1984 = vmatprep.subr.mxu0 0.0
      %1985 = vmatpush1.xpose.msra.mxu0 0.0
      %1986 = vmatprep.subr.mxu0 0.0
      %1987 = vmatpush1.xpose.msra.mxu0 0.0
      %1988 = vmatprep.subr.mxu0 0.0
      %1989 = vmatpush1.xpose.msra.mxu0 0.0
      %1990 = vmatprep.subr.mxu0 0.0
      %1991 = vmatpush1.xpose.msra.mxu0 0.0
      %1992 = vmatprep.subr.mxu0 0.0
      %1993 = vmatpush1.xpose.msra.mxu0 0.0
      %1994 = vmatprep.subr.mxu0 0.0
      %1995 = vmatpush1.xpose.msra.mxu0 0.0
      %1996 = vmatprep.subr.mxu0 0.0
      %1997 = vmatpush1.xpose.msra.mxu0 0.0
      %1998 = vmatprep.subr.mxu0 0.0
      %1999 = vmatpush1.xpose.msra.mxu0 0.0
      %2000 = vmatprep.subr.mxu0 0.0
      %2001 = vmatpush1.xpose.msra.mxu0 0.0
      %2002 = vmatprep.subr.mxu0 0.0
      %2003 = vmatpush1.xpose.msra.mxu0 0.0
      %2004 = vmatprep.subr.mxu0 0.0
      %2005 = vmatpush1.xpose.msra.mxu0 0.0
      %2006 = vmatprep.subr.mxu0 0.0
      %2007 = vmatpush1.xpose.msra.mxu0 0.0
      %2008 = vmatprep.mubr.f32.mxu0 0.0
      %2009 = vmatmul.mubr.f32.gmra.mrb[0].mxu0 %v1940
      %v2010 = vpop.f32.mrb[0].mxu0
      %v2011 = vadd.f32 0.0, %v2010
      %v2012 = vpop.f32.mrb[0].mxu0
      %2013 = vdwg.mxu0
      %v2014 = vmul.f32 %v2011, 0.25
      %v2015 = vsel %vm1684, %v2014, -inf
      %2016 = vmax.xlane.f32.xlu0 %v2015
      %v2017 = vpop.xlane.xlu0 %2016
      %v2018 = vsub.f32 %v2014, %v2017
      %v2019 = vmul.f32 %v2018, 1.442695
      %v2020 = vpow.pop %v2019
      %v2021 = vsel %vm1684, %v2020, 0.0
      %2022 = vadd.xlane.f32.xlu0 %v2021
      %v2023 = vpop.xlane.xlu0 %2022
      %v2024 = vrcp.pop %v2023
      %v2025 = vmul.f32 %v2020, %v2024
      %2026 = vrot.lane.b32.xlu0 %v1603, 96
      %v2027 = vpop.permute.xlu0 %2026
      %v2030 = vsel %vm1684, %v2025, 0
      %2032 = vmatprep.subr.mxu0 0.0
      %2033 = vmatpush1.msra.mxu0 %v2027
      %2034 = vmatprep.subr.mxu0 0.0
      %2035 = vmatpush1.msra.mxu0 0.0
      %2036 = vmatprep.subr.mxu0 0.0
      %2037 = vmatpush1.msra.mxu0 0.0
      %2038 = vmatprep.subr.mxu0 0.0
      %2039 = vmatpush1.msra.mxu0 0.0
      %2040 = vmatprep.subr.mxu0 0.0
      %2041 = vmatpush1.msra.mxu0 0.0
      %2042 = vmatprep.subr.mxu0 0.0
      %2043 = vmatpush1.msra.mxu0 0.0
      %2044 = vmatprep.subr.mxu0 0.0
      %2045 = vmatpush1.msra.mxu0 0.0
      %2046 = vmatprep.subr.mxu0 0.0
      %2047 = vmatpush1.msra.mxu0 0.0
      %2048 = vmatprep.subr.mxu0 0.0
      %2049 = vmatpush1.msra.mxu0 0.0
      %2050 = vmatprep.subr.mxu0 0.0
      %2051 = vmatpush1.msra.mxu0 0.0
      %2052 = vmatprep.subr.mxu0 0.0
      %2053 = vmatpush1.msra.mxu0 0.0
      %2054 = vmatprep.subr.mxu0 0.0
      %2055 = vmatpush1.msra.mxu0 0.0
      %2056 = vmatprep.subr.mxu0 0.0
      %2057 = vmatpush1.msra.mxu0 0.0
      %2058 = vmatprep.subr.mxu0 0.0
      %2059 = vmatpush1.msra.mxu0 0.0
      %2060 = vmatprep.subr.mxu0 0.0
      %2061 = vmatpush1.msra.mxu0 0.0
      %2062 = vmatprep.subr.mxu0 0.0
      %2063 = vmatpush1.msra.mxu0 0.0
      %2064 = vmatprep.subr.mxu0 0.0
      %2065 = vmatpush1.msra.mxu0 0.0
      %2066 = vmatprep.subr.mxu0 0.0
      %2067 = vmatpush1.msra.mxu0 0.0
      %2068 = vmatprep.subr.mxu0 0.0
      %2069 = vmatpush1.msra.mxu0 0.0
      %2070 = vmatprep.subr.mxu0 0.0
      %2071 = vmatpush1.msra.mxu0 0.0
      %2072 = vmatprep.subr.mxu0 0.0
      %2073 = vmatpush1.msra.mxu0 0.0
      %2074 = vmatprep.subr.mxu0 0.0
      %2075 = vmatpush1.msra.mxu0 0.0
      %2076 = vmatprep.subr.mxu0 0.0
      %2077 = vmatpush1.msra.mxu0 0.0
      %2078 = vmatprep.subr.mxu0 0.0
      %2079 = vmatpush1.msra.mxu0 0.0
      %2080 = vmatprep.subr.mxu0 0.0
      %2081 = vmatpush1.msra.mxu0 0.0
      %2082 = vmatprep.subr.mxu0 0.0
      %2083 = vmatpush1.msra.mxu0 0.0
      %2084 = vmatprep.subr.mxu0 0.0
      %2085 = vmatpush1.msra.mxu0 0.0
      %2086 = vmatprep.subr.mxu0 0.0
      %2087 = vmatpush1.msra.mxu0 0.0
      %2088 = vmatprep.subr.mxu0 0.0
      %2089 = vmatpush1.msra.mxu0 0.0
      %2090 = vmatprep.subr.mxu0 0.0
      %2091 = vmatpush1.msra.mxu0 0.0
      %2092 = vmatprep.subr.mxu0 0.0
      %2093 = vmatpush1.msra.mxu0 0.0
      %2094 = vmatprep.subr.mxu0 0.0
      %2095 = vmatpush1.msra.mxu0 0.0
      %2096 = vmatprep.mubr.f32.mxu0 0.0
      %2097 = vmatmul.mubr.f32.gmra.mrb[0].mxu0 %v2030
      %v2098 = vpop.f32.mrb[0].mxu0
      %v2099 = vadd.f32 0.0, %v2098
      %v2100 = vpop.f32.mrb[0].mxu0
      %2101 = vdwg.mxu0
      %2102 = vrot.lane.b32.xlu0 %v1601, 80
      %v2103 = vpop.permute.xlu0 %2102
      %2104 = vrot.lane.b32.xlu0 %v1601, 16
      %v2105 = vpop.permute.xlu0 %2104
      %v2106 = vsel %vm1608, %v2103, 0
      %v2108 = vsel %vm1608, %v2105, 0
      %2110 = vmatprep.subr.mxu0 0.0
      %2111 = vmatpush1.xpose.msra.mxu0 %v2108
      %2112 = vmatprep.subr.mxu0 0.0
      %2113 = vmatpush1.xpose.msra.mxu0 0.0
      %2114 = vmatprep.subr.mxu0 0.0
      %2115 = vmatpush1.xpose.msra.mxu0 0.0
      %2116 = vmatprep.subr.mxu0 0.0
      %2117 = vmatpush1.xpose.msra.mxu0 0.0
      %2118 = vmatprep.subr.mxu0 0.0
      %2119 = vmatpush1.xpose.msra.mxu0 0.0
      %2120 = vmatprep.subr.mxu0 0.0
      %2121 = vmatpush1.xpose.msra.mxu0 0.0
      %2122 = vmatprep.subr.mxu0 0.0
      %2123 = vmatpush1.xpose.msra.mxu0 0.0
      %2124 = vmatprep.subr.mxu0 0.0
      %2125 = vmatpush1.xpose.msra.mxu0 0.0
      %2126 = vmatprep.subr.mxu0 0.0
      %2127 = vmatpush1.xpose.msra.mxu0 0.0
      %2128 = vmatprep.subr.mxu0 0.0
      %2129 = vmatpush1.xpose.msra.mxu0 0.0
      %2130 = vmatprep.subr.mxu0 0.0
      %2131 = vmatpush1.xpose.msra.mxu0 0.0
      %2132 = vmatprep.subr.mxu0 0.0
      %2133 = vmatpush1.xpose.msra.mxu0 0.0
      %2134 = vmatprep.subr.mxu0 0.0
      %2135 = vmatpush1.xpose.msra.mxu0 0.0
      %2136 = vmatprep.subr.mxu0 0.0
      %2137 = vmatpush1.xpose.msra.mxu0 0.0
      %2138 = vmatprep.subr.mxu0 0.0
      %2139 = vmatpush1.xpose.msra.mxu0 0.0
      %2140 = vmatprep.subr.mxu0 0.0
      %2141 = vmatpush1.xpose.msra.mxu0 0.0
      %2142 = vmatprep.subr.mxu0 0.0
      %2143 = vmatpush1.xpose.msra.mxu0 0.0
      %2144 = vmatprep.subr.mxu0 0.0
      %2145 = vmatpush1.xpose.msra.mxu0 0.0
      %2146 = vmatprep.subr.mxu0 0.0
      %2147 = vmatpush1.xpose.msra.mxu0 0.0
      %2148 = vmatprep.subr.mxu0 0.0
      %2149 = vmatpush1.xpose.msra.mxu0 0.0
      %2150 = vmatprep.subr.mxu0 0.0
      %2151 = vmatpush1.xpose.msra.mxu0 0.0
      %2152 = vmatprep.subr.mxu0 0.0
      %2153 = vmatpush1.xpose.msra.mxu0 0.0
      %2154 = vmatprep.subr.mxu0 0.0
      %2155 = vmatpush1.xpose.msra.mxu0 0.0
      %2156 = vmatprep.subr.mxu0 0.0
      %2157 = vmatpush1.xpose.msra.mxu0 0.0
      %2158 = vmatprep.subr.mxu0 0.0
      %2159 = vmatpush1.xpose.msra.mxu0 0.0
      %2160 = vmatprep.subr.mxu0 0.0
      %2161 = vmatpush1.xpose.msra.mxu0 0.0
      %2162 = vmatprep.subr.mxu0 0.0
      %2163 = vmatpush1.xpose.msra.mxu0 0.0
      %2164 = vmatprep.subr.mxu0 0.0
      %2165 = vmatpush1.xpose.msra.mxu0 0.0
      %2166 = vmatprep.subr.mxu0 0.0
      %2167 = vmatpush1.xpose.msra.mxu0 0.0
      %2168 = vmatprep.subr.mxu0 0.0
      %2169 = vmatpush1.xpose.msra.mxu0 0.0
      %2170 = vmatprep.subr.mxu0 0.0
      %2171 = vmatpush1.xpose.msra.mxu0 0.0
      %2172 = vmatprep.subr.mxu0 0.0
      %2173 = vmatpush1.xpose.msra.mxu0 0.0
      %2174 = vmatprep.mubr.f32.mxu0 0.0
      %2175 = vmatmul.mubr.f32.gmra.mrb[0].mxu0 %v2106
      %v2176 = vpop.f32.mrb[0].mxu0
      %v2177 = vadd.f32 0.0, %v2176
      %v2178 = vpop.f32.mrb[0].mxu0
      %2179 = vdwg.mxu0
      %v2180 = vmul.f32 %v2177, 0.25
      %v2181 = vsel %vm1684, %v2180, -inf
      %2182 = vmax.xlane.f32.xlu0 %v2181
      %v2183 = vpop.xlane.xlu0 %2182
      %v2184 = vsub.f32 %v2180, %v2183
      %v2185 = vmul.f32 %v2184, 1.442695
      %v2186 = vpow.pop %v2185
      %v2187 = vsel %vm1684, %v2186, 0.0
      %2188 = vadd.xlane.f32.xlu0 %v2187
      %v2189 = vpop.xlane.xlu0 %2188
      %v2190 = vrcp.pop %v2189
      %v2191 = vmul.f32 %v2186, %v2190
      %2192 = vrot.lane.b32.xlu0 %v1603, 80
      %v2193 = vpop.permute.xlu0 %2192
      %v2196 = vsel %vm1684, %v2191, 0
      %2198 = vmatprep.subr.mxu0 0.0
      %2199 = vmatpush1.msra.mxu0 %v2193
      %2200 = vmatprep.subr.mxu0 0.0
      %2201 = vmatpush1.msra.mxu0 0.0
      %2202 = vmatprep.subr.mxu0 0.0
      %2203 = vmatpush1.msra.mxu0 0.0
      %2204 = vmatprep.subr.mxu0 0.0
      %2205 = vmatpush1.msra.mxu0 0.0
      %2206 = vmatprep.subr.mxu0 0.0
      %2207 = vmatpush1.msra.mxu0 0.0
      %2208 = vmatprep.subr.mxu0 0.0
      %2209 = vmatpush1.msra.mxu0 0.0
      %2210 = vmatprep.subr.mxu0 0.0
      %2211 = vmatpush1.msra.mxu0 0.0
      %2212 = vmatprep.subr.mxu0 0.0
      %2213 = vmatpush1.msra.mxu0 0.0
      %2214 = vmatprep.subr.mxu0 0.0
      %2215 = vmatpush1.msra.mxu0 0.0
      %2216 = vmatprep.subr.mxu0 0.0
      %2217 = vmatpush1.msra.mxu0 0.0
      %2218 = vmatprep.subr.mxu0 0.0
      %2219 = vmatpush1.msra.mxu0 0.0
      %2220 = vmatprep.subr.mxu0 0.0
      %2221 = vmatpush1.msra.mxu0 0.0
      %2222 = vmatprep.subr.mxu0 0.0
      %2223 = vmatpush1.msra.mxu0 0.0
      %2224 = vmatprep.subr.mxu0 0.0
      %2225 = vmatpush1.msra.mxu0 0.0
      %2226 = vmatprep.subr.mxu0 0.0
      %2227 = vmatpush1.msra.mxu0 0.0
      %2228 = vmatprep.subr.mxu0 0.0
      %2229 = vmatpush1.msra.mxu0 0.0
      %2230 = vmatprep.subr.mxu0 0.0
      %2231 = vmatpush1.msra.mxu0 0.0
      %2232 = vmatprep.subr.mxu0 0.0
      %2233 = vmatpush1.msra.mxu0 0.0
      %2234 = vmatprep.subr.mxu0 0.0
      %2235 = vmatpush1.msra.mxu0 0.0
      %2236 = vmatprep.subr.mxu0 0.0
      %2237 = vmatpush1.msra.mxu0 0.0
      %2238 = vmatprep.subr.mxu0 0.0
      %2239 = vmatpush1.msra.mxu0 0.0
      %2240 = vmatprep.subr.mxu0 0.0
      %2241 = vmatpush1.msra.mxu0 0.0
      %2242 = vmatprep.subr.mxu0 0.0
      %2243 = vmatpush1.msra.mxu0 0.0
      %2244 = vmatprep.subr.mxu0 0.0
      %2245 = vmatpush1.msra.mxu0 0.0
      %2246 = vmatprep.subr.mxu0 0.0
      %2247 = vmatpush1.msra.mxu0 0.0
      %2248 = vmatprep.subr.mxu0 0.0
      %2249 = vmatpush1.msra.mxu0 0.0
      %2250 = vmatprep.subr.mxu0 0.0
      %2251 = vmatpush1.msra.mxu0 0.0
      %2252 = vmatprep.subr.mxu0 0.0
      %2253 = vmatpush1.msra.mxu0 0.0
      %2254 = vmatprep.subr.mxu0 0.0
      %2255 = vmatpush1.msra.mxu0 0.0
      %2256 = vmatprep.subr.mxu0 0.0
      %2257 = vmatpush1.msra.mxu0 0.0
      %2258 = vmatprep.subr.mxu0 0.0
      %2259 = vmatpush1.msra.mxu0 0.0
      %2260 = vmatprep.subr.mxu0 0.0
      %2261 = vmatpush1.msra.mxu0 0.0
      %2262 = vmatprep.mubr.f32.mxu0 0.0
      %2263 = vmatmul.mubr.f32.gmra.mrb[0].mxu0 %v2196
      %v2264 = vpop.f32.mrb[0].mxu0
      %v2265 = vadd.f32 0.0, %v2264
      %v2266 = vpop.f32.mrb[0].mxu0
      %2267 = vdwg.mxu0
      %2269 = vrot.lane.b32.xlu0 %v1933, 16
      %v2270 = vpop.permute.xlu0 %2269
      %2273 = vrot.lane.b32.xlu0 %v2099, 32
      %v2274 = vpop.permute.xlu0 %2273
      %2277 = vrot.lane.b32.xlu0 %v2265, 48
      %v2278 = vpop.permute.xlu0 %2277
      %v2280 = vsel %vm1608, %v1766, %v2270
      %vm2281 = vcmask 261120
      %v2282 = vsel %vm2281, %v2280, %v2274
      %vm2283 = vcmask 392192
      %v2284 = vsel %vm2283, %v2282, %v2278
      %v2285 = vld [vmem:[%s1209] sm:$0xff]
      %v2286 = vld [vmem:[%s1209 + $0x8] sm:$0xff]
      %v2287 = vld [vmem:[%s1209 + $0x10] sm:$0xff]
      %v2288 = vld [vmem:[%s1209 + $0x18] sm:$0xff]
      %v2289 = vld [vmem:[%s1209 + $0x20] sm:$0xff]
      %v2290 = vld [vmem:[%s1209 + $0x28] sm:$0xff]
      %v2291 = vld [vmem:[%s1209 + $0x30] sm:$0xff]
      %v2292 = vld [vmem:[%s1209 + $0x38] sm:$0xff]
      %v2293 = vld [vmem:[%s1212] sm:$0x1]
      %v2295 = vlaneseq
      %v2296 = vshrl.u32 %v2295, 7
      %v2297 = vsub.s32 0, %v2296
      %v2298 = vrot.slane %v2293, %v2297
      %v2301 = vsel %vm1530, %v2284, 0
      %2303 = vmatprep.subr.mxu0 0.0
      %2304 = vmatpush1.msra.mxu0 %v2285
      %2305 = vmatprep.subr.mxu0 0.0
      %2306 = vmatpush1.msra.mxu0 %v2286
      %2307 = vmatprep.subr.mxu0 0.0
      %2308 = vmatpush1.msra.mxu0 %v2287
      %2309 = vmatprep.subr.mxu0 0.0
      %2310 = vmatpush1.msra.mxu0 %v2288
      %2311 = vmatprep.subr.mxu0 0.0
      %2312 = vmatpush1.msra.mxu0 %v2289
      %2313 = vmatprep.subr.mxu0 0.0
      %2314 = vmatpush1.msra.mxu0 %v2290
      %2315 = vmatprep.subr.mxu0 0.0
      %2316 = vmatpush1.msra.mxu0 %v2291
      %2317 = vmatprep.subr.mxu0 0.0
      %2318 = vmatpush1.msra.mxu0 %v2292
      %2319 = vmatprep.subr.mxu0 0.0
      %2320 = vmatpush1.msra.mxu0 0.0
      %2321 = vmatprep.subr.mxu0 0.0
      %2322 = vmatpush1.msra.mxu0 0.0
      %2323 = vmatprep.subr.mxu0 0.0
      %2324 = vmatpush1.msra.mxu0 0.0
      %2325 = vmatprep.subr.mxu0 0.0
      %2326 = vmatpush1.msra.mxu0 0.0
      %2327 = vmatprep.subr.mxu0 0.0
      %2328 = vmatpush1.msra.mxu0 0.0
      %2329 = vmatprep.subr.mxu0 0.0
      %2330 = vmatpush1.msra.mxu0 0.0
      %2331 = vmatprep.subr.mxu0 0.0
      %2332 = vmatpush1.msra.mxu0 0.0
      %2333 = vmatprep.subr.mxu0 0.0
      %2334 = vmatpush1.msra.mxu0 0.0
      %2335 = vmatprep.subr.mxu0 0.0
      %2336 = vmatpush1.msra.mxu0 0.0
      %2337 = vmatprep.subr.mxu0 0.0
      %2338 = vmatpush1.msra.mxu0 0.0
      %2339 = vmatprep.subr.mxu0 0.0
      %2340 = vmatpush1.msra.mxu0 0.0
      %2341 = vmatprep.subr.mxu0 0.0
      %2342 = vmatpush1.msra.mxu0 0.0
      %2343 = vmatprep.subr.mxu0 0.0
      %2344 = vmatpush1.msra.mxu0 0.0
      %2345 = vmatprep.subr.mxu0 0.0
      %2346 = vmatpush1.msra.mxu0 0.0
      %2347 = vmatprep.subr.mxu0 0.0
      %2348 = vmatpush1.msra.mxu0 0.0
      %2349 = vmatprep.subr.mxu0 0.0
      %2350 = vmatpush1.msra.mxu0 0.0
      %2351 = vmatprep.subr.mxu0 0.0
      %2352 = vmatpush1.msra.mxu0 0.0
      %2353 = vmatprep.subr.mxu0 0.0
      %2354 = vmatpush1.msra.mxu0 0.0
      %2355 = vmatprep.subr.mxu0 0.0
      %2356 = vmatpush1.msra.mxu0 0.0
      %2357 = vmatprep.subr.mxu0 0.0
      %2358 = vmatpush1.msra.mxu0 0.0
      %2359 = vmatprep.subr.mxu0 0.0
      %2360 = vmatpush1.msra.mxu0 0.0
      %2361 = vmatprep.subr.mxu0 0.0
      %2362 = vmatpush1.msra.mxu0 0.0
      %2363 = vmatprep.subr.mxu0 0.0
      %2364 = vmatpush1.msra.mxu0 0.0
      %2365 = vmatprep.subr.mxu0 0.0
      %2366 = vmatpush1.msra.mxu0 0.0
      %2367 = vmatprep.mubr.f32.mxu0 0.0
      %2368 = vmatmul.mubr.f32.gmra.mrb[0].mxu0 %v2301
      %v2369 = vpop.f32.mrb[0].mxu0
      %v2370 = vadd.f32 %v2298, %v2369
      %v2371 = vpop.f32.mrb[0].mxu0
      %2372 = vdwg.mxu0
      %v2373 = vadd.f32 %v1501, %v2370
      %v2374 = vld [vmem:[%s1215] sm:$0x1]
      %v2375 = vld [vmem:[%s1218] sm:$0x1]
      %v2376 = vsel %vm1530, %v2373, 0.0
      %2377 = vadd.xlane.f32.xlu0 %v2376
      %v2378 = vpop.xlane.xlu0 %2377
      %v2379 = vrcp.pop 64.0
      %v2380 = vmul.f32 %v2378, %v2379
      %v2381 = vsub.f32 %v2373, %v2380
      %v2382 = vmul.f32 %v2381, %v2381
      %v2383 = vsel %vm1530, %v2382, 0.0
      %2384 = vadd.xlane.f32.xlu0 %v2383
      %v2385 = vpop.xlane.xlu0 %2384
      %v2386 = vmul.f32 %v2385, %v2379
      %v2387 = vadd.f32 %v2386, 1e-05
      %v2388 = vrsqrt.pop %v2387
      %v2389 = vmul.f32 %v2381, %v2388
      %v2391 = vlaneseq
      %v2392 = vshrl.u32 %v2391, 7
      %v2393 = vsub.s32 0, %v2392
      %v2394 = vrot.slane %v2374, %v2393
      %v2396 = vmul.f32 %v2389, %v2394
      %v2398 = vlaneseq
      %v2399 = vshrl.u32 %v2398, 7
      %v2400 = vsub.s32 0, %v2399
      %v2401 = vrot.slane %v2375, %v2400
      %v2403 = vadd.f32 %v2396, %v2401
      %v2404 = vld [vmem:[%s1223] sm:$0xff]
      %v2405 = vld [vmem:[%s1223 + $0x8] sm:$0xff]
      %v2406 = vld [vmem:[%s1223 + $0x10] sm:$0xff]
      %v2407 = vld [vmem:[%s1223 + $0x18] sm:$0xff]
      %v2408 = vld [vmem:[%s1223 + $0x20] sm:$0xff]
      %v2409 = vld [vmem:[%s1223 + $0x28] sm:$0xff]
      %v2410 = vld [vmem:[%s1223 + $0x30] sm:$0xff]
      %v2411 = vld [vmem:[%s1223 + $0x38] sm:$0xff]
      %v2412 = vld [vmem:[%s1223 + $0x40] sm:$0xff]
      %v2413 = vld [vmem:[%s1223 + $0x48] sm:$0xff]
      %v2414 = vld [vmem:[%s1223 + $0x50] sm:$0xff]
      %v2415 = vld [vmem:[%s1223 + $0x58] sm:$0xff]
      %v2416 = vld [vmem:[%s1223 + $0x60] sm:$0xff]
      %v2417 = vld [vmem:[%s1223 + $0x68] sm:$0xff]
      %v2418 = vld [vmem:[%s1223 + $0x70] sm:$0xff]
      %v2419 = vld [vmem:[%s1223 + $0x78] sm:$0xff]
      %v2420 = vld [vmem:[%s1227] sm:$0x3]
      %v2422 = vlaneseq
      %v2423 = vshrl.u32 %v2422, 7
      %v2424 = vsub.s32 0, %v2423
      %v2425 = vrot.slane %v2420, %v2424
      %v2426 = vlaneseq
      %v2427 = vshrl.u32 %v2426, 7
      %v2428 = vsub.s32 1, %v2427
      %v2429 = vrot.slane %v2420, %v2428
      %v2433 = vsel %vm1530, %v2403, 0
      %2435 = vmatprep.subr.mxu0 %v2405
      %2436 = vmatpush1.msra.mxu0 %v2404
      %2437 = vmatprep.subr.mxu0 %v2407
      %2438 = vmatpush1.msra.mxu0 %v2406
      %2439 = vmatprep.subr.mxu0 %v2409
      %2440 = vmatpush1.msra.mxu0 %v2408
      %2441 = vmatprep.subr.mxu0 %v2411
      %2442 = vmatpush1.msra.mxu0 %v2410
      %2443 = vmatprep.subr.mxu0 %v2413
      %2444 = vmatpush1.msra.mxu0 %v2412
      %2445 = vmatprep.subr.mxu0 %v2415
      %2446 = vmatpush1.msra.mxu0 %v2414
      %2447 = vmatprep.subr.mxu0 %v2417
      %2448 = vmatpush1.msra.mxu0 %v2416
      %2449 = vmatprep.subr.mxu0 %v2419
      %2450 = vmatpush1.msra.mxu0 %v2418
      %2451 = vmatprep.subr.mxu0 0.0
      %2452 = vmatpush1.msra.mxu0 0.0
      %2453 = vmatprep.subr.mxu0 0.0
      %2454 = vmatpush1.msra.mxu0 0.0
      %2455 = vmatprep.subr.mxu0 0.0
      %2456 = vmatpush1.msra.mxu0 0.0
      %2457 = vmatprep.subr.mxu0 0.0
      %2458 = vmatpush1.msra.mxu0 0.0
      %2459 = vmatprep.subr.mxu0 0.0
      %2460 = vmatpush1.msra.mxu0 0.0
      %2461 = vmatprep.subr.mxu0 0.0
      %2462 = vmatpush1.msra.mxu0 0.0
      %2463 = vmatprep.subr.mxu0 0.0
      %2464 = vmatpush1.msra.mxu0 0.0
      %2465 = vmatprep.subr.mxu0 0.0
      %2466 = vmatpush1.msra.mxu0 0.0
      %2467 = vmatprep.subr.mxu0 0.0
      %2468 = vmatpush1.msra.mxu0 0.0
      %2469 = vmatprep.subr.mxu0 0.0
      %2470 = vmatpush1.msra.mxu0 0.0
      %2471 = vmatprep.subr.mxu0 0.0
      %2472 = vmatpush1.msra.mxu0 0.0
      %2473 = vmatprep.subr.mxu0 0.0
      %2474 = vmatpush1.msra.mxu0 0.0
      %2475 = vmatprep.subr.mxu0 0.0
      %2476 = vmatpush1.msra.mxu0 0.0
      %2477 = vmatprep.subr.mxu0 0.0
      %2478 = vmatpush1.msra.mxu0 0.0
      %2479 = vmatprep.subr.mxu0 0.0
      %2480 = vmatpush1.msra.mxu0 0.0
      %2481 = vmatprep.subr.mxu0 0.0
      %2482 = vmatpush1.msra.mxu0 0.0
      %2483 = vmatprep.subr.mxu0 0.0
      %2484 = vmatpush1.msra.mxu0 0.0
      %2485 = vmatprep.subr.mxu0 0.0
      %2486 = vmatpush1.msra.mxu0 0.0
      %2487 = vmatprep.subr.mxu0 0.0
      %2488 = vmatpush1.msra.mxu0 0.0
      %2489 = vmatprep.subr.mxu0 0.0
      %2490 = vmatpush1.msra.mxu0 0.0
      %2491 = vmatprep.subr.mxu0 0.0
      %2492 = vmatpush1.msra.mxu0 0.0
      %2493 = vmatprep.subr.mxu0 0.0
      %2494 = vmatpush1.msra.mxu0 0.0
      %2495 = vmatprep.subr.mxu0 0.0
      %2496 = vmatpush1.msra.mxu0 0.0
      %2497 = vmatprep.subr.mxu0 0.0
      %2498 = vmatpush1.msra.mxu0 0.0
      %2499 = vmatprep.mubr.f32.mxu0 0.0
      %2500 = vmatmul.mubr.f32.gmra.mrb[0].mxu0 %v2433
      %v2501 = vpop.f32.mrb[0].mxu0
      %v2502 = vadd.f32 %v2425, %v2501
      %v2503 = vpop.f32.mrb[0].mxu0
      %v2504 = vadd.f32 %v2429, %v2503
      %2505 = vdwg.mxu0
      %v2506 = vmax.f32 %v2502, 0.0
      %v2507 = vmax.f32 %v2504, 0.0
      %v2508 = vld [vmem:[%s1232] sm:$0xff]
      %v2509 = vld [vmem:[%s1232 + $0x8] sm:$0xff]
      %v2510 = vld [vmem:[%s1232 + $0x10] sm:$0xff]
      %v2511 = vld [vmem:[%s1232 + $0x18] sm:$0xff]
      %v2512 = vld [vmem:[%s1232 + $0x20] sm:$0xff]
      %v2513 = vld [vmem:[%s1232 + $0x28] sm:$0xff]
      %v2514 = vld [vmem:[%s1232 + $0x30] sm:$0xff]
      %v2515 = vld [vmem:[%s1232 + $0x38] sm:$0xff]
      %v2516 = vld [vmem:[%s1232 + $0x40] sm:$0xff]
      %v2517 = vld [vmem:[%s1232 + $0x48] sm:$0xff]
      %v2518 = vld [vmem:[%s1232 + $0x50] sm:$0xff]
      %v2519 = vld [vmem:[%s1232 + $0x58] sm:$0xff]
      %v2520 = vld [vmem:[%s1232 + $0x60] sm:$0xff]
      %v2521 = vld [vmem:[%s1232 + $0x68] sm:$0xff]
      %v2522 = vld [vmem:[%s1232 + $0x70] sm:$0xff]
      %v2523 = vld [vmem:[%s1232 + $0x78] sm:$0xff]
      %v2524 = vld [vmem:[%s1232 + $0x80] sm:$0xff]
      %v2525 = vld [vmem:[%s1232 + $0x88] sm:$0xff]
      %v2526 = vld [vmem:[%s1232 + $0x90] sm:$0xff]
      %v2527 = vld [vmem:[%s1232 + $0x98] sm:$0xff]
      %v2528 = vld [vmem:[%s1232 + $0xa0] sm:$0xff]
      %v2529 = vld [vmem:[%s1232 + $0xa8] sm:$0xff]
      %v2530 = vld [vmem:[%s1232 + $0xb0] sm:$0xff]
      %v2531 = vld [vmem:[%s1232 + $0xb8] sm:$0xff]
      %v2532 = vld [vmem:[%s1232 + $0xc0] sm:$0xff]
      %v2533 = vld [vmem:[%s1232 + $0xc8] sm:$0xff]
      %v2534 = vld [vmem:[%s1232 + $0xd0] sm:$0xff]
      %v2535 = vld [vmem:[%s1232 + $0xd8] sm:$0xff]
      %v2536 = vld [vmem:[%s1232 + $0xe0] sm:$0xff]
      %v2537 = vld [vmem:[%s1232 + $0xe8] sm:$0xff]
      %v2538 = vld [vmem:[%s1232 + $0xf0] sm:$0xff]
      %v2539 = vld [vmem:[%s1232 + $0xf8] sm:$0xff]
      %v2540 = vld [vmem:[%s1235] sm:$0x1]
      %v2542 = vlaneseq
      %v2543 = vshrl.u32 %v2542, 7
      %v2544 = vsub.s32 0, %v2543
      %v2545 = vrot.slane %v2540, %v2544
      %2547 = vmatprep.subr.mxu0 0.0
      %2548 = vmatpush1.msra.mxu0 %v2508
      %2549 = vmatprep.subr.mxu0 0.0
      %2550 = vmatpush1.msra.mxu0 %v2509
      %2551 = vmatprep.subr.mxu0 0.0
      %2552 = vmatpush1.msra.mxu0 %v2510
      %2553 = vmatprep.subr.mxu0 0.0
      %2554 = vmatpush1.msra.mxu0 %v2511
      %2555 = vmatprep.subr.mxu0 0.0
      %2556 = vmatpush1.msra.mxu0 %v2512
      %2557 = vmatprep.subr.mxu0 0.0
      %2558 = vmatpush1.msra.mxu0 %v2513
      %2559 = vmatprep.subr.mxu0 0.0
      %2560 = vmatpush1.msra.mxu0 %v2514
      %2561 = vmatprep.subr.mxu0 0.0
      %2562 = vmatpush1.msra.mxu0 %v2515
      %2563 = vmatprep.subr.mxu0 0.0
      %2564 = vmatpush1.msra.mxu0 %v2516
      %2565 = vmatprep.subr.mxu0 0.0
      %2566 = vmatpush1.msra.mxu0 %v2517
      %2567 = vmatprep.subr.mxu0 0.0
      %2568 = vmatpush1.msra.mxu0 %v2518
      %2569 = vmatprep.subr.mxu0 0.0
      %2570 = vmatpush1.msra.mxu0 %v2519
      %2571 = vmatprep.subr.mxu0 0.0
      %2572 = vmatpush1.msra.mxu0 %v2520
      %2573 = vmatprep.subr.mxu0 0.0
      %2574 = vmatpush1.msra.mxu0 %v2521
      %2575 = vmatprep.subr.mxu0 0.0
      %2576 = vmatpush1.msra.mxu0 %v2522
      %2577 = vmatprep.subr.mxu0 0.0
      %2578 = vmatpush1.msra.mxu0 %v2523
      %2579 = vmatprep.subr.mxu0 0.0
      %2580 = vmatpush1.msra.mxu0 %v2524
      %2581 = vmatprep.subr.mxu0 0.0
      %2582 = vmatpush1.msra.mxu0 %v2525
      %2583 = vmatprep.subr.mxu0 0.0
      %2584 = vmatpush1.msra.mxu0 %v2526
      %2585 = vmatprep.subr.mxu0 0.0
      %2586 = vmatpush1.msra.mxu0 %v2527
      %2587 = vmatprep.subr.mxu0 0.0
      %2588 = vmatpush1.msra.mxu0 %v2528
      %2589 = vmatprep.subr.mxu0 0.0
      %2590 = vmatpush1.msra.mxu0 %v2529
      %2591 = vmatprep.subr.mxu0 0.0
      %2592 = vmatpush1.msra.mxu0 %v2530
      %2593 = vmatprep.subr.mxu0 0.0
      %2594 = vmatpush1.msra.mxu0 %v2531
      %2595 = vmatprep.subr.mxu0 0.0
      %2596 = vmatpush1.msra.mxu0 %v2532
      %2597 = vmatprep.subr.mxu0 0.0
      %2598 = vmatpush1.msra.mxu0 %v2533
      %2599 = vmatprep.subr.mxu0 0.0
      %2600 = vmatpush1.msra.mxu0 %v2534
      %2601 = vmatprep.subr.mxu0 0.0
      %2602 = vmatpush1.msra.mxu0 %v2535
      %2603 = vmatprep.subr.mxu0 0.0
      %2604 = vmatpush1.msra.mxu0 %v2536
      %2605 = vmatprep.subr.mxu0 0.0
      %2606 = vmatpush1.msra.mxu0 %v2537
      %2607 = vmatprep.subr.mxu0 0.0
      %2608 = vmatpush1.msra.mxu0 %v2538
      %2609 = vmatprep.subr.mxu0 0.0
      %2610 = vmatpush1.msra.mxu0 %v2539
      %2611 = vmatprep.mubr.f32.mxu0 %v2507
      %2612 = vmatmul.mubr.f32.gmra.mrb[0].mxu0 %v2506
      %v2613 = vpop.f32.mrb[0].mxu0
      %v2614 = vadd.f32 %v2545, %v2613
      %v2615 = vpop.f32.mrb[0].mxu0
      %2616 = vdwg.mxu0
      %v2617 = vadd.f32 %v2403, %v2614
      %v2618 = vld [vmem:[%s1238] sm:$0x1]
      %v2619 = vld [vmem:[%s1241] sm:$0x1]
      %v2620 = vsel %vm1530, %v2617, 0.0
      %2621 = vadd.xlane.f32.xlu0 %v2620
      %v2622 = vpop.xlane.xlu0 %2621
      %v2623 = vmul.f32 %v2622, %v2379
      %v2624 = vsub.f32 %v2617, %v2623
      %v2625 = vmul.f32 %v2624, %v2624
      %v2626 = vsel %vm1530, %v2625, 0.0
      %2627 = vadd.xlane.f32.xlu0 %v2626
      %v2628 = vpop.xlane.xlu0 %2627
      %v2629 = vmul.f32 %v2628, %v2379
      %v2630 = vadd.f32 %v2629, 1e-05
      %v2631 = vrsqrt.pop %v2630
      %v2632 = vmul.f32 %v2624, %v2631
      %v2634 = vlaneseq
      %v2635 = vshrl.u32 %v2634, 7
      %v2636 = vsub.s32 0, %v2635
      %v2637 = vrot.slane %v2618, %v2636
      %v2639 = vmul.f32 %v2632, %v2637
      %v2641 = vlaneseq
      %v2642 = vshrl.u32 %v2641, 7
      %v2643 = vsub.s32 0, %v2642
      %v2644 = vrot.slane %v2619, %v2643
      %v2646 = vadd.f32 %v2639, %v2644
      %2647 = vst.msk [vmem:[#allocation2] sm:$0xff] %vm1530, %v2646
      %p2648 = scmp.eq.s32.totalorder %s88, 1
      // Predicated region
      $region153: #{tpu_custom_call.1} parent=147 // pred_check
        %p2649 = pneg %p2648
      $region154: #{tpu_custom_call.1} parent=147 // pred_check_branch
        %2651 = sbr.rel (%p2649) target = $region156
      $region155: #{tpu_custom_call.1} parent=147 // pred_region
        %v2652 = vsel %vm1530, %v2646, 0.0
        %v2653 = vrot.slane %v2652, 4
        %v2654 = vadd.f32 %v2652, %v2653
        %v2655 = vrot.slane %v2654, 2
        %v2656 = vadd.f32 %v2654, %v2655
        %v2657 = vrot.slane %v2656, 1
        %v2658 = vadd.f32 %v2656, %v2657
        %v2659 = vrcp.pop 8.0
        %v2660 = vmul.f32 %v2658, %v2659
        %v2661 = vld [vmem:[%s49] sm:$0xff]
        %v2662 = vld [vmem:[%s49 + $0x8] sm:$0xff]
        %v2663 = vld [vmem:[%s49 + $0x10] sm:$0xff]
        %v2664 = vld [vmem:[%s49 + $0x18] sm:$0xff]
        %v2665 = vld [vmem:[%s49 + $0x20] sm:$0xff]
        %v2666 = vld [vmem:[%s49 + $0x28] sm:$0xff]
        %v2667 = vld [vmem:[%s49 + $0x30] sm:$0xff]
        %v2668 = vld [vmem:[%s49 + $0x38] sm:$0xff]
        %v2669 = vld [vmem:[%s51] sm:$0x1]
        %v2670 = vld [vmem:[%s53] sm:$0x1]
        %v2671 = vld [vmem:[#allocation3] sm:$0x1]
        %v2673 = vsel %vm1530, %v2660, 0
        %2675 = vmatprep.subr.mxu0 0.0
        %2676 = vmatpush1.msra.mxu0 %v2661
        %2677 = vmatprep.subr.mxu0 0.0
        %2678 = vmatpush1.msra.mxu0 %v2662
        %2679 = vmatprep.subr.mxu0 0.0
        %2680 = vmatpush1.msra.mxu0 %v2663
        %2681 = vmatprep.subr.mxu0 0.0
        %2682 = vmatpush1.msra.mxu0 %v2664
        %2683 = vmatprep.subr.mxu0 0.0
        %2684 = vmatpush1.msra.mxu0 %v2665
        %2685 = vmatprep.subr.mxu0 0.0
        %2686 = vmatpush1.msra.mxu0 %v2666
        %2687 = vmatprep.subr.mxu0 0.0
        %2688 = vmatpush1.msra.mxu0 %v2667
        %2689 = vmatprep.subr.mxu0 0.0
        %2690 = vmatpush1.msra.mxu0 %v2668
        %2691 = vmatprep.subr.mxu0 0.0
        %2692 = vmatpush1.msra.mxu0 0.0
        %2693 = vmatprep.subr.mxu0 0.0
        %2694 = vmatpush1.msra.mxu0 0.0
        %2695 = vmatprep.subr.mxu0 0.0
        %2696 = vmatpush1.msra.mxu0 0.0
        %2697 = vmatprep.subr.mxu0 0.0
        %2698 = vmatpush1.msra.mxu0 0.0
        %2699 = vmatprep.subr.mxu0 0.0
        %2700 = vmatpush1.msra.mxu0 0.0
        %2701 = vmatprep.subr.mxu0 0.0
        %2702 = vmatpush1.msra.mxu0 0.0
        %2703 = vmatprep.subr.mxu0 0.0
        %2704 = vmatpush1.msra.mxu0 0.0
        %2705 = vmatprep.subr.mxu0 0.0
        %2706 = vmatpush1.msra.mxu0 0.0
        %2707 = vmatprep.subr.mxu0 0.0
        %2708 = vmatpush1.msra.mxu0 0.0
        %2709 = vmatprep.subr.mxu0 0.0
        %2710 = vmatpush1.msra.mxu0 0.0
        %2711 = vmatprep.subr.mxu0 0.0
        %2712 = vmatpush1.msra.mxu0 0.0
        %2713 = vmatprep.subr.mxu0 0.0
        %2714 = vmatpush1.msra.mxu0 0.0
        %2715 = vmatprep.subr.mxu0 0.0
        %2716 = vmatpush1.msra.mxu0 0.0
        %2717 = vmatprep.subr.mxu0 0.0
        %2718 = vmatpush1.msra.mxu0 0.0
        %2719 = vmatprep.subr.mxu0 0.0
        %2720 = vmatpush1.msra.mxu0 0.0
        %2721 = vmatprep.subr.mxu0 0.0
        %2722 = vmatpush1.msra.mxu0 0.0
        %2723 = vmatprep.subr.mxu0 0.0
        %2724 = vmatpush1.msra.mxu0 0.0
        %2725 = vmatprep.subr.mxu0 0.0
        %2726 = vmatpush1.msra.mxu0 0.0
        %2727 = vmatprep.subr.mxu0 0.0
        %2728 = vmatpush1.msra.mxu0 0.0
        %2729 = vmatprep.subr.mxu0 0.0
        %2730 = vmatpush1.msra.mxu0 0.0
        %2731 = vmatprep.subr.mxu0 0.0
        %2732 = vmatpush1.msra.mxu0 0.0
        %2733 = vmatprep.subr.mxu0 0.0
        %2734 = vmatpush1.msra.mxu0 0.0
        %2735 = vmatprep.subr.mxu0 0.0
        %2736 = vmatpush1.msra.mxu0 0.0
        %2737 = vmatprep.subr.mxu0 0.0
        %2738 = vmatpush1.msra.mxu0 0.0
        %2739 = vmatprep.mubr.f32.mxu0 0.0
        %2740 = vmatmul.mubr.f32.gmra.mrb[0].mxu0 %v2673
        %v2741 = vpop.f32.mrb[0].mxu0
        %v2742 = vadd.f32 %v2669, %v2741
        %v2743 = vpop.f32.mrb[0].mxu0
        %2744 = vdwg.mxu0
        %v2745 = vmax.f32 %v2742, 0.0
        %v2746 = vmul.f32 %v2745, %v2670
        %vm2747 = vcmask 122880
        %v2748 = vsel %vm2747, %v2746, 0.0
        %2749 = vadd.xlane.f32.xlu0 %v2748
        %v2750 = vpop.xlane.xlu0 %2749
        %v2751 = vadd.f32 %v2750, %v2671
        %v2752 = vsub.f32 0.0, %v2751
        %v2753 = vmul.f32 %v2752, 1.442695
        %v2754 = vpow.pop %v2753
        %v2755 = vadd.f32 %v2754, 1.0
        %v2756 = vrcp.pop %v2755
        %vm2757 = vcmask 0
        %2758 = vst.msk [vmem:[%s1244] sm:$0x1] %vm2757, %v2756
        %v2759 = vld [vmem:[%s57] sm:$0xff]
        %v2760 = vld [vmem:[%s57 + $0x8] sm:$0xff]
        %v2761 = vld [vmem:[%s57 + $0x10] sm:$0xff]
        %v2762 = vld [vmem:[%s57 + $0x18] sm:$0xff]
        %v2763 = vld [vmem:[%s57 + $0x20] sm:$0xff]
        %v2764 = vld [vmem:[%s57 + $0x28] sm:$0xff]
        %v2765 = vld [vmem:[%s57 + $0x30] sm:$0xff]
        %v2766 = vld [vmem:[%s57 + $0x38] sm:$0xff]
        %v2767 = vld [vmem:[%s59] sm:$0x1]
        %v2768 = vld [vmem:[%s61] sm:$0x1]
        %v2769 = vld [vmem:[#allocation4] sm:$0x1]
        %2770 = vmatprep.subr.mxu0 0.0
        %2771 = vmatpush1.msra.mxu0 %v2759
        %2772 = vmatprep.subr.mxu0 0.0
        %2773 = vmatpush1.msra.mxu0 %v2760
        %2774 = vmatprep.subr.mxu0 0.0
        %2775 = vmatpush1.msra.mxu0 %v2761
        %2776 = vmatprep.subr.mxu0 0.0
        %2777 = vmatpush1.msra.mxu0 %v2762
        %2778 = vmatprep.subr.mxu0 0.0
        %2779 = vmatpush1.msra.mxu0 %v2763
        %2780 = vmatprep.subr.mxu0 0.0
        %2781 = vmatpush1.msra.mxu0 %v2764
        %2782 = vmatprep.subr.mxu0 0.0
        %2783 = vmatpush1.msra.mxu0 %v2765
        %2784 = vmatprep.subr.mxu0 0.0
        %2785 = vmatpush1.msra.mxu0 %v2766
        %2786 = vmatprep.subr.mxu0 0.0
        %2787 = vmatpush1.msra.mxu0 0.0
        %2788 = vmatprep.subr.mxu0 0.0
        %2789 = vmatpush1.msra.mxu0 0.0
        %2790 = vmatprep.subr.mxu0 0.0
        %2791 = vmatpush1.msra.mxu0 0.0
        %2792 = vmatprep.subr.mxu0 0.0
        %2793 = vmatpush1.msra.mxu0 0.0
        %2794 = vmatprep.subr.mxu0 0.0
        %2795 = vmatpush1.msra.mxu0 0.0
        %2796 = vmatprep.subr.mxu0 0.0
        %2797 = vmatpush1.msra.mxu0 0.0
        %2798 = vmatprep.subr.mxu0 0.0
        %2799 = vmatpush1.msra.mxu0 0.0
        %2800 = vmatprep.subr.mxu0 0.0
        %2801 = vmatpush1.msra.mxu0 0.0
        %2802 = vmatprep.subr.mxu0 0.0
        %2803 = vmatpush1.msra.mxu0 0.0
        %2804 = vmatprep.subr.mxu0 0.0
        %2805 = vmatpush1.msra.mxu0 0.0
        %2806 = vmatprep.subr.mxu0 0.0
        %2807 = vmatpush1.msra.mxu0 0.0
        %2808 = vmatprep.subr.mxu0 0.0
        %2809 = vmatpush1.msra.mxu0 0.0
        %2810 = vmatprep.subr.mxu0 0.0
        %2811 = vmatpush1.msra.mxu0 0.0
        %2812 = vmatprep.subr.mxu0 0.0
        %2813 = vmatpush1.msra.mxu0 0.0
        %2814 = vmatprep.subr.mxu0 0.0
        %2815 = vmatpush1.msra.mxu0 0.0
        %2816 = vmatprep.subr.mxu0 0.0
        %2817 = vmatpush1.msra.mxu0 0.0
        %2818 = vmatprep.subr.mxu0 0.0
        %2819 = vmatpush1.msra.mxu0 0.0
        %2820 = vmatprep.subr.mxu0 0.0
        %2821 = vmatpush1.msra.mxu0 0.0
        %2822 = vmatprep.subr.mxu0 0.0
        %2823 = vmatpush1.msra.mxu0 0.0
        %2824 = vmatprep.subr.mxu0 0.0
        %2825 = vmatpush1.msra.mxu0 0.0
        %2826 = vmatprep.subr.mxu0 0.0
        %2827 = vmatpush1.msra.mxu0 0.0
        %2828 = vmatprep.subr.mxu0 0.0
        %2829 = vmatpush1.msra.mxu0 0.0
        %2830 = vmatprep.subr.mxu0 0.0
        %2831 = vmatpush1.msra.mxu0 0.0
        %2832 = vmatprep.subr.mxu0 0.0
        %2833 = vmatpush1.msra.mxu0 0.0
        %2834 = vmatprep.mubr.f32.mxu0 0.0
        %2835 = vmatmul.mubr.f32.gmra.mrb[0].mxu0 %v2673
        %v2836 = vpop.f32.mrb[0].mxu0
        %v2837 = vadd.f32 %v2767, %v2836
        %v2838 = vpop.f32.mrb[0].mxu0
        %2839 = vdwg.mxu0
        %v2840 = vmax.f32 %v2837, 0.0
        %v2841 = vmul.f32 %v2840, %v2768
        %v2842 = vsel %vm2747, %v2841, 0.0
        %2843 = vadd.xlane.f32.xlu0 %v2842
        %v2844 = vpop.xlane.xlu0 %2843
        %v2845 = vadd.f32 %v2844, %v2769
        %v2846 = vsub.f32 0.0, %v2845
        %v2847 = vmul.f32 %v2846, 1.442695
        %v2848 = vpow.pop %v2847
        %v2849 = vadd.f32 %v2848, 1.0
        %v2850 = vrcp.pop %v2849
        %2851 = vst.msk [vmem:[%s1247] sm:$0x1] %vm2757, %v2850
      $region156: #{tpu_custom_call.1} parent=147 // pred_fallthru
        _
      %p2852 = scmp.lt.s32.totalorder %s87, 1
      %s2853 = scalar_select %p2852, %s87, 1
      %s2854 = scalar_lea.vmem %s65, %s2853
      %p2855 = scmp.lt.s32.totalorder %s87, 1
      %s2856 = scalar_select %p2855, %s87, 1
      %s2857 = scalar_lea.vmem %s67, %s2856
      // Predicated region
      $region157: #{tpu_custom_call.1} parent=147 // pred_check
        %p2858 = pneg %p855
      $region158: #{tpu_custom_call.1} parent=147 // pred_check_branch
        %2860 = sbr.rel (%p2858) target = $region160
      $region159: #{tpu_custom_call.1} parent=147 // pred_region
        _
      $region160: #{tpu_custom_call.1} parent=147 // pred_fallthru
        _
      // Predicated region
      $region161: #{tpu_custom_call.1} parent=147 // pred_check
        %p2861 = pneg %p881
      $region162: #{tpu_custom_call.1} parent=147 // pred_check_branch
        %2863 = sbr.rel (%p2861) target = $region164
      $region163: #{tpu_custom_call.1} parent=147 // pred_region
        _
      $region164: #{tpu_custom_call.1} parent=147 // pred_fallthru
        _
    $region148: #{tpu_custom_call.1} parent=5 // pred_fallthru
      _
    %p2864 = scmp.le.s32.totalorder 2, %s78
    // Predicated region
    $region165: #{tpu_custom_call.1} parent=5 // pred_check
      %p2865 = pneg %p2864
    $region166: #{tpu_custom_call.1} parent=5 // pred_check_branch
      %2867 = sbr.rel (%p2865) target = $region168
    $region167: #{tpu_custom_call.1} parent=5 // pred_region
      %s2868 = ssub.s32 %s78, 2
      // Predicated region
      $region169: #{tpu_custom_call.1} parent=167 // pred_check
        %p2869 = pneg %p861
      $region170: #{tpu_custom_call.1} parent=167 // pred_check_branch
        %2871 = sbr.rel (%p2869) target = $region172
      $region171: #{tpu_custom_call.1} parent=167 // pred_region
        %p2872 = scmp.lt.s32.totalorder %s89, 1
        %s2873 = scalar_select %p2872, %s89, 1
        %s2874 = scalar_lea.vmem %s65, %s2873
      $region172: #{tpu_custom_call.1} parent=167 // pred_fallthru
        _
      // Predicated region
      $region173: #{tpu_custom_call.1} parent=167 // pred_check
        %p2875 = pneg %p887
      $region174: #{tpu_custom_call.1} parent=167 // pred_check_branch
        %2877 = sbr.rel (%p2875) target = $region176
      $region175: #{tpu_custom_call.1} parent=167 // pred_region
        %p2878 = scmp.lt.s32.totalorder %s89, 1
        %s2879 = scalar_select %p2878, %s89, 1
        %s2880 = scalar_lea.vmem %s67, %s2879
      $region176: #{tpu_custom_call.1} parent=167 // pred_fallthru
        _
    $region168: #{tpu_custom_call.1} parent=5 // pred_fallthru
      _
  $region6: #{tpu_custom_call.1} parent=0 // loop_footer
    %s82 = sadd.s32 1, %s78
  $region7: #{tpu_custom_call.1} parent=0 // loop_footer_branch
    %77 = sbr.rel target = $region3
  $region8: #{tpu_custom_call.1} parent=0 // loop_exit
    _

</llo_original>
